<compile_context>
chip_gen: v5e
topology: v5e:2x2
jax: 0.10.0
libtpu: 0.0.40
codegen_flags: <defaults>
</compile_context>

<pallas_src>
import functools

import jax
import jax.numpy as jnp
from jax.experimental import pallas as pl
from jax.experimental.pallas import tpu as pltpu

EPS = 1e-5
_SLAB = 128            # 4 branches x 32 output channels -> lane-dense output slab
_CPAD = 32             # reduce-conv channels (24) padded to 32 for uniform tiling
_K9 = 9 * _CPAD        # im2col contraction size
_OFF = 8               # sublane-aligned interior offset inside the padded scratch


# ---------------------------------------------------------------------------
# Fused Inception kernel (one grid step = one batch element)
# ---------------------------------------------------------------------------
def _inception_kernel(x_ref, w_pw_ref, s_rr_ref, b_rr_ref, w_pool_ref,
                      w3a_ref, w3b_ref, s3b_ref, b3b_ref, w3c_ref,
                      s_out_ref, b_out_ref, o_ref,
                      xpad_ref, rpad_ref, patch_ref, *, H, W):
    HW = H * W
    C = x_ref.shape[-1]

    def mxu(a, w_ref_):
        # bf16 MXU operands, f32 accumulation.
        return jnp.dot(a.astype(jnp.bfloat16), w_ref_[...],
                       preferred_element_type=jnp.float32)

    # Zero padded scratches; interiors are overwritten below, borders stay zero.
    xpad_ref[...] = jnp.zeros_like(xpad_ref)
    rpad_ref[...] = jnp.zeros_like(rpad_ref)

    x = x_ref[0]                                  # (H, W, C) f32
    x2 = x.reshape(HW, C)

    # ---- merged 1x1 stage over x:  [branch1x1 slab | reduce | reduce_2] ------
    ypw = mxu(x2, w_pw_ref)                       # (HW, 128 + 64)
    out_acc = ypw[:, :_SLAB]                      # branch1x1 raw conv, cols 0:32 of slab
    rr = jnp.maximum(ypw[:, _SLAB:] * s_rr_ref[...] + b_rr_ref[...], 0.0)   # (HW, 64)

    # ---- avg-pool branch: 3x3 sum-pool (1/9 folded into final BN scale) ------
    xpad_ref[1:H + 1, _OFF:_OFF + W, :] = x
    psum = jnp.zeros((H, W, C), jnp.float32)
    for dy in range(3):
        for dx in range(3):
            psum = psum + xpad_ref[dy:dy + H, _OFF - 1 + dx:_OFF - 1 + dx + W, :]
    out_acc = out_acc + mxu(psum.reshape(HW, C), w_pool_ref)     # -> slab cols 32:64

    # ---- 3x3 conv: pad in VMEM, build im2col patches, single MXU matmul ------
    def conv3x3(v32, w_ref_):
        # v32: (HW, 32) f32 (already BN+ReLU'd; padded channels are zero).
        rpad_ref[1:H + 1, _OFF:_OFF + W, :] = v32.reshape(H, W, _CPAD)
        tap = 0
        for dy in range(3):
            for dx in range(3):
                patch_ref[:, tap * _CPAD:(tap + 1) * _CPAD] = (
                    rpad_ref[dy:dy + H, _OFF - 1 + dx:_OFF - 1 + dx + W, :]
                    .reshape(HW, _CPAD))
                tap += 1
        return mxu(patch_ref[...], w_ref_)        # one dot, K = 9*32

    out_acc = out_acc + conv3x3(rr[:, :_CPAD], w3a_ref)          # -> slab cols 64:96

    t = conv3x3(rr[:, _CPAD:], w3b_ref)                          # (HW, 32)
    t = jnp.maximum(t * s3b_ref[...] + b3b_ref[...], 0.0)        # inline BN + ReLU
    out_acc = out_acc + conv3x3(t, w3c_ref)                      # -> slab cols 96:128

    # ---- fused BN + ReLU on the lane-dense 128-channel slab, one full store --
    out = jnp.maximum(out_acc * s_out_ref[...] + b_out_ref[...], 0.0)
    o_ref[...] = out.reshape(1, H, W, _SLAB).astype(o_ref.dtype)


# ---------------------------------------------------------------------------
# Weight preparation (BN folded; placement into the 128-wide output slab)
# ---------------------------------------------------------------------------
def _w_1x1(w_oihw):
    # (O, I, 1, 1) -> (I, O)
    return jnp.transpose(w_oihw[:, :, 0, 0], (1, 0))


def _w_3x3_rows(w_oihw, cin_pad=_CPAD):
    # (O, I, 3, 3) -> (9*cin_pad, O); rows ordered (kh, kw, ci) to match im2col.
    i = w_oihw.shape[1]
    w = jnp.transpose(w_oihw, (2, 3, 1, 0))                      # (3, 3, I, O)
    w = jnp.pad(w, ((0, 0), (0, 0), (0, cin_pad - i), (0, 0)))
    return w.reshape(9 * cin_pad, w_oihw.shape[0])


def _place_cols(w, offset, total=_SLAB):
    # (K, O) -> (K, total) with the real columns placed at [offset, offset+O).
    return jnp.pad(w, ((0, 0), (offset, total - offset - w.shape[1])))


def prepare_params(params, compute_dtype=jnp.bfloat16):
    d = {k: (v["w_oihw"], v["scale"], v["bias"]) for k, v in params.items()}
    w1, s1, b1 = d["branch1x1"]
    w2, s2, b2 = d["branch1x1_2"]
    wr, sr, br = d["branch3x3_reduce"]
    w3, s3, b3 = d["branch3x3"]
    wr2, sr2, br2 = d["branch3x3_reduce_2"]
    w32, s32, b32 = d["branch3x3_2"]
    w33, s33, b33 = d["branch3x3_3"]

    pad32 = lambda v: jnp.pad(v, (0, _CPAD - v.shape[0]))

    # merged pointwise weight over x: [branch1x1 in slab cols 0:32 | reduce | reduce_2]
    w_pw = jnp.concatenate(
        [_place_cols(_w_1x1(w1), 0),
         jnp.pad(_w_1x1(wr), ((0, 0), (0, _CPAD - wr.shape[0]))),
         jnp.pad(_w_1x1(wr2), ((0, 0), (0, _CPAD - wr2.shape[0])))], axis=1)

    return dict(
        w_pw=w_pw.astype(compute_dtype),                              # (128, 192)
        s_rr=jnp.concatenate([pad32(sr), pad32(sr2)])[None, :],       # (1, 64)
        b_rr=jnp.concatenate([pad32(br), pad32(br2)])[None, :],       # (1, 64)
        w_pool=_place_cols(_w_1x1(w2), 32).astype(compute_dtype),     # (128, 128)
        w3a=_place_cols(_w_3x3_rows(w3), 64).astype(compute_dtype),   # (288, 128)
        w3b=_w_3x3_rows(w32).astype(compute_dtype),                   # (288, 32)
        s3b=s32[None, :], b3b=b32[None, :],                           # (1, 32)
        w3c=_place_cols(_w_3x3_rows(w33), 96).astype(compute_dtype),  # (288, 128)
        s_out=jnp.concatenate([s1, s2 / 9.0, s3, s33])[None, :],      # (1, 128)
        b_out=jnp.concatenate([b1, b2, b3, b33])[None, :],            # (1, 128)
    )


# ---------------------------------------------------------------------------
# Public forward pass (NCHW in / NCHW out, matching the PyTorch module)
# ---------------------------------------------------------------------------
def inception_forward(x_nchw, params):
    x = jnp.transpose(x_nchw, (0, 2, 3, 1))                      # NCHW -> NHWC
    n, h, w, c_in = x.shape
    fp = prepare_params(params)
    kernel = functools.partial(_inception_kernel, H=h, W=w)
    pw = w + 16                                                  # padded-scratch width

    out_nhwc = pl.pallas_call(
        kernel,
        out_shape=jax.ShapeDtypeStruct((n, h, w, _SLAB), jnp.float32),
        grid_spec=pltpu.PrefetchScalarGridSpec(
            num_scalar_prefetch=0,
            grid=(n,),
            in_specs=[
                pl.BlockSpec((1, h, w, c_in), lambda i: (i, 0, 0, 0)),
                pl.BlockSpec((c_in, _SLAB + 2 * _CPAD), lambda i: (0, 0)),
                pl.BlockSpec((1, 2 * _CPAD), lambda i: (0, 0)),
                pl.BlockSpec((1, 2 * _CPAD), lambda i: (0, 0)),
                pl.BlockSpec((c_in, _SLAB), lambda i: (0, 0)),
                pl.BlockSpec((_K9, _SLAB), lambda i: (0, 0)),
                pl.BlockSpec((_K9, _CPAD), lambda i: (0, 0)),
                pl.BlockSpec((1, _CPAD), lambda i: (0, 0)),
                pl.BlockSpec((1, _CPAD), lambda i: (0, 0)),
                pl.BlockSpec((_K9, _SLAB), lambda i: (0, 0)),
                pl.BlockSpec((1, _SLAB), lambda i: (0, 0)),
                pl.BlockSpec((1, _SLAB), lambda i: (0, 0)),
            ],
            out_specs=pl.BlockSpec((1, h, w, _SLAB), lambda i: (i, 0, 0, 0)),
            scratch_shapes=[
                pltpu.VMEM((h + 2, pw, c_in), jnp.float32),      # padded x (avg-pool)
                pltpu.VMEM((h + 2, pw, _CPAD), jnp.float32),     # padded 3x3 input
                pltpu.VMEM((h * w, _K9), jnp.float32),           # im2col patches
            ],
        ),
        compiler_params=pltpu.CompilerParams(dimension_semantics=("parallel",)),
    )(x, fp["w_pw"], fp["s_rr"], fp["b_rr"], fp["w_pool"], fp["w3a"],
      fp["w3b"], fp["s3b"], fp["b3b"], fp["w3c"], fp["s_out"], fp["b_out"])

    return jnp.transpose(out_nhwc, (0, 3, 1, 2))                 # NHWC -> NCHW


# ---------------------------------------------------------------------------
# Parameters (deterministic, synthetic) — shapes follow the PyTorch __init__.
# ---------------------------------------------------------------------------
_LAYERS = {
    "branch1x1":          (128, 32, 1),
    "branch1x1_2":        (128, 32, 1),
    "branch3x3_reduce":   (128, 24, 1),
    "branch3x3":          (24, 32, 3),
    "branch3x3_reduce_2": (128, 24, 1),
    "branch3x3_2":        (24, 32, 3),
    "branch3x3_3":        (32, 32, 3),
}


def init_params(key):
    params = {}
    for name, (cin, cout, k) in _LAYERS.items():
        key, kw, kg, kb, km, kv = jax.random.split(key, 6)
        w = jax.random.normal(kw, (cout, cin, k, k), jnp.float32) / jnp.sqrt(cin * k * k)
        gamma = 1.0 + 0.1 * jax.random.normal(kg, (cout,), jnp.float32)
        beta = 0.1 * jax.random.normal(kb, (cout,), jnp.float32)
        mean = 0.1 * jax.random.normal(km, (cout,), jnp.float32)
        var = jax.random.uniform(kv, (cout,), jnp.float32, minval=0.5, maxval=1.5)
        scale = gamma * jax.lax.rsqrt(var + EPS)        # BN folded (eval mode)
        bias = beta - mean * scale
        params[name] = {"w_oihw": w, "scale": scale, "bias": bias}
    return params


# ---------------------------------------------------------------------------
# Pure-JAX reference (same semantics as the PyTorch module, eval-mode BN)
# ---------------------------------------------------------------------------
def _ref_basic(x, w, scale, bias, pad):
    y = jax.lax.conv_general_dilated(
        x, w, window_strides=(1, 1), padding=[(pad, pad), (pad, pad)],
        dimension_numbers=("NCHW", "OIHW", "NCHW"))
    y = y * scale[None, :, None, None] + bias[None, :, None, None]
    return jnp.maximum(y, 0.0)


def inception_reference(x, params):
    def p(name):
        d = params[name]
        return d["w_oihw"], d["scale"], d["bias"]

    b1 = _ref_basic(x, *p("branch1x1"), pad=0)
    pooled = jax.lax.reduce_window(
        x, 0.0, jax.lax.add, (1, 1, 3, 3), (1, 1, 1, 1),
        [(0, 0), (0, 0), (1, 1), (1, 1)]) / 9.0
    b1_2 = _ref_basic(pooled, *p("branch1x1_2"), pad=0)
    red = _ref_basic(x, *p("branch3x3_reduce"), pad=0)
    b3 = _ref_basic(red, *p("branch3x3"), pad=1)
    red2 = _ref_basic(x, *p("branch3x3_reduce_2"), pad=0)
    b3_2 = _ref_basic(red2, *p("branch3x3_2"), pad=1)
    b3_3 = _ref_basic(b3_2, *p("branch3x3_3"), pad=1)
    return jnp.concatenate([b1, b1_2, b3, b3_3], axis=1)


if __name__ == "__main__":
    key = jax.random.PRNGKey(0)
    kp, kx = jax.random.split(key)
    params = init_params(kp)

    # Input channels are fixed to 128 by the module; small batch/spatial.
    x = jax.random.normal(kx, (2, 128, 8, 8), jnp.float32)   # NCHW

    out = jax.jit(inception_forward)(x, params)
    out = jax.block_until_ready(out)

    ref = inception_reference(x, params)
    assert out.shape == (2, 128, 8, 8), out.shape
    max_err = float(jnp.max(jnp.abs(out - ref)))
    # bf16 MXU operands (f32 accumulation) vs f32 reference -> bf16-level tolerance.
    assert max_err < 1e-1, f"max abs error too large: {max_err}"
    print("KERNEL_OK")
</pallas_src>

<mosaic_0001>
module attributes {stable_mosaic.version = 11 : i64} {
  func.func @_inception_kernel(%arg0: i32, %arg1: memref<1x8x8x128xf32, #tpu.memory_space<vmem>>, %arg2: memref<128x192xbf16, #tpu.memory_space<vmem>>, %arg3: memref<1x64xf32, #tpu.memory_space<vmem>>, %arg4: memref<1x64xf32, #tpu.memory_space<vmem>>, %arg5: memref<128x128xbf16, #tpu.memory_space<vmem>>, %arg6: memref<288x128xbf16, #tpu.memory_space<vmem>>, %arg7: memref<288x32xbf16, #tpu.memory_space<vmem>>, %arg8: memref<1x32xf32, #tpu.memory_space<vmem>>, %arg9: memref<1x32xf32, #tpu.memory_space<vmem>>, %arg10: memref<288x128xbf16, #tpu.memory_space<vmem>>, %arg11: memref<1x128xf32, #tpu.memory_space<vmem>>, %arg12: memref<1x128xf32, #tpu.memory_space<vmem>>, %arg13: memref<1x8x8x128xf32, #tpu.memory_space<vmem>>, %arg14: memref<10x24x128xf32, #tpu.memory_space<vmem>>, %arg15: memref<10x24x32xf32, #tpu.memory_space<vmem>>, %arg16: memref<64x288xf32, #tpu.memory_space<vmem>>) attributes {dimension_semantics = [#tpu.dimension_semantics<parallel>], iteration_bounds = array<i64: 2>, scalar_prefetch = 0 : i64, scratch_operands = 3 : i64, tpu.core_type = #tpu.core_type<tc>, window_params = [{transform_indices = @transform_0, window_bounds = array<i64: 1, 8, 8, 128>}, {pipeline_mode = #tpu.pipeline_mode<synchronous>, transform_indices = @transform_1, window_bounds = array<i64: 128, 192>}, {pipeline_mode = #tpu.pipeline_mode<synchronous>, transform_indices = @transform_2, window_bounds = array<i64: 1, 64>}, {pipeline_mode = #tpu.pipeline_mode<synchronous>, transform_indices = @transform_3, window_bounds = array<i64: 1, 64>}, {pipeline_mode = #tpu.pipeline_mode<synchronous>, transform_indices = @transform_4, window_bounds = array<i64: 128, 128>}, {pipeline_mode = #tpu.pipeline_mode<synchronous>, transform_indices = @transform_5, window_bounds = array<i64: 288, 128>}, {pipeline_mode = #tpu.pipeline_mode<synchronous>, transform_indices = @transform_6, window_bounds = array<i64: 288, 32>}, {pipeline_mode = #tpu.pipeline_mode<synchronous>, transform_indices = @transform_7, window_bounds = array<i64: 1, 32>}, {pipeline_mode = #tpu.pipeline_mode<synchronous>, transform_indices = @transform_8, window_bounds = array<i64: 1, 32>}, {pipeline_mode = #tpu.pipeline_mode<synchronous>, transform_indices = @transform_9, window_bounds = array<i64: 288, 128>}, {pipeline_mode = #tpu.pipeline_mode<synchronous>, transform_indices = @transform_10, window_bounds = array<i64: 1, 128>}, {pipeline_mode = #tpu.pipeline_mode<synchronous>, transform_indices = @transform_11, window_bounds = array<i64: 1, 128>}, {transform_indices = @transform_12, window_bounds = array<i64: 1, 8, 8, 128>}]} {
    %cst = arith.constant 0.000000e+00 : f32
    %0 = vector.broadcast %cst : f32 to vector<10x24x128xf32>
    %c0 = arith.constant 0 : index
    %c0_0 = arith.constant 0 : index
    %c0_1 = arith.constant 0 : index
    %1 = vector.load %arg14[%c0, %c0_0, %c0_1] : memref<10x24x128xf32, #tpu.memory_space<vmem>>, vector<10x24x128xf32>
    tpu.vector_store %arg14[%c0, %c0_0, %c0_1], %0 {strides = array<i32>} : memref<10x24x128xf32, #tpu.memory_space<vmem>>, vector<10x24x128xf32>,
    %cst_2 = arith.constant 0.000000e+00 : f32
    %2 = vector.broadcast %cst_2 : f32 to vector<10x24x32xf32>
    %c0_3 = arith.constant 0 : index
    %c0_4 = arith.constant 0 : index
    %c0_5 = arith.constant 0 : index
    %3 = vector.load %arg15[%c0_3, %c0_4, %c0_5] : memref<10x24x32xf32, #tpu.memory_space<vmem>>, vector<10x24x32xf32>
    tpu.vector_store %arg15[%c0_3, %c0_4, %c0_5], %2 {strides = array<i32>} : memref<10x24x32xf32, #tpu.memory_space<vmem>>, vector<10x24x32xf32>,
    %c0_6 = arith.constant 0 : index
    %c0_7 = arith.constant 0 : index
    %c0_8 = arith.constant 0 : index
    %c0_9 = arith.constant 0 : index
    %4 = vector.load %arg1[%c0_6, %c0_7, %c0_8, %c0_9] : memref<1x8x8x128xf32, #tpu.memory_space<vmem>>, vector<1x8x8x128xf32>
    %5 = vector.shape_cast %4 : vector<1x8x8x128xf32> to vector<8x8x128xf32>
    %6 = vector.shape_cast %5 : vector<8x8x128xf32> to vector<64x128xf32>
    %7 = arith.truncf %6 : vector<64x128xf32> to vector<64x128xbf16>
    %c0_10 = arith.constant 0 : index
    %c0_11 = arith.constant 0 : index
    %8 = vector.load %arg2[%c0_10, %c0_11] : memref<128x192xbf16, #tpu.memory_space<vmem>>, vector<128x192xbf16>
    %cst_12 = arith.constant dense<0.000000e+00> : vector<64x192xf32>
    %9 = tpu.matmul %7, %8, %cst_12 {dimension_numbers = #tpu.dot_dimension_numbers<[1], [0], [0], [1], [0, 0, 1, 1], [], []>} : vector<64x128xbf16>, vector<128x192xbf16>, vector<64x192xf32> -> vector<64x192xf32>
    %10 = vector.extract_strided_slice %9 {offsets = [0, 0], sizes = [64, 128], strides = [1, 1]} : vector<64x192xf32> to vector<64x128xf32>
    %11 = vector.extract_strided_slice %9 {offsets = [0, 128], sizes = [64, 64], strides = [1, 1]} : vector<64x192xf32> to vector<64x64xf32>
    %c0_13 = arith.constant 0 : index
    %c0_14 = arith.constant 0 : index
    %12 = vector.load %arg3[%c0_13, %c0_14] : memref<1x64xf32, #tpu.memory_space<vmem>>, vector<1x64xf32>
    %13 = vector.broadcast %12 : vector<1x64xf32> to vector<64x64xf32>
    %14 = arith.mulf %11, %13 : vector<64x64xf32>
    %c0_15 = arith.constant 0 : index
    %c0_16 = arith.constant 0 : index
    %15 = vector.load %arg4[%c0_15, %c0_16] : memref<1x64xf32, #tpu.memory_space<vmem>>, vector<1x64xf32>
    %16 = vector.broadcast %15 : vector<1x64xf32> to vector<64x64xf32>
    %17 = arith.addf %14, %16 : vector<64x64xf32>
    %cst_17 = arith.constant 0.000000e+00 : f32
    %18 = vector.broadcast %cst_17 : f32 to vector<64x64xf32>
    %19 = arith.maximumf %17, %18 : vector<64x64xf32>
    %c1 = arith.constant 1 : index
    %c8 = arith.constant 8 : index
    %c0_18 = arith.constant 0 : index
    %20 = vector.load %arg14[%c1, %c8, %c0_18] : memref<10x24x128xf32, #tpu.memory_space<vmem>>, vector<8x8x128xf32>
    tpu.vector_store %arg14[%c1, %c8, %c0_18], %5 {strides = array<i32>} : memref<10x24x128xf32, #tpu.memory_space<vmem>>, vector<8x8x128xf32>,
    %cst_19 = arith.constant 0.000000e+00 : f32
    %21 = vector.broadcast %cst_19 : f32 to vector<8x8x128xf32>
    %c0_20 = arith.constant 0 : index
    %c7 = arith.constant 7 : index
    %c0_21 = arith.constant 0 : index
    %22 = vector.load %arg14[%c0_20, %c7, %c0_21] : memref<10x24x128xf32, #tpu.memory_space<vmem>>, vector<8x8x128xf32>
    %23 = arith.addf %21, %22 : vector<8x8x128xf32>
    %c0_22 = arith.constant 0 : index
    %c8_23 = arith.constant 8 : index
    %c0_24 = arith.constant 0 : index
    %24 = vector.load %arg14[%c0_22, %c8_23, %c0_24] : memref<10x24x128xf32, #tpu.memory_space<vmem>>, vector<8x8x128xf32>
    %25 = arith.addf %23, %24 : vector<8x8x128xf32>
    %c0_25 = arith.constant 0 : index
    %c9 = arith.constant 9 : index
    %c0_26 = arith.constant 0 : index
    %26 = vector.load %arg14[%c0_25, %c9, %c0_26] : memref<10x24x128xf32, #tpu.memory_space<vmem>>, vector<8x8x128xf32>
    %27 = arith.addf %25, %26 : vector<8x8x128xf32>
    %c1_27 = arith.constant 1 : index
    %c7_28 = arith.constant 7 : index
    %c0_29 = arith.constant 0 : index
    %28 = vector.load %arg14[%c1_27, %c7_28, %c0_29] : memref<10x24x128xf32, #tpu.memory_space<vmem>>, vector<8x8x128xf32>
    %29 = arith.addf %27, %28 : vector<8x8x128xf32>
    %c1_30 = arith.constant 1 : index
    %c8_31 = arith.constant 8 : index
    %c0_32 = arith.constant 0 : index
    %30 = vector.load %arg14[%c1_30, %c8_31, %c0_32] : memref<10x24x128xf32, #tpu.memory_space<vmem>>, vector<8x8x128xf32>
    %31 = arith.addf %29, %30 : vector<8x8x128xf32>
    %c1_33 = arith.constant 1 : index
    %c9_34 = arith.constant 9 : index
    %c0_35 = arith.constant 0 : index
    %32 = vector.load %arg14[%c1_33, %c9_34, %c0_35] : memref<10x24x128xf32, #tpu.memory_space<vmem>>, vector<8x8x128xf32>
    %33 = arith.addf %31, %32 : vector<8x8x128xf32>
    %c2 = arith.constant 2 : index
    %c7_36 = arith.constant 7 : index
    %c0_37 = arith.constant 0 : index
    %34 = vector.load %arg14[%c2, %c7_36, %c0_37] : memref<10x24x128xf32, #tpu.memory_space<vmem>>, vector<8x8x128xf32>
    %35 = arith.addf %33, %34 : vector<8x8x128xf32>
    %c2_38 = arith.constant 2 : index
    %c8_39 = arith.constant 8 : index
    %c0_40 = arith.constant 0 : index
    %36 = vector.load %arg14[%c2_38, %c8_39, %c0_40] : memref<10x24x128xf32, #tpu.memory_space<vmem>>, vector<8x8x128xf32>
    %37 = arith.addf %35, %36 : vector<8x8x128xf32>
    %c2_41 = arith.constant 2 : index
    %c9_42 = arith.constant 9 : index
    %c0_43 = arith.constant 0 : index
    %38 = vector.load %arg14[%c2_41, %c9_42, %c0_43] : memref<10x24x128xf32, #tpu.memory_space<vmem>>, vector<8x8x128xf32>
    %39 = arith.addf %37, %38 : vector<8x8x128xf32>
    %40 = vector.shape_cast %39 : vector<8x8x128xf32> to vector<64x128xf32>
    %41 = arith.truncf %40 : vector<64x128xf32> to vector<64x128xbf16>
    %c0_44 = arith.constant 0 : index
    %c0_45 = arith.constant 0 : index
    %42 = vector.load %arg5[%c0_44, %c0_45] : memref<128x128xbf16, #tpu.memory_space<vmem>>, vector<128x128xbf16>
    %cst_46 = arith.constant dense<0.000000e+00> : vector<64x128xf32>
    %43 = tpu.matmul %41, %42, %cst_46 {dimension_numbers = #tpu.dot_dimension_numbers<[1], [0], [0], [1], [0, 0, 1, 1], [], []>} : vector<64x128xbf16>, vector<128x128xbf16>, vector<64x128xf32> -> vector<64x128xf32>
    %44 = arith.addf %10, %43 : vector<64x128xf32>
    %45 = vector.extract_strided_slice %19 {offsets = [0, 0], sizes = [64, 32], strides = [1, 1]} : vector<64x64xf32> to vector<64x32xf32>
    %46 = vector.shape_cast %45 : vector<64x32xf32> to vector<8x8x32xf32>
    %c1_47 = arith.constant 1 : index
    %c8_48 = arith.constant 8 : index
    %c0_49 = arith.constant 0 : index
    %47 = vector.load %arg15[%c1_47, %c8_48, %c0_49] : memref<10x24x32xf32, #tpu.memory_space<vmem>>, vector<8x8x32xf32>
    tpu.vector_store %arg15[%c1_47, %c8_48, %c0_49], %46 {strides = array<i32>} : memref<10x24x32xf32, #tpu.memory_space<vmem>>, vector<8x8x32xf32>,
    %c0_50 = arith.constant 0 : index
    %c7_51 = arith.constant 7 : index
    %c0_52 = arith.constant 0 : index
    %48 = vector.load %arg15[%c0_50, %c7_51, %c0_52] : memref<10x24x32xf32, #tpu.memory_space<vmem>>, vector<8x8x32xf32>
    %49 = vector.shape_cast %48 : vector<8x8x32xf32> to vector<64x32xf32>
    %c0_53 = arith.constant 0 : index
    %c0_54 = arith.constant 0 : index
    %50 = vector.load %arg16[%c0_53, %c0_54] : memref<64x288xf32, #tpu.memory_space<vmem>>, vector<64x32xf32>
    tpu.vector_store %arg16[%c0_53, %c0_54], %49 {strides = array<i32>} : memref<64x288xf32, #tpu.memory_space<vmem>>, vector<64x32xf32>,
    %c0_55 = arith.constant 0 : index
    %c8_56 = arith.constant 8 : index
    %c0_57 = arith.constant 0 : index
    %51 = vector.load %arg15[%c0_55, %c8_56, %c0_57] : memref<10x24x32xf32, #tpu.memory_space<vmem>>, vector<8x8x32xf32>
    %52 = vector.shape_cast %51 : vector<8x8x32xf32> to vector<64x32xf32>
    %c0_58 = arith.constant 0 : index
    %c32 = arith.constant 32 : index
    %53 = vector.load %arg16[%c0_58, %c32] : memref<64x288xf32, #tpu.memory_space<vmem>>, vector<64x32xf32>
    tpu.vector_store %arg16[%c0_58, %c32], %52 {strides = array<i32>} : memref<64x288xf32, #tpu.memory_space<vmem>>, vector<64x32xf32>,
    %c0_59 = arith.constant 0 : index
    %c9_60 = arith.constant 9 : index
    %c0_61 = arith.constant 0 : index
    %54 = vector.load %arg15[%c0_59, %c9_60, %c0_61] : memref<10x24x32xf32, #tpu.memory_space<vmem>>, vector<8x8x32xf32>
    %55 = vector.shape_cast %54 : vector<8x8x32xf32> to vector<64x32xf32>
    %c0_62 = arith.constant 0 : index
    %c64 = arith.constant 64 : index
    %56 = vector.load %arg16[%c0_62, %c64] : memref<64x288xf32, #tpu.memory_space<vmem>>, vector<64x32xf32>
    tpu.vector_store %arg16[%c0_62, %c64], %55 {strides = array<i32>} : memref<64x288xf32, #tpu.memory_space<vmem>>, vector<64x32xf32>,
    %c1_63 = arith.constant 1 : index
    %c7_64 = arith.constant 7 : index
    %c0_65 = arith.constant 0 : index
    %57 = vector.load %arg15[%c1_63, %c7_64, %c0_65] : memref<10x24x32xf32, #tpu.memory_space<vmem>>, vector<8x8x32xf32>
    %58 = vector.shape_cast %57 : vector<8x8x32xf32> to vector<64x32xf32>
    %c0_66 = arith.constant 0 : index
    %c96 = arith.constant 96 : index
    %59 = vector.load %arg16[%c0_66, %c96] : memref<64x288xf32, #tpu.memory_space<vmem>>, vector<64x32xf32>
    tpu.vector_store %arg16[%c0_66, %c96], %58 {strides = array<i32>} : memref<64x288xf32, #tpu.memory_space<vmem>>, vector<64x32xf32>,
    %c1_67 = arith.constant 1 : index
    %c8_68 = arith.constant 8 : index
    %c0_69 = arith.constant 0 : index
    %60 = vector.load %arg15[%c1_67, %c8_68, %c0_69] : memref<10x24x32xf32, #tpu.memory_space<vmem>>, vector<8x8x32xf32>
    %61 = vector.shape_cast %60 : vector<8x8x32xf32> to vector<64x32xf32>
    %c0_70 = arith.constant 0 : index
    %c128 = arith.constant 128 : index
    %62 = vector.load %arg16[%c0_70, %c128] : memref<64x288xf32, #tpu.memory_space<vmem>>, vector<64x32xf32>
    tpu.vector_store %arg16[%c0_70, %c128], %61 {strides = array<i32>} : memref<64x288xf32, #tpu.memory_space<vmem>>, vector<64x32xf32>,
    %c1_71 = arith.constant 1 : index
    %c9_72 = arith.constant 9 : index
    %c0_73 = arith.constant 0 : index
    %63 = vector.load %arg15[%c1_71, %c9_72, %c0_73] : memref<10x24x32xf32, #tpu.memory_space<vmem>>, vector<8x8x32xf32>
    %64 = vector.shape_cast %63 : vector<8x8x32xf32> to vector<64x32xf32>
    %c0_74 = arith.constant 0 : index
    %c160 = arith.constant 160 : index
    %65 = vector.load %arg16[%c0_74, %c160] : memref<64x288xf32, #tpu.memory_space<vmem>>, vector<64x32xf32>
    tpu.vector_store %arg16[%c0_74, %c160], %64 {strides = array<i32>} : memref<64x288xf32, #tpu.memory_space<vmem>>, vector<64x32xf32>,
    %c2_75 = arith.constant 2 : index
    %c7_76 = arith.constant 7 : index
    %c0_77 = arith.constant 0 : index
    %66 = vector.load %arg15[%c2_75, %c7_76, %c0_77] : memref<10x24x32xf32, #tpu.memory_space<vmem>>, vector<8x8x32xf32>
    %67 = vector.shape_cast %66 : vector<8x8x32xf32> to vector<64x32xf32>
    %c0_78 = arith.constant 0 : index
    %c192 = arith.constant 192 : index
    %68 = vector.load %arg16[%c0_78, %c192] : memref<64x288xf32, #tpu.memory_space<vmem>>, vector<64x32xf32>
    tpu.vector_store %arg16[%c0_78, %c192], %67 {strides = array<i32>} : memref<64x288xf32, #tpu.memory_space<vmem>>, vector<64x32xf32>,
    %c2_79 = arith.constant 2 : index
    %c8_80 = arith.constant 8 : index
    %c0_81 = arith.constant 0 : index
    %69 = vector.load %arg15[%c2_79, %c8_80, %c0_81] : memref<10x24x32xf32, #tpu.memory_space<vmem>>, vector<8x8x32xf32>
    %70 = vector.shape_cast %69 : vector<8x8x32xf32> to vector<64x32xf32>
    %c0_82 = arith.constant 0 : index
    %c224 = arith.constant 224 : index
    %71 = vector.load %arg16[%c0_82, %c224] : memref<64x288xf32, #tpu.memory_space<vmem>>, vector<64x32xf32>
    tpu.vector_store %arg16[%c0_82, %c224], %70 {strides = array<i32>} : memref<64x288xf32, #tpu.memory_space<vmem>>, vector<64x32xf32>,
    %c2_83 = arith.constant 2 : index
    %c9_84 = arith.constant 9 : index
    %c0_85 = arith.constant 0 : index
    %72 = vector.load %arg15[%c2_83, %c9_84, %c0_85] : memref<10x24x32xf32, #tpu.memory_space<vmem>>, vector<8x8x32xf32>
    %73 = vector.shape_cast %72 : vector<8x8x32xf32> to vector<64x32xf32>
    %c0_86 = arith.constant 0 : index
    %c256 = arith.constant 256 : index
    %74 = vector.load %arg16[%c0_86, %c256] : memref<64x288xf32, #tpu.memory_space<vmem>>, vector<64x32xf32>
    tpu.vector_store %arg16[%c0_86, %c256], %73 {strides = array<i32>} : memref<64x288xf32, #tpu.memory_space<vmem>>, vector<64x32xf32>,
    %c0_87 = arith.constant 0 : index
    %c0_88 = arith.constant 0 : index
    %75 = vector.load %arg16[%c0_87, %c0_88] : memref<64x288xf32, #tpu.memory_space<vmem>>, vector<64x288xf32>
    %76 = arith.truncf %75 : vector<64x288xf32> to vector<64x288xbf16>
    %c0_89 = arith.constant 0 : index
    %c0_90 = arith.constant 0 : index
    %77 = vector.load %arg6[%c0_89, %c0_90] : memref<288x128xbf16, #tpu.memory_space<vmem>>, vector<288x128xbf16>
    %cst_91 = arith.constant dense<0.000000e+00> : vector<64x128xf32>
    %78 = tpu.matmul %76, %77, %cst_91 {dimension_numbers = #tpu.dot_dimension_numbers<[1], [0], [0], [1], [0, 0, 1, 1], [], []>} : vector<64x288xbf16>, vector<288x128xbf16>, vector<64x128xf32> -> vector<64x128xf32>
    %79 = arith.addf %44, %78 : vector<64x128xf32>
    %80 = vector.extract_strided_slice %19 {offsets = [0, 32], sizes = [64, 32], strides = [1, 1]} : vector<64x64xf32> to vector<64x32xf32>
    %81 = vector.shape_cast %80 : vector<64x32xf32> to vector<8x8x32xf32>
    %c1_92 = arith.constant 1 : index
    %c8_93 = arith.constant 8 : index
    %c0_94 = arith.constant 0 : index
    %82 = vector.load %arg15[%c1_92, %c8_93, %c0_94] : memref<10x24x32xf32, #tpu.memory_space<vmem>>, vector<8x8x32xf32>
    tpu.vector_store %arg15[%c1_92, %c8_93, %c0_94], %81 {strides = array<i32>} : memref<10x24x32xf32, #tpu.memory_space<vmem>>, vector<8x8x32xf32>,
    %c0_95 = arith.constant 0 : index
    %c7_96 = arith.constant 7 : index
    %c0_97 = arith.constant 0 : index
    %83 = vector.load %arg15[%c0_95, %c7_96, %c0_97] : memref<10x24x32xf32, #tpu.memory_space<vmem>>, vector<8x8x32xf32>
    %84 = vector.shape_cast %83 : vector<8x8x32xf32> to vector<64x32xf32>
    %c0_98 = arith.constant 0 : index
    %c0_99 = arith.constant 0 : index
    %85 = vector.load %arg16[%c0_98, %c0_99] : memref<64x288xf32, #tpu.memory_space<vmem>>, vector<64x32xf32>
    tpu.vector_store %arg16[%c0_98, %c0_99], %84 {strides = array<i32>} : memref<64x288xf32, #tpu.memory_space<vmem>>, vector<64x32xf32>,
    %c0_100 = arith.constant 0 : index
    %c8_101 = arith.constant 8 : index
    %c0_102 = arith.constant 0 : index
    %86 = vector.load %arg15[%c0_100, %c8_101, %c0_102] : memref<10x24x32xf32, #tpu.memory_space<vmem>>, vector<8x8x32xf32>
    %87 = vector.shape_cast %86 : vector<8x8x32xf32> to vector<64x32xf32>
    %c0_103 = arith.constant 0 : index
    %c32_104 = arith.constant 32 : index
    %88 = vector.load %arg16[%c0_103, %c32_104] : memref<64x288xf32, #tpu.memory_space<vmem>>, vector<64x32xf32>
    tpu.vector_store %arg16[%c0_103, %c32_104], %87 {strides = array<i32>} : memref<64x288xf32, #tpu.memory_space<vmem>>, vector<64x32xf32>,
    %c0_105 = arith.constant 0 : index
    %c9_106 = arith.constant 9 : index
    %c0_107 = arith.constant 0 : index
    %89 = vector.load %arg15[%c0_105, %c9_106, %c0_107] : memref<10x24x32xf32, #tpu.memory_space<vmem>>, vector<8x8x32xf32>
    %90 = vector.shape_cast %89 : vector<8x8x32xf32> to vector<64x32xf32>
    %c0_108 = arith.constant 0 : index
    %c64_109 = arith.constant 64 : index
    %91 = vector.load %arg16[%c0_108, %c64_109] : memref<64x288xf32, #tpu.memory_space<vmem>>, vector<64x32xf32>
    tpu.vector_store %arg16[%c0_108, %c64_109], %90 {strides = array<i32>} : memref<64x288xf32, #tpu.memory_space<vmem>>, vector<64x32xf32>,
    %c1_110 = arith.constant 1 : index
    %c7_111 = arith.constant 7 : index
    %c0_112 = arith.constant 0 : index
    %92 = vector.load %arg15[%c1_110, %c7_111, %c0_112] : memref<10x24x32xf32, #tpu.memory_space<vmem>>, vector<8x8x32xf32>
    %93 = vector.shape_cast %92 : vector<8x8x32xf32> to vector<64x32xf32>
    %c0_113 = arith.constant 0 : index
    %c96_114 = arith.constant 96 : index
    %94 = vector.load %arg16[%c0_113, %c96_114] : memref<64x288xf32, #tpu.memory_space<vmem>>, vector<64x32xf32>
    tpu.vector_store %arg16[%c0_113, %c96_114], %93 {strides = array<i32>} : memref<64x288xf32, #tpu.memory_space<vmem>>, vector<64x32xf32>,
    %c1_115 = arith.constant 1 : index
    %c8_116 = arith.constant 8 : index
    %c0_117 = arith.constant 0 : index
    %95 = vector.load %arg15[%c1_115, %c8_116, %c0_117] : memref<10x24x32xf32, #tpu.memory_space<vmem>>, vector<8x8x32xf32>
    %96 = vector.shape_cast %95 : vector<8x8x32xf32> to vector<64x32xf32>
    %c0_118 = arith.constant 0 : index
    %c128_119 = arith.constant 128 : index
    %97 = vector.load %arg16[%c0_118, %c128_119] : memref<64x288xf32, #tpu.memory_space<vmem>>, vector<64x32xf32>
    tpu.vector_store %arg16[%c0_118, %c128_119], %96 {strides = array<i32>} : memref<64x288xf32, #tpu.memory_space<vmem>>, vector<64x32xf32>,
    %c1_120 = arith.constant 1 : index
    %c9_121 = arith.constant 9 : index
    %c0_122 = arith.constant 0 : index
    %98 = vector.load %arg15[%c1_120, %c9_121, %c0_122] : memref<10x24x32xf32, #tpu.memory_space<vmem>>, vector<8x8x32xf32>
    %99 = vector.shape_cast %98 : vector<8x8x32xf32> to vector<64x32xf32>
    %c0_123 = arith.constant 0 : index
    %c160_124 = arith.constant 160 : index
    %100 = vector.load %arg16[%c0_123, %c160_124] : memref<64x288xf32, #tpu.memory_space<vmem>>, vector<64x32xf32>
    tpu.vector_store %arg16[%c0_123, %c160_124], %99 {strides = array<i32>} : memref<64x288xf32, #tpu.memory_space<vmem>>, vector<64x32xf32>,
    %c2_125 = arith.constant 2 : index
    %c7_126 = arith.constant 7 : index
    %c0_127 = arith.constant 0 : index
    %101 = vector.load %arg15[%c2_125, %c7_126, %c0_127] : memref<10x24x32xf32, #tpu.memory_space<vmem>>, vector<8x8x32xf32>
    %102 = vector.shape_cast %101 : vector<8x8x32xf32> to vector<64x32xf32>
    %c0_128 = arith.constant 0 : index
    %c192_129 = arith.constant 192 : index
    %103 = vector.load %arg16[%c0_128, %c192_129] : memref<64x288xf32, #tpu.memory_space<vmem>>, vector<64x32xf32>
    tpu.vector_store %arg16[%c0_128, %c192_129], %102 {strides = array<i32>} : memref<64x288xf32, #tpu.memory_space<vmem>>, vector<64x32xf32>,
    %c2_130 = arith.constant 2 : index
    %c8_131 = arith.constant 8 : index
    %c0_132 = arith.constant 0 : index
    %104 = vector.load %arg15[%c2_130, %c8_131, %c0_132] : memref<10x24x32xf32, #tpu.memory_space<vmem>>, vector<8x8x32xf32>
    %105 = vector.shape_cast %104 : vector<8x8x32xf32> to vector<64x32xf32>
    %c0_133 = arith.constant 0 : index
    %c224_134 = arith.constant 224 : index
    %106 = vector.load %arg16[%c0_133, %c224_134] : memref<64x288xf32, #tpu.memory_space<vmem>>, vector<64x32xf32>
    tpu.vector_store %arg16[%c0_133, %c224_134], %105 {strides = array<i32>} : memref<64x288xf32, #tpu.memory_space<vmem>>, vector<64x32xf32>,
    %c2_135 = arith.constant 2 : index
    %c9_136 = arith.constant 9 : index
    %c0_137 = arith.constant 0 : index
    %107 = vector.load %arg15[%c2_135, %c9_136, %c0_137] : memref<10x24x32xf32, #tpu.memory_space<vmem>>, vector<8x8x32xf32>
    %108 = vector.shape_cast %107 : vector<8x8x32xf32> to vector<64x32xf32>
    %c0_138 = arith.constant 0 : index
    %c256_139 = arith.constant 256 : index
    %109 = vector.load %arg16[%c0_138, %c256_139] : memref<64x288xf32, #tpu.memory_space<vmem>>, vector<64x32xf32>
    tpu.vector_store %arg16[%c0_138, %c256_139], %108 {strides = array<i32>} : memref<64x288xf32, #tpu.memory_space<vmem>>, vector<64x32xf32>,
    %c0_140 = arith.constant 0 : index
    %c0_141 = arith.constant 0 : index
    %110 = vector.load %arg16[%c0_140, %c0_141] : memref<64x288xf32, #tpu.memory_space<vmem>>, vector<64x288xf32>
    %111 = arith.truncf %110 : vector<64x288xf32> to vector<64x288xbf16>
    %c0_142 = arith.constant 0 : index
    %c0_143 = arith.constant 0 : index
    %112 = vector.load %arg7[%c0_142, %c0_143] : memref<288x32xbf16, #tpu.memory_space<vmem>>, vector<288x32xbf16>
    %cst_144 = arith.constant dense<0.000000e+00> : vector<64x32xf32>
    %113 = tpu.matmul %111, %112, %cst_144 {dimension_numbers = #tpu.dot_dimension_numbers<[1], [0], [0], [1], [0, 0, 1, 1], [], []>} : vector<64x288xbf16>, vector<288x32xbf16>, vector<64x32xf32> -> vector<64x32xf32>
    %c0_145 = arith.constant 0 : index
    %c0_146 = arith.constant 0 : index
    %114 = vector.load %arg8[%c0_145, %c0_146] : memref<1x32xf32, #tpu.memory_space<vmem>>, vector<1x32xf32>
    %115 = vector.broadcast %114 : vector<1x32xf32> to vector<64x32xf32>
    %116 = arith.mulf %113, %115 : vector<64x32xf32>
    %c0_147 = arith.constant 0 : index
    %c0_148 = arith.constant 0 : index
    %117 = vector.load %arg9[%c0_147, %c0_148] : memref<1x32xf32, #tpu.memory_space<vmem>>, vector<1x32xf32>
    %118 = vector.broadcast %117 : vector<1x32xf32> to vector<64x32xf32>
    %119 = arith.addf %116, %118 : vector<64x32xf32>
    %cst_149 = arith.constant 0.000000e+00 : f32
    %120 = vector.broadcast %cst_149 : f32 to vector<64x32xf32>
    %121 = arith.maximumf %119, %120 : vector<64x32xf32>
    %122 = vector.shape_cast %121 : vector<64x32xf32> to vector<8x8x32xf32>
    %c1_150 = arith.constant 1 : index
    %c8_151 = arith.constant 8 : index
    %c0_152 = arith.constant 0 : index
    %123 = vector.load %arg15[%c1_150, %c8_151, %c0_152] : memref<10x24x32xf32, #tpu.memory_space<vmem>>, vector<8x8x32xf32>
    tpu.vector_store %arg15[%c1_150, %c8_151, %c0_152], %122 {strides = array<i32>} : memref<10x24x32xf32, #tpu.memory_space<vmem>>, vector<8x8x32xf32>,
    %c0_153 = arith.constant 0 : index
    %c7_154 = arith.constant 7 : index
    %c0_155 = arith.constant 0 : index
    %124 = vector.load %arg15[%c0_153, %c7_154, %c0_155] : memref<10x24x32xf32, #tpu.memory_space<vmem>>, vector<8x8x32xf32>
    %125 = vector.shape_cast %124 : vector<8x8x32xf32> to vector<64x32xf32>
    %c0_156 = arith.constant 0 : index
    %c0_157 = arith.constant 0 : index
    %126 = vector.load %arg16[%c0_156, %c0_157] : memref<64x288xf32, #tpu.memory_space<vmem>>, vector<64x32xf32>
    tpu.vector_store %arg16[%c0_156, %c0_157], %125 {strides = array<i32>} : memref<64x288xf32, #tpu.memory_space<vmem>>, vector<64x32xf32>,
    %c0_158 = arith.constant 0 : index
    %c8_159 = arith.constant 8 : index
    %c0_160 = arith.constant 0 : index
    %127 = vector.load %arg15[%c0_158, %c8_159, %c0_160] : memref<10x24x32xf32, #tpu.memory_space<vmem>>, vector<8x8x32xf32>
    %128 = vector.shape_cast %127 : vector<8x8x32xf32> to vector<64x32xf32>
    %c0_161 = arith.constant 0 : index
    %c32_162 = arith.constant 32 : index
    %129 = vector.load %arg16[%c0_161, %c32_162] : memref<64x288xf32, #tpu.memory_space<vmem>>, vector<64x32xf32>
    tpu.vector_store %arg16[%c0_161, %c32_162], %128 {strides = array<i32>} : memref<64x288xf32, #tpu.memory_space<vmem>>, vector<64x32xf32>,
    %c0_163 = arith.constant 0 : index
    %c9_164 = arith.constant 9 : index
    %c0_165 = arith.constant 0 : index
    %130 = vector.load %arg15[%c0_163, %c9_164, %c0_165] : memref<10x24x32xf32, #tpu.memory_space<vmem>>, vector<8x8x32xf32>
    %131 = vector.shape_cast %130 : vector<8x8x32xf32> to vector<64x32xf32>
    %c0_166 = arith.constant 0 : index
    %c64_167 = arith.constant 64 : index
    %132 = vector.load %arg16[%c0_166, %c64_167] : memref<64x288xf32, #tpu.memory_space<vmem>>, vector<64x32xf32>
    tpu.vector_store %arg16[%c0_166, %c64_167], %131 {strides = array<i32>} : memref<64x288xf32, #tpu.memory_space<vmem>>, vector<64x32xf32>,
    %c1_168 = arith.constant 1 : index
    %c7_169 = arith.constant 7 : index
    %c0_170 = arith.constant 0 : index
    %133 = vector.load %arg15[%c1_168, %c7_169, %c0_170] : memref<10x24x32xf32, #tpu.memory_space<vmem>>, vector<8x8x32xf32>
    %134 = vector.shape_cast %133 : vector<8x8x32xf32> to vector<64x32xf32>
    %c0_171 = arith.constant 0 : index
    %c96_172 = arith.constant 96 : index
    %135 = vector.load %arg16[%c0_171, %c96_172] : memref<64x288xf32, #tpu.memory_space<vmem>>, vector<64x32xf32>
    tpu.vector_store %arg16[%c0_171, %c96_172], %134 {strides = array<i32>} : memref<64x288xf32, #tpu.memory_space<vmem>>, vector<64x32xf32>,
    %c1_173 = arith.constant 1 : index
    %c8_174 = arith.constant 8 : index
    %c0_175 = arith.constant 0 : index
    %136 = vector.load %arg15[%c1_173, %c8_174, %c0_175] : memref<10x24x32xf32, #tpu.memory_space<vmem>>, vector<8x8x32xf32>
    %137 = vector.shape_cast %136 : vector<8x8x32xf32> to vector<64x32xf32>
    %c0_176 = arith.constant 0 : index
    %c128_177 = arith.constant 128 : index
    %138 = vector.load %arg16[%c0_176, %c128_177] : memref<64x288xf32, #tpu.memory_space<vmem>>, vector<64x32xf32>
    tpu.vector_store %arg16[%c0_176, %c128_177], %137 {strides = array<i32>} : memref<64x288xf32, #tpu.memory_space<vmem>>, vector<64x32xf32>,
    %c1_178 = arith.constant 1 : index
    %c9_179 = arith.constant 9 : index
    %c0_180 = arith.constant 0 : index
    %139 = vector.load %arg15[%c1_178, %c9_179, %c0_180] : memref<10x24x32xf32, #tpu.memory_space<vmem>>, vector<8x8x32xf32>
    %140 = vector.shape_cast %139 : vector<8x8x32xf32> to vector<64x32xf32>
    %c0_181 = arith.constant 0 : index
    %c160_182 = arith.constant 160 : index
    %141 = vector.load %arg16[%c0_181, %c160_182] : memref<64x288xf32, #tpu.memory_space<vmem>>, vector<64x32xf32>
    tpu.vector_store %arg16[%c0_181, %c160_182], %140 {strides = array<i32>} : memref<64x288xf32, #tpu.memory_space<vmem>>, vector<64x32xf32>,
    %c2_183 = arith.constant 2 : index
    %c7_184 = arith.constant 7 : index
    %c0_185 = arith.constant 0 : index
    %142 = vector.load %arg15[%c2_183, %c7_184, %c0_185] : memref<10x24x32xf32, #tpu.memory_space<vmem>>, vector<8x8x32xf32>
    %143 = vector.shape_cast %142 : vector<8x8x32xf32> to vector<64x32xf32>
    %c0_186 = arith.constant 0 : index
    %c192_187 = arith.constant 192 : index
    %144 = vector.load %arg16[%c0_186, %c192_187] : memref<64x288xf32, #tpu.memory_space<vmem>>, vector<64x32xf32>
    tpu.vector_store %arg16[%c0_186, %c192_187], %143 {strides = array<i32>} : memref<64x288xf32, #tpu.memory_space<vmem>>, vector<64x32xf32>,
    %c2_188 = arith.constant 2 : index
    %c8_189 = arith.constant 8 : index
    %c0_190 = arith.constant 0 : index
    %145 = vector.load %arg15[%c2_188, %c8_189, %c0_190] : memref<10x24x32xf32, #tpu.memory_space<vmem>>, vector<8x8x32xf32>
    %146 = vector.shape_cast %145 : vector<8x8x32xf32> to vector<64x32xf32>
    %c0_191 = arith.constant 0 : index
    %c224_192 = arith.constant 224 : index
    %147 = vector.load %arg16[%c0_191, %c224_192] : memref<64x288xf32, #tpu.memory_space<vmem>>, vector<64x32xf32>
    tpu.vector_store %arg16[%c0_191, %c224_192], %146 {strides = array<i32>} : memref<64x288xf32, #tpu.memory_space<vmem>>, vector<64x32xf32>,
    %c2_193 = arith.constant 2 : index
    %c9_194 = arith.constant 9 : index
    %c0_195 = arith.constant 0 : index
    %148 = vector.load %arg15[%c2_193, %c9_194, %c0_195] : memref<10x24x32xf32, #tpu.memory_space<vmem>>, vector<8x8x32xf32>
    %149 = vector.shape_cast %148 : vector<8x8x32xf32> to vector<64x32xf32>
    %c0_196 = arith.constant 0 : index
    %c256_197 = arith.constant 256 : index
    %150 = vector.load %arg16[%c0_196, %c256_197] : memref<64x288xf32, #tpu.memory_space<vmem>>, vector<64x32xf32>
    tpu.vector_store %arg16[%c0_196, %c256_197], %149 {strides = array<i32>} : memref<64x288xf32, #tpu.memory_space<vmem>>, vector<64x32xf32>,
    %c0_198 = arith.constant 0 : index
    %c0_199 = arith.constant 0 : index
    %151 = vector.load %arg16[%c0_198, %c0_199] : memref<64x288xf32, #tpu.memory_space<vmem>>, vector<64x288xf32>
    %152 = arith.truncf %151 : vector<64x288xf32> to vector<64x288xbf16>
    %c0_200 = arith.constant 0 : index
    %c0_201 = arith.constant 0 : index
    %153 = vector.load %arg10[%c0_200, %c0_201] : memref<288x128xbf16, #tpu.memory_space<vmem>>, vector<288x128xbf16>
    %cst_202 = arith.constant dense<0.000000e+00> : vector<64x128xf32>
    %154 = tpu.matmul %152, %153, %cst_202 {dimension_numbers = #tpu.dot_dimension_numbers<[1], [0], [0], [1], [0, 0, 1, 1], [], []>} : vector<64x288xbf16>, vector<288x128xbf16>, vector<64x128xf32> -> vector<64x128xf32>
    %155 = arith.addf %79, %154 : vector<64x128xf32>
    %c0_203 = arith.constant 0 : index
    %c0_204 = arith.constant 0 : index
    %156 = vector.load %arg11[%c0_203, %c0_204] : memref<1x128xf32, #tpu.memory_space<vmem>>, vector<1x128xf32>
    %157 = vector.broadcast %156 : vector<1x128xf32> to vector<64x128xf32>
    %158 = arith.mulf %155, %157 : vector<64x128xf32>
    %c0_205 = arith.constant 0 : index
    %c0_206 = arith.constant 0 : index
    %159 = vector.load %arg12[%c0_205, %c0_206] : memref<1x128xf32, #tpu.memory_space<vmem>>, vector<1x128xf32>
    %160 = vector.broadcast %159 : vector<1x128xf32> to vector<64x128xf32>
    %161 = arith.addf %158, %160 : vector<64x128xf32>
    %cst_207 = arith.constant 0.000000e+00 : f32
    %162 = vector.broadcast %cst_207 : f32 to vector<64x128xf32>
    %163 = arith.maximumf %161, %162 : vector<64x128xf32>
    %164 = vector.shape_cast %163 : vector<64x128xf32> to vector<1x8x8x128xf32>
    %c0_208 = arith.constant 0 : index
    %c0_209 = arith.constant 0 : index
    %c0_210 = arith.constant 0 : index
    %c0_211 = arith.constant 0 : index
    %165 = vector.load %arg13[%c0_208, %c0_209, %c0_210, %c0_211] : memref<1x8x8x128xf32, #tpu.memory_space<vmem>>, vector<1x8x8x128xf32>
    tpu.vector_store %arg13[%c0_208, %c0_209, %c0_210, %c0_211], %164 {strides = array<i32>} : memref<1x8x8x128xf32, #tpu.memory_space<vmem>>, vector<1x8x8x128xf32>,
    return
  }
  func.func @transform_0(%arg0: i32) -> (i32, i32, i32, i32) {
    %c0_i32 = arith.constant 0 : i32
    %c0_i32_0 = arith.constant 0 : i32
    %c0_i32_1 = arith.constant 0 : i32
    %c0_i32_2 = arith.constant 0 : i32
    return %arg0, %c0_i32, %c0_i32_0, %c0_i32_1 : i32, i32, i32, i32
  }
  func.func @transform_1(%arg0: i32) -> (i32, i32) {
    %c0_i32 = arith.constant 0 : i32
    %c0_i32_0 = arith.constant 0 : i32
    %c0_i32_1 = arith.constant 0 : i32
    return %c0_i32, %c0_i32_0 : i32, i32
  }
  func.func @transform_2(%arg0: i32) -> (i32, i32) {
    %c0_i32 = arith.constant 0 : i32
    %c0_i32_0 = arith.constant 0 : i32
    %c0_i32_1 = arith.constant 0 : i32
    return %c0_i32, %c0_i32_0 : i32, i32
  }
  func.func @transform_3(%arg0: i32) -> (i32, i32) {
    %c0_i32 = arith.constant 0 : i32
    %c0_i32_0 = arith.constant 0 : i32
    %c0_i32_1 = arith.constant 0 : i32
    return %c0_i32, %c0_i32_0 : i32, i32
  }
  func.func @transform_4(%arg0: i32) -> (i32, i32) {
    %c0_i32 = arith.constant 0 : i32
    %c0_i32_0 = arith.constant 0 : i32
    %c0_i32_1 = arith.constant 0 : i32
    return %c0_i32, %c0_i32_0 : i32, i32
  }
  func.func @transform_5(%arg0: i32) -> (i32, i32) {
    %c0_i32 = arith.constant 0 : i32
    %c0_i32_0 = arith.constant 0 : i32
    %c0_i32_1 = arith.constant 0 : i32
    return %c0_i32, %c0_i32_0 : i32, i32
  }
  func.func @transform_6(%arg0: i32) -> (i32, i32) {
    %c0_i32 = arith.constant 0 : i32
    %c0_i32_0 = arith.constant 0 : i32
    %c0_i32_1 = arith.constant 0 : i32
    return %c0_i32, %c0_i32_0 : i32, i32
  }
  func.func @transform_7(%arg0: i32) -> (i32, i32) {
    %c0_i32 = arith.constant 0 : i32
    %c0_i32_0 = arith.constant 0 : i32
    %c0_i32_1 = arith.constant 0 : i32
    return %c0_i32, %c0_i32_0 : i32, i32
  }
  func.func @transform_8(%arg0: i32) -> (i32, i32) {
    %c0_i32 = arith.constant 0 : i32
    %c0_i32_0 = arith.constant 0 : i32
    %c0_i32_1 = arith.constant 0 : i32
    return %c0_i32, %c0_i32_0 : i32, i32
  }
  func.func @transform_9(%arg0: i32) -> (i32, i32) {
    %c0_i32 = arith.constant 0 : i32
    %c0_i32_0 = arith.constant 0 : i32
    %c0_i32_1 = arith.constant 0 : i32
    return %c0_i32, %c0_i32_0 : i32, i32
  }
  func.func @transform_10(%arg0: i32) -> (i32, i32) {
    %c0_i32 = arith.constant 0 : i32
    %c0_i32_0 = arith.constant 0 : i32
    %c0_i32_1 = arith.constant 0 : i32
    return %c0_i32, %c0_i32_0 : i32, i32
  }
  func.func @transform_11(%arg0: i32) -> (i32, i32) {
    %c0_i32 = arith.constant 0 : i32
    %c0_i32_0 = arith.constant 0 : i32
    %c0_i32_1 = arith.constant 0 : i32
    return %c0_i32, %c0_i32_0 : i32, i32
  }
  func.func @transform_12(%arg0: i32) -> (i32, i32, i32, i32) {
    %c0_i32 = arith.constant 0 : i32
    %c0_i32_0 = arith.constant 0 : i32
    %c0_i32_1 = arith.constant 0 : i32
    %c0_i32_2 = arith.constant 0 : i32
    return %arg0, %c0_i32, %c0_i32_0, %c0_i32_1 : i32, i32, i32, i32
  }
}

</mosaic_0001>

<llo_original>
// kernel: inception_forward.1
$region0: #{inception_forward.1}
  #allocation0 [shape = 'u32[]', space=smem, size = 0x4, offset = 0x4, fixed_abs, tag = 'smem constant byte address 0x4 - core index']
  #allocation1 [shape = 'u32[72,128]{1,0:T(1,128)}', space=vmem, size = 0x9000, scoped, tag = 'internal scratch']
  #allocation2 [shape = 'f32[10,24,128]{2,1,0:T(8,128)}', space=vmem, size = 0x1e000, scoped, tag = 'scratch operand']
  #allocation3 [shape = 'f32[10,24,32]{2,1,0:T(8,128)}', space=vmem, size = 0x1e000, scoped, tag = 'scratch operand']
  #allocation4 [shape = 'f32[64,288]{1,0:T(8,128)}', space=vmem, size = 0x18000, scoped, tag = 'scratch operand']
  %s0 = inlined_call_operand.vmem [shape: f32[2,8,8,128], index: 0, kind: input, shape index: {}]
  %s1 = inlined_call_operand.vmem [shape: bf16[128,192], index: 1, kind: input, shape index: {}]
  %s2 = inlined_call_operand.vmem [shape: f32[1,64], index: 2, kind: input, shape index: {}]
  %s3 = inlined_call_operand.vmem [shape: f32[1,64], index: 3, kind: input, shape index: {}]
  %s4 = inlined_call_operand.vmem [shape: bf16[128,128], index: 4, kind: input, shape index: {}]
  %s5 = inlined_call_operand.vmem [shape: bf16[288,128], index: 5, kind: input, shape index: {}]
  %s6 = inlined_call_operand.vmem [shape: bf16[288,32], index: 6, kind: input, shape index: {}]
  %s7 = inlined_call_operand.vmem [shape: f32[1,32], index: 7, kind: input, shape index: {}]
  %s8 = inlined_call_operand.vmem [shape: f32[1,32], index: 8, kind: input, shape index: {}]
  %s9 = inlined_call_operand.vmem [shape: bf16[288,128], index: 9, kind: input, shape index: {}]
  %s10 = inlined_call_operand.vmem [shape: f32[1,128], index: 10, kind: input, shape index: {}]
  %s11 = inlined_call_operand.vmem [shape: f32[1,128], index: 11, kind: input, shape index: {}]
  %s12 = inlined_call_operand.hbm [shape: f32[2,8,8,128], index: 12, kind: output, shape index: {}]
  %s13 = sld [smem:[#allocation0]]
  $region81: #{inception_forward.1} parent=0
    _
  %s15 = ssub.s32 1, %s13
  %s16 = scalar_select 0, %s15, %s13
  $region1: #{inception_forward.1} parent=0
    #allocation5 [shape = 'u8[65536]{0}', space=vmem, size = 0x10000, scoped, tag = 'output window, operand 0']
    #allocation6 [shape = 's32[2]{0}', space=sflag, size = 0x8, scoped, tag = 'scoped memory for inception_forward.1']
    %17 = vsyncpa [#allocation6], 0
    %s18 = scalar_lea.sflag [#allocation6], 1
    %19 = vsyncpa %s18, 0
    loop: start=0, step=1, limit=4
    $region2: #{inception_forward.1} parent=1 // loop_pre_header
      _
    $region3: #{inception_forward.1} parent=1 // loop_header
      %s21 = sphi 0, %s25
      %p22 = scmp.ge.s32.totalorder %s21, 4
      %s31 = sphi 0, %s33
      %s34 = sphi 0, %s31
      %s35 = sphi 0, %s34
      %s51 = sphi 0, %s35
      %s55 = sphi 0, %s55
      %s57 = sphi 0, %s55
      %s58 = sphi 0, %s57
      %s72 = sphi 0, %s58
      %s76 = sphi 0, %s76
      %s78 = sphi 0, %s76
      %s79 = sphi 0, %s78
      %s93 = sphi 0, %s79
      %s97 = sphi 0, %s97
      %s99 = sphi 0, %s97
      %s100 = sphi 0, %s99
      %s114 = sphi 0, %s100
      %s118 = sphi 0, %s118
      %s120 = sphi 0, %s118
      %s121 = sphi 0, %s120
      %s135 = sphi 0, %s121
      %s139 = sphi 0, %s139
      %s141 = sphi 0, %s139
      %s142 = sphi 0, %s141
      %s156 = sphi 0, %s142
      %s160 = sphi 0, %s160
      %s162 = sphi 0, %s160
      %s163 = sphi 0, %s162
      %s177 = sphi 0, %s163
      %s181 = sphi 0, %s181
      %s183 = sphi 0, %s181
      %s184 = sphi 0, %s183
      %s198 = sphi 0, %s184
      %s202 = sphi 0, %s202
      %s204 = sphi 0, %s202
      %s205 = sphi 0, %s204
      %s219 = sphi 0, %s205
      %s223 = sphi 0, %s223
      %s225 = sphi 0, %s223
      %s226 = sphi 0, %s225
      %s240 = sphi 0, %s226
      %s244 = sphi 0, %s244
      %s246 = sphi 0, %s244
      %s247 = sphi 0, %s246
      %s261 = sphi 0, %s247
      %s265 = sphi 0, %s265
      %s267 = sphi 0, %s265
      %s268 = sphi 0, %s267
      %s282 = sphi 0, %s268
      %s288 = sphi 0, %s290
      %s291 = sphi 0, %s288
      %s292 = sphi 0, %s291
      %s308 = sphi 0, %s292
    $region4: #{inception_forward.1} parent=1 // loop_header_branch
      %24 = sbr.rel (%p22) target = $region8
    $region5: #{inception_forward.1} parent=1 // loop_body
      %s26 = ssub.s32 %s21, 1
      %s27 = ssub.s32 %s21, 2
      %s28 = sadd.s32 %s21, 1
      %s29 = ssub.s32 %s21, %s28
      %p30 = scmp.eq.s32.totalorder %s29, 0
      %s32 = sadd.s32 %s31, 1
      %s33 = scalar_select %p30, %s31, %s32
      %p36 = pneg %p30
      %p37 = scmp.eq.s32.totalorder %s21, 1
      %p38 = por %p36, %p37
      %p39 = scmp.ne.s32.totalorder %s31, %s34
      %p40 = scmp.eq.s32.totalorder %s21, 0
      %p41 = por %p39, %p40
      %p42 = scmp.ne.s32.totalorder %s31, %s34
      %p43 = scmp.eq.s32.totalorder %s26, 1
      %p44 = por %p42, %p43
      %p45 = scmp.ne.s32.totalorder %s34, %s35
      %p46 = scmp.eq.s32.totalorder %s26, 0
      %p47 = por %p45, %p46
      %p48 = scmp.ne.s32.totalorder %s34, %s35
      %p49 = scmp.eq.s32.totalorder %s27, 1
      %p50 = por %p48, %p49
      %p52 = scmp.ne.s32.totalorder %s35, %s51
      %p53 = scmp.eq.s32.totalorder %s27, 0
      %p54 = por %p52, %p53
      %s56 = sadd.s32 %s55, 1
      %p59 = scmp.eq.s32.totalorder %s21, 1
      %p60 = scmp.ne.s32.totalorder %s55, %s57
      %p61 = scmp.eq.s32.totalorder %s21, 0
      %p62 = por %p60, %p61
      %p63 = scmp.ne.s32.totalorder %s55, %s57
      %p64 = scmp.eq.s32.totalorder %s26, 1
      %p65 = por %p63, %p64
      %p66 = scmp.ne.s32.totalorder %s57, %s58
      %p67 = scmp.eq.s32.totalorder %s26, 0
      %p68 = por %p66, %p67
      %p69 = scmp.ne.s32.totalorder %s57, %s58
      %p70 = scmp.eq.s32.totalorder %s27, 1
      %p71 = por %p69, %p70
      %p73 = scmp.ne.s32.totalorder %s58, %s72
      %p74 = scmp.eq.s32.totalorder %s27, 0
      %p75 = por %p73, %p74
      %s77 = sadd.s32 %s76, 1
      %p80 = scmp.eq.s32.totalorder %s21, 1
      %p81 = scmp.ne.s32.totalorder %s76, %s78
      %p82 = scmp.eq.s32.totalorder %s21, 0
      %p83 = por %p81, %p82
      %p84 = scmp.ne.s32.totalorder %s76, %s78
      %p85 = scmp.eq.s32.totalorder %s26, 1
      %p86 = por %p84, %p85
      %p87 = scmp.ne.s32.totalorder %s78, %s79
      %p88 = scmp.eq.s32.totalorder %s26, 0
      %p89 = por %p87, %p88
      %p90 = scmp.ne.s32.totalorder %s78, %s79
      %p91 = scmp.eq.s32.totalorder %s27, 1
      %p92 = por %p90, %p91
      %p94 = scmp.ne.s32.totalorder %s79, %s93
      %p95 = scmp.eq.s32.totalorder %s27, 0
      %p96 = por %p94, %p95
      %s98 = sadd.s32 %s97, 1
      %p101 = scmp.eq.s32.totalorder %s21, 1
      %p102 = scmp.ne.s32.totalorder %s97, %s99
      %p103 = scmp.eq.s32.totalorder %s21, 0
      %p104 = por %p102, %p103
      %p105 = scmp.ne.s32.totalorder %s97, %s99
      %p106 = scmp.eq.s32.totalorder %s26, 1
      %p107 = por %p105, %p106
      %p108 = scmp.ne.s32.totalorder %s99, %s100
      %p109 = scmp.eq.s32.totalorder %s26, 0
      %p110 = por %p108, %p109
      %p111 = scmp.ne.s32.totalorder %s99, %s100
      %p112 = scmp.eq.s32.totalorder %s27, 1
      %p113 = por %p111, %p112
      %p115 = scmp.ne.s32.totalorder %s100, %s114
      %p116 = scmp.eq.s32.totalorder %s27, 0
      %p117 = por %p115, %p116
      %s119 = sadd.s32 %s118, 1
      %p122 = scmp.eq.s32.totalorder %s21, 1
      %p123 = scmp.ne.s32.totalorder %s118, %s120
      %p124 = scmp.eq.s32.totalorder %s21, 0
      %p125 = por %p123, %p124
      %p126 = scmp.ne.s32.totalorder %s118, %s120
      %p127 = scmp.eq.s32.totalorder %s26, 1
      %p128 = por %p126, %p127
      %p129 = scmp.ne.s32.totalorder %s120, %s121
      %p130 = scmp.eq.s32.totalorder %s26, 0
      %p131 = por %p129, %p130
      %p132 = scmp.ne.s32.totalorder %s120, %s121
      %p133 = scmp.eq.s32.totalorder %s27, 1
      %p134 = por %p132, %p133
      %p136 = scmp.ne.s32.totalorder %s121, %s135
      %p137 = scmp.eq.s32.totalorder %s27, 0
      %p138 = por %p136, %p137
      %s140 = sadd.s32 %s139, 1
      %p143 = scmp.eq.s32.totalorder %s21, 1
      %p144 = scmp.ne.s32.totalorder %s139, %s141
      %p145 = scmp.eq.s32.totalorder %s21, 0
      %p146 = por %p144, %p145
      %p147 = scmp.ne.s32.totalorder %s139, %s141
      %p148 = scmp.eq.s32.totalorder %s26, 1
      %p149 = por %p147, %p148
      %p150 = scmp.ne.s32.totalorder %s141, %s142
      %p151 = scmp.eq.s32.totalorder %s26, 0
      %p152 = por %p150, %p151
      %p153 = scmp.ne.s32.totalorder %s141, %s142
      %p154 = scmp.eq.s32.totalorder %s27, 1
      %p155 = por %p153, %p154
      %p157 = scmp.ne.s32.totalorder %s142, %s156
      %p158 = scmp.eq.s32.totalorder %s27, 0
      %p159 = por %p157, %p158
      %s161 = sadd.s32 %s160, 1
      %p164 = scmp.eq.s32.totalorder %s21, 1
      %p165 = scmp.ne.s32.totalorder %s160, %s162
      %p166 = scmp.eq.s32.totalorder %s21, 0
      %p167 = por %p165, %p166
      %p168 = scmp.ne.s32.totalorder %s160, %s162
      %p169 = scmp.eq.s32.totalorder %s26, 1
      %p170 = por %p168, %p169
      %p171 = scmp.ne.s32.totalorder %s162, %s163
      %p172 = scmp.eq.s32.totalorder %s26, 0
      %p173 = por %p171, %p172
      %p174 = scmp.ne.s32.totalorder %s162, %s163
      %p175 = scmp.eq.s32.totalorder %s27, 1
      %p176 = por %p174, %p175
      %p178 = scmp.ne.s32.totalorder %s163, %s177
      %p179 = scmp.eq.s32.totalorder %s27, 0
      %p180 = por %p178, %p179
      %s182 = sadd.s32 %s181, 1
      %p185 = scmp.eq.s32.totalorder %s21, 1
      %p186 = scmp.ne.s32.totalorder %s181, %s183
      %p187 = scmp.eq.s32.totalorder %s21, 0
      %p188 = por %p186, %p187
      %p189 = scmp.ne.s32.totalorder %s181, %s183
      %p190 = scmp.eq.s32.totalorder %s26, 1
      %p191 = por %p189, %p190
      %p192 = scmp.ne.s32.totalorder %s183, %s184
      %p193 = scmp.eq.s32.totalorder %s26, 0
      %p194 = por %p192, %p193
      %p195 = scmp.ne.s32.totalorder %s183, %s184
      %p196 = scmp.eq.s32.totalorder %s27, 1
      %p197 = por %p195, %p196
      %p199 = scmp.ne.s32.totalorder %s184, %s198
      %p200 = scmp.eq.s32.totalorder %s27, 0
      %p201 = por %p199, %p200
      %s203 = sadd.s32 %s202, 1
      %p206 = scmp.eq.s32.totalorder %s21, 1
      %p207 = scmp.ne.s32.totalorder %s202, %s204
      %p208 = scmp.eq.s32.totalorder %s21, 0
      %p209 = por %p207, %p208
      %p210 = scmp.ne.s32.totalorder %s202, %s204
      %p211 = scmp.eq.s32.totalorder %s26, 1
      %p212 = por %p210, %p211
      %p213 = scmp.ne.s32.totalorder %s204, %s205
      %p214 = scmp.eq.s32.totalorder %s26, 0
      %p215 = por %p213, %p214
      %p216 = scmp.ne.s32.totalorder %s204, %s205
      %p217 = scmp.eq.s32.totalorder %s27, 1
      %p218 = por %p216, %p217
      %p220 = scmp.ne.s32.totalorder %s205, %s219
      %p221 = scmp.eq.s32.totalorder %s27, 0
      %p222 = por %p220, %p221
      %s224 = sadd.s32 %s223, 1
      %p227 = scmp.eq.s32.totalorder %s21, 1
      %p228 = scmp.ne.s32.totalorder %s223, %s225
      %p229 = scmp.eq.s32.totalorder %s21, 0
      %p230 = por %p228, %p229
      %p231 = scmp.ne.s32.totalorder %s223, %s225
      %p232 = scmp.eq.s32.totalorder %s26, 1
      %p233 = por %p231, %p232
      %p234 = scmp.ne.s32.totalorder %s225, %s226
      %p235 = scmp.eq.s32.totalorder %s26, 0
      %p236 = por %p234, %p235
      %p237 = scmp.ne.s32.totalorder %s225, %s226
      %p238 = scmp.eq.s32.totalorder %s27, 1
      %p239 = por %p237, %p238
      %p241 = scmp.ne.s32.totalorder %s226, %s240
      %p242 = scmp.eq.s32.totalorder %s27, 0
      %p243 = por %p241, %p242
      %s245 = sadd.s32 %s244, 1
      %p248 = scmp.eq.s32.totalorder %s21, 1
      %p249 = scmp.ne.s32.totalorder %s244, %s246
      %p250 = scmp.eq.s32.totalorder %s21, 0
      %p251 = por %p249, %p250
      %p252 = scmp.ne.s32.totalorder %s244, %s246
      %p253 = scmp.eq.s32.totalorder %s26, 1
      %p254 = por %p252, %p253
      %p255 = scmp.ne.s32.totalorder %s246, %s247
      %p256 = scmp.eq.s32.totalorder %s26, 0
      %p257 = por %p255, %p256
      %p258 = scmp.ne.s32.totalorder %s246, %s247
      %p259 = scmp.eq.s32.totalorder %s27, 1
      %p260 = por %p258, %p259
      %p262 = scmp.ne.s32.totalorder %s247, %s261
      %p263 = scmp.eq.s32.totalorder %s27, 0
      %p264 = por %p262, %p263
      %s266 = sadd.s32 %s265, 1
      %p269 = scmp.eq.s32.totalorder %s21, 1
      %p270 = scmp.ne.s32.totalorder %s265, %s267
      %p271 = scmp.eq.s32.totalorder %s21, 0
      %p272 = por %p270, %p271
      %p273 = scmp.ne.s32.totalorder %s265, %s267
      %p274 = scmp.eq.s32.totalorder %s26, 1
      %p275 = por %p273, %p274
      %p276 = scmp.ne.s32.totalorder %s267, %s268
      %p277 = scmp.eq.s32.totalorder %s26, 0
      %p278 = por %p276, %p277
      %p279 = scmp.ne.s32.totalorder %s267, %s268
      %p280 = scmp.eq.s32.totalorder %s27, 1
      %p281 = por %p279, %p280
      %p283 = scmp.ne.s32.totalorder %s268, %s282
      %p284 = scmp.eq.s32.totalorder %s27, 0
      %p285 = por %p283, %p284
      %s286 = ssub.s32 %s21, %s28
      %p287 = scmp.eq.s32.totalorder %s286, 0
      %s289 = sadd.s32 %s288, 1
      %s290 = scalar_select %p287, %s288, %s289
      %p293 = pneg %p287
      %p294 = scmp.eq.s32.totalorder %s21, 1
      %p295 = por %p293, %p294
      %p296 = scmp.ne.s32.totalorder %s288, %s291
      %p297 = scmp.eq.s32.totalorder %s21, 0
      %p298 = por %p296, %p297
      %p299 = scmp.ne.s32.totalorder %s288, %s291
      %p300 = scmp.eq.s32.totalorder %s26, 1
      %p301 = por %p299, %p300
      %p302 = scmp.ne.s32.totalorder %s291, %s292
      %p303 = scmp.eq.s32.totalorder %s26, 0
      %p304 = por %p302, %p303
      %p305 = scmp.ne.s32.totalorder %s291, %s292
      %p306 = scmp.eq.s32.totalorder %s27, 1
      %p307 = por %p305, %p306
      %p309 = scmp.ne.s32.totalorder %s292, %s308
      %p310 = scmp.eq.s32.totalorder %s27, 0
      %p311 = por %p309, %p310
      %p312 = scmp.le.s32.totalorder 1, %s21
      %p313 = scmp.lt.s32.totalorder %s21, 3
      %p314 = pnand %p312, %p313
      %p315 = pneg %p314
      // Predicated region
      $region9: #{inception_forward.1} parent=5 // pred_check
        _
      $region10: #{inception_forward.1} parent=5 // pred_check_branch
        %317 = sbr.rel (%p314) target = $region12
      $region11: #{inception_forward.1} parent=5 // pred_region
        %s318 = ssub.s32 %s21, 1
        // Predicated region
        $region13: #{inception_forward.1} parent=11 // pred_check
          %p319 = pneg %p68
        $region14: #{inception_forward.1} parent=11 // pred_check_branch
          %321 = sbr.rel (%p319) target = $region16
        $region15: #{inception_forward.1} parent=11 // pred_region
          _
        $region16: #{inception_forward.1} parent=11 // pred_fallthru
          _
        // Predicated region
        $region17: #{inception_forward.1} parent=11 // pred_check
          %p322 = pneg %p89
        $region18: #{inception_forward.1} parent=11 // pred_check_branch
          %324 = sbr.rel (%p322) target = $region20
        $region19: #{inception_forward.1} parent=11 // pred_region
          _
        $region20: #{inception_forward.1} parent=11 // pred_fallthru
          _
        // Predicated region
        $region21: #{inception_forward.1} parent=11 // pred_check
          %p325 = pneg %p110
        $region22: #{inception_forward.1} parent=11 // pred_check_branch
          %327 = sbr.rel (%p325) target = $region24
        $region23: #{inception_forward.1} parent=11 // pred_region
          _
        $region24: #{inception_forward.1} parent=11 // pred_fallthru
          _
        // Predicated region
        $region25: #{inception_forward.1} parent=11 // pred_check
          %p328 = pneg %p131
        $region26: #{inception_forward.1} parent=11 // pred_check_branch
          %330 = sbr.rel (%p328) target = $region28
        $region27: #{inception_forward.1} parent=11 // pred_region
          _
        $region28: #{inception_forward.1} parent=11 // pred_fallthru
          _
        // Predicated region
        $region29: #{inception_forward.1} parent=11 // pred_check
          %p331 = pneg %p152
        $region30: #{inception_forward.1} parent=11 // pred_check_branch
          %333 = sbr.rel (%p331) target = $region32
        $region31: #{inception_forward.1} parent=11 // pred_region
          _
        $region32: #{inception_forward.1} parent=11 // pred_fallthru
          _
        // Predicated region
        $region33: #{inception_forward.1} parent=11 // pred_check
          %p334 = pneg %p173
        $region34: #{inception_forward.1} parent=11 // pred_check_branch
          %336 = sbr.rel (%p334) target = $region36
        $region35: #{inception_forward.1} parent=11 // pred_region
          _
        $region36: #{inception_forward.1} parent=11 // pred_fallthru
          _
        // Predicated region
        $region37: #{inception_forward.1} parent=11 // pred_check
          %p337 = pneg %p194
        $region38: #{inception_forward.1} parent=11 // pred_check_branch
          %339 = sbr.rel (%p337) target = $region40
        $region39: #{inception_forward.1} parent=11 // pred_region
          _
        $region40: #{inception_forward.1} parent=11 // pred_fallthru
          _
        // Predicated region
        $region41: #{inception_forward.1} parent=11 // pred_check
          %p340 = pneg %p215
        $region42: #{inception_forward.1} parent=11 // pred_check_branch
          %342 = sbr.rel (%p340) target = $region44
        $region43: #{inception_forward.1} parent=11 // pred_region
          _
        $region44: #{inception_forward.1} parent=11 // pred_fallthru
          _
        // Predicated region
        $region45: #{inception_forward.1} parent=11 // pred_check
          %p343 = pneg %p236
        $region46: #{inception_forward.1} parent=11 // pred_check_branch
          %345 = sbr.rel (%p343) target = $region48
        $region47: #{inception_forward.1} parent=11 // pred_region
          _
        $region48: #{inception_forward.1} parent=11 // pred_fallthru
          _
        // Predicated region
        $region49: #{inception_forward.1} parent=11 // pred_check
          %p346 = pneg %p257
        $region50: #{inception_forward.1} parent=11 // pred_check_branch
          %348 = sbr.rel (%p346) target = $region52
        $region51: #{inception_forward.1} parent=11 // pred_region
          _
        $region52: #{inception_forward.1} parent=11 // pred_fallthru
          _
        // Predicated region
        $region53: #{inception_forward.1} parent=11 // pred_check
          %p349 = pneg %p278
        $region54: #{inception_forward.1} parent=11 // pred_check_branch
          %351 = sbr.rel (%p349) target = $region56
        $region55: #{inception_forward.1} parent=11 // pred_region
          _
        $region56: #{inception_forward.1} parent=11 // pred_fallthru
          _
      $region12: #{inception_forward.1} parent=5 // pred_fallthru
        _
      %p352 = scmp.lt.s32.totalorder %s21, 2
      // Predicated region
      $region57: #{inception_forward.1} parent=5 // pred_check
        %p353 = pneg %p352
      $region58: #{inception_forward.1} parent=5 // pred_check_branch
        %355 = sbr.rel (%p353) target = $region60
      $region59: #{inception_forward.1} parent=5 // pred_region
        // Predicated region
        $region61: #{inception_forward.1} parent=59 // pred_check
          %p356 = pneg %p41
        $region62: #{inception_forward.1} parent=59 // pred_check_branch
          %358 = sbr.rel (%p356) target = $region64
        $region63: #{inception_forward.1} parent=59 // pred_region
          %p359 = scmp.lt.s32.totalorder %s21, 1
          %s360 = scalar_select %p359, %s21, 1
          %s361 = smul.addr %s360, 8
          %s362 = smul.addr %s361, 8
          %s363 = scalar_lea.vmem %s0, %s362
        $region64: #{inception_forward.1} parent=59 // pred_fallthru
          _
      $region60: #{inception_forward.1} parent=5 // pred_fallthru
        _
      %p364 = scmp.le.s32.totalorder 1, %s21
      %p365 = scmp.lt.s32.totalorder %s21, 3
      %p366 = pnand %p364, %p365
      %p367 = pneg %p366
      // Predicated region
      $region65: #{inception_forward.1} parent=5 // pred_check
        _
      $region66: #{inception_forward.1} parent=5 // pred_check_branch
        %369 = sbr.rel (%p366) target = $region68
      $region67: #{inception_forward.1} parent=5 // pred_region
        %s370 = ssub.s32 %s21, 1
        %p371 = scmp.lt.s32.totalorder %s26, 1
        %s372 = scalar_select %p371, %s26, 1
        %s373 = smul.addr %s372, 8
        %s374 = smul.addr %s373, 8
        %s375 = scalar_lea.vmem %s0, %s374
        %p376 = pneg %p47
        %p377 = pneg %p44
        %p378 = pneg %p68
        %p379 = pneg %p65
        %p380 = pneg %p89
        %p381 = pneg %p86
        %p382 = pneg %p110
        %p383 = pneg %p107
        %p384 = pneg %p131
        %p385 = pneg %p128
        %p386 = pneg %p152
        %p387 = pneg %p149
        %p388 = pneg %p173
        %p389 = pneg %p170
        %p390 = pneg %p194
        %p391 = pneg %p191
        %p392 = pneg %p215
        %p393 = pneg %p212
        %p394 = pneg %p236
        %p395 = pneg %p233
        %p396 = pneg %p257
        %p397 = pneg %p254
        %p398 = pneg %p278
        %p399 = pneg %p275
        %p400 = pneg %p304
        %p401 = pneg %p301
        %s402 = sand.u32 %s291, 1
        %s403 = scalar_lea.sflag [#allocation6], %s402
        %s404 = sand.u32 %s291, 1
        %s405 = smul.addr %s404, 64
        %s406 = scalar_lea.vmem [#allocation5], %s405
        %p407 = scmp.lt.s32.totalorder %s26, 1
        %s408 = scalar_select %p407, %s26, 1
        %s409 = smul.addr %s408, 8
        %s410 = smul.addr %s409, 8
        %s411 = scalar_lea.vmem %s0, %s410
        %413 = vst [vmem:[#allocation2] sm:$0xff] 0.0
        %414 = vst [vmem:[#allocation2 + $0x8] sm:$0xff] 0.0
        %415 = vst [vmem:[#allocation2 + $0x10] sm:$0xff] 0.0
        %416 = vst [vmem:[#allocation2 + $0x18] sm:$0xff] 0.0
        %417 = vst [vmem:[#allocation2 + $0x20] sm:$0xff] 0.0
        %418 = vst [vmem:[#allocation2 + $0x28] sm:$0xff] 0.0
        %419 = vst [vmem:[#allocation2 + $0x30] sm:$0xff] 0.0
        %420 = vst [vmem:[#allocation2 + $0x38] sm:$0xff] 0.0
        %421 = vst [vmem:[#allocation2 + $0x40] sm:$0xff] 0.0
        %422 = vst [vmem:[#allocation2 + $0x48] sm:$0xff] 0.0
        %423 = vst [vmem:[#allocation2 + $0x50] sm:$0xff] 0.0
        %424 = vst [vmem:[#allocation2 + $0x58] sm:$0xff] 0.0
        %425 = vst [vmem:[#allocation2 + $0x60] sm:$0xff] 0.0
        %426 = vst [vmem:[#allocation2 + $0x68] sm:$0xff] 0.0
        %427 = vst [vmem:[#allocation2 + $0x70] sm:$0xff] 0.0
        %428 = vst [vmem:[#allocation2 + $0x78] sm:$0xff] 0.0
        %429 = vst [vmem:[#allocation2 + $0x80] sm:$0xff] 0.0
        %430 = vst [vmem:[#allocation2 + $0x88] sm:$0xff] 0.0
        %431 = vst [vmem:[#allocation2 + $0x90] sm:$0xff] 0.0
        %432 = vst [vmem:[#allocation2 + $0x98] sm:$0xff] 0.0
        %433 = vst [vmem:[#allocation2 + $0xa0] sm:$0xff] 0.0
        %434 = vst [vmem:[#allocation2 + $0xa8] sm:$0xff] 0.0
        %435 = vst [vmem:[#allocation2 + $0xb0] sm:$0xff] 0.0
        %436 = vst [vmem:[#allocation2 + $0xb8] sm:$0xff] 0.0
        %437 = vst [vmem:[#allocation2 + $0xc0] sm:$0xff] 0.0
        %438 = vst [vmem:[#allocation2 + $0xc8] sm:$0xff] 0.0
        %439 = vst [vmem:[#allocation2 + $0xd0] sm:$0xff] 0.0
        %440 = vst [vmem:[#allocation2 + $0xd8] sm:$0xff] 0.0
        %441 = vst [vmem:[#allocation2 + $0xe0] sm:$0xff] 0.0
        %442 = vst [vmem:[#allocation2 + $0xe8] sm:$0xff] 0.0
        %vm443 = vcmask 261120
        %444 = vst.msk [vmem:[#allocation3] sm:$0xff] %vm443, 0.0
        %445 = vst.msk [vmem:[#allocation3 + $0x8] sm:$0xff] %vm443, 0.0
        %446 = vst.msk [vmem:[#allocation3 + $0x10] sm:$0xff] %vm443, 0.0
        %447 = vst.msk [vmem:[#allocation3 + $0x18] sm:$0xff] %vm443, 0.0
        %448 = vst.msk [vmem:[#allocation3 + $0x20] sm:$0xff] %vm443, 0.0
        %449 = vst.msk [vmem:[#allocation3 + $0x28] sm:$0xff] %vm443, 0.0
        %450 = vst.msk [vmem:[#allocation3 + $0x30] sm:$0xff] %vm443, 0.0
        %451 = vst.msk [vmem:[#allocation3 + $0x38] sm:$0xff] %vm443, 0.0
        %452 = vst.msk [vmem:[#allocation3 + $0x40] sm:$0xff] %vm443, 0.0
        %453 = vst.msk [vmem:[#allocation3 + $0x48] sm:$0xff] %vm443, 0.0
        %454 = vst.msk [vmem:[#allocation3 + $0x50] sm:$0xff] %vm443, 0.0
        %455 = vst.msk [vmem:[#allocation3 + $0x58] sm:$0xff] %vm443, 0.0
        %456 = vst.msk [vmem:[#allocation3 + $0x60] sm:$0xff] %vm443, 0.0
        %457 = vst.msk [vmem:[#allocation3 + $0x68] sm:$0xff] %vm443, 0.0
        %458 = vst.msk [vmem:[#allocation3 + $0x70] sm:$0xff] %vm443, 0.0
        %459 = vst.msk [vmem:[#allocation3 + $0x78] sm:$0xff] %vm443, 0.0
        %460 = vst.msk [vmem:[#allocation3 + $0x80] sm:$0xff] %vm443, 0.0
        %461 = vst.msk [vmem:[#allocation3 + $0x88] sm:$0xff] %vm443, 0.0
        %462 = vst.msk [vmem:[#allocation3 + $0x90] sm:$0xff] %vm443, 0.0
        %463 = vst.msk [vmem:[#allocation3 + $0x98] sm:$0xff] %vm443, 0.0
        %464 = vst.msk [vmem:[#allocation3 + $0xa0] sm:$0xff] %vm443, 0.0
        %465 = vst.msk [vmem:[#allocation3 + $0xa8] sm:$0xff] %vm443, 0.0
        %466 = vst.msk [vmem:[#allocation3 + $0xb0] sm:$0xff] %vm443, 0.0
        %467 = vst.msk [vmem:[#allocation3 + $0xb8] sm:$0xff] %vm443, 0.0
        %468 = vst.msk [vmem:[#allocation3 + $0xc0] sm:$0xff] %vm443, 0.0
        %469 = vst.msk [vmem:[#allocation3 + $0xc8] sm:$0xff] %vm443, 0.0
        %470 = vst.msk [vmem:[#allocation3 + $0xd0] sm:$0xff] %vm443, 0.0
        %471 = vst.msk [vmem:[#allocation3 + $0xd8] sm:$0xff] %vm443, 0.0
        %472 = vst.msk [vmem:[#allocation3 + $0xe0] sm:$0xff] %vm443, 0.0
        %473 = vst.msk [vmem:[#allocation3 + $0xe8] sm:$0xff] %vm443, 0.0
        %v474 = vld [vmem:[%s411] sm:$0xff]
        %v475 = vld [vmem:[%s411 + $0x8] sm:$0xff]
        %v476 = vld [vmem:[%s411 + $0x10] sm:$0xff]
        %v477 = vld [vmem:[%s411 + $0x18] sm:$0xff]
        %v478 = vld [vmem:[%s411 + $0x20] sm:$0xff]
        %v479 = vld [vmem:[%s411 + $0x28] sm:$0xff]
        %v480 = vld [vmem:[%s411 + $0x30] sm:$0xff]
        %v481 = vld [vmem:[%s411 + $0x38] sm:$0xff]
        %v482 = vpack.c.bf16 %v475, %v474
        %v483 = vpack.c.bf16 %v477, %v476
        %v484 = vpack.c.bf16 %v479, %v478
        %v485 = vpack.c.bf16 %v481, %v480
        %v486 = vld [vmem:[%s1] sm:$0xff]
        %v487 = vld [vmem:[%s1 + $0x8] sm:$0xff]
        %v488 = vld [vmem:[%s1 + $0x10] sm:$0xff]
        %v489 = vld [vmem:[%s1 + $0x18] sm:$0xff]
        %v490 = vld [vmem:[%s1 + $0x20] sm:$0xff]
        %v491 = vld [vmem:[%s1 + $0x28] sm:$0xff]
        %v492 = vld [vmem:[%s1 + $0x30] sm:$0xff]
        %v493 = vld [vmem:[%s1 + $0x38] sm:$0xff]
        %v494 = vld [vmem:[%s1 + $0x40] sm:$0xff]
        %v495 = vld [vmem:[%s1 + $0x48] sm:$0xff]
        %v496 = vld [vmem:[%s1 + $0x50] sm:$0xff]
        %v497 = vld [vmem:[%s1 + $0x58] sm:$0xff]
        %v498 = vld [vmem:[%s1 + $0x60] sm:$0xff]
        %v499 = vld [vmem:[%s1 + $0x68] sm:$0xff]
        %v500 = vld [vmem:[%s1 + $0x70] sm:$0xff]
        %v501 = vld [vmem:[%s1 + $0x78] sm:$0xff]
        %v518 = vunpack.c.l.b16 %v486
        %v519 = vunpack.c.h.b16 %v486
        %v520 = vunpack.c.l.b16 %v487
        %v521 = vunpack.c.h.b16 %v487
        %v522 = vunpack.c.l.b16 %v488
        %v523 = vunpack.c.h.b16 %v488
        %v524 = vunpack.c.l.b16 %v489
        %v525 = vunpack.c.h.b16 %v489
        %v526 = vunpack.c.l.b16 %v490
        %v527 = vunpack.c.h.b16 %v490
        %v528 = vunpack.c.l.b16 %v491
        %v529 = vunpack.c.h.b16 %v491
        %v530 = vunpack.c.l.b16 %v492
        %v531 = vunpack.c.h.b16 %v492
        %v532 = vunpack.c.l.b16 %v493
        %v533 = vunpack.c.h.b16 %v493
        %v534 = vunpack.c.l.b16 %v494
        %v535 = vunpack.c.h.b16 %v494
        %v536 = vunpack.c.l.b16 %v495
        %v537 = vunpack.c.h.b16 %v495
        %v538 = vunpack.c.l.b16 %v496
        %v539 = vunpack.c.h.b16 %v496
        %v540 = vunpack.c.l.b16 %v497
        %v541 = vunpack.c.h.b16 %v497
        %v542 = vunpack.c.l.b16 %v498
        %v543 = vunpack.c.h.b16 %v498
        %v544 = vunpack.c.l.b16 %v499
        %v545 = vunpack.c.h.b16 %v499
        %v546 = vunpack.c.l.b16 %v500
        %v547 = vunpack.c.h.b16 %v500
        %v548 = vunpack.c.l.b16 %v501
        %v549 = vunpack.c.h.b16 %v501
        %v550 = vpack.c.b16 %v520, %v518
        %v551 = vpack.c.b16 %v521, %v519
        %v552 = vpack.c.b16 %v524, %v522
        %v553 = vpack.c.b16 %v525, %v523
        %v554 = vpack.c.b16 %v528, %v526
        %v555 = vpack.c.b16 %v529, %v527
        %v556 = vpack.c.b16 %v532, %v530
        %v557 = vpack.c.b16 %v533, %v531
        %v558 = vpack.c.b16 %v536, %v534
        %v559 = vpack.c.b16 %v537, %v535
        %v560 = vpack.c.b16 %v540, %v538
        %v561 = vpack.c.b16 %v541, %v539
        %v562 = vpack.c.b16 %v544, %v542
        %v563 = vpack.c.b16 %v545, %v543
        %v564 = vpack.c.b16 %v548, %v546
        %v565 = vpack.c.b16 %v549, %v547
        %582 = vmatpush.bf16.msra.mxu0 %v564
        %583 = vmatpush.bf16.msra.mxu0 %v562
        %584 = vmatpush.bf16.msra.mxu0 %v560
        %585 = vmatpush.bf16.msra.mxu0 %v558
        %586 = vmatpush.bf16.msra.mxu0 %v556
        %587 = vmatpush.bf16.msra.mxu0 %v554
        %588 = vmatpush.bf16.msra.mxu0 %v552
        %589 = vmatpush.bf16.msra.mxu0 %v550
        %590 = vmatmul.bf16.gmra.mxu0 %v482
        %v591 = vpop.f32.mrf.mxu0
        %v592 = vadd.f32 0.0, %v591
        %v593 = vpop.f32.mrf.mxu0
        %v594 = vadd.f32 0.0, %v593
        %595 = vmatmul.bf16.gmra.mxu0 %v483
        %v596 = vpop.f32.mrf.mxu0
        %v597 = vadd.f32 0.0, %v596
        %v598 = vpop.f32.mrf.mxu0
        %v599 = vadd.f32 0.0, %v598
        %600 = vmatmul.bf16.gmra.mxu0 %v484
        %v601 = vpop.f32.mrf.mxu0
        %v602 = vadd.f32 0.0, %v601
        %v603 = vpop.f32.mrf.mxu0
        %v604 = vadd.f32 0.0, %v603
        %605 = vmatmul.bf16.gmra.mxu0 %v485
        %v606 = vpop.f32.mrf.mxu0
        %v607 = vadd.f32 0.0, %v606
        %v608 = vpop.f32.mrf.mxu0
        %v609 = vadd.f32 0.0, %v608
        %610 = vdwg.mxu0
        %611 = vmatpush.bf16.msra.mxu0 %v565
        %612 = vmatpush.bf16.msra.mxu0 %v563
        %613 = vmatpush.bf16.msra.mxu0 %v561
        %614 = vmatpush.bf16.msra.mxu0 %v559
        %615 = vmatpush.bf16.msra.mxu0 %v557
        %616 = vmatpush.bf16.msra.mxu0 %v555
        %617 = vmatpush.bf16.msra.mxu0 %v553
        %618 = vmatpush.bf16.msra.mxu0 %v551
        %619 = vmatmul.bf16.gmra.mxu0 %v482
        %v620 = vpop.f32.mrf.mxu0
        %v621 = vadd.f32 0.0, %v620
        %v622 = vpop.f32.mrf.mxu0
        %v623 = vadd.f32 0.0, %v622
        %624 = vmatmul.bf16.gmra.mxu0 %v483
        %v625 = vpop.f32.mrf.mxu0
        %v626 = vadd.f32 0.0, %v625
        %v627 = vpop.f32.mrf.mxu0
        %v628 = vadd.f32 0.0, %v627
        %629 = vmatmul.bf16.gmra.mxu0 %v484
        %v630 = vpop.f32.mrf.mxu0
        %v631 = vadd.f32 0.0, %v630
        %v632 = vpop.f32.mrf.mxu0
        %v633 = vadd.f32 0.0, %v632
        %634 = vmatmul.bf16.gmra.mxu0 %v485
        %v635 = vpop.f32.mrf.mxu0
        %v636 = vadd.f32 0.0, %v635
        %v637 = vpop.f32.mrf.mxu0
        %v638 = vadd.f32 0.0, %v637
        %639 = vdwg.mxu0
        %v640 = vld [vmem:[%s2] sm:$0x1]
        %v642 = vperm.slane %v640, 0
        %v644 = vmul.f32 %v621, %v642
        %v645 = vmul.f32 %v623, %v642
        %v646 = vmul.f32 %v626, %v642
        %v647 = vmul.f32 %v628, %v642
        %v648 = vmul.f32 %v631, %v642
        %v649 = vmul.f32 %v633, %v642
        %v650 = vmul.f32 %v636, %v642
        %v651 = vmul.f32 %v638, %v642
        %v652 = vld [vmem:[%s3] sm:$0x1]
        %v654 = vperm.slane %v652, 0
        %v656 = vadd.f32 %v644, %v654
        %v657 = vadd.f32 %v645, %v654
        %v658 = vadd.f32 %v646, %v654
        %v659 = vadd.f32 %v647, %v654
        %v660 = vadd.f32 %v648, %v654
        %v661 = vadd.f32 %v649, %v654
        %v662 = vadd.f32 %v650, %v654
        %v663 = vadd.f32 %v651, %v654
        %v664 = vmax.f32 %v656, 0.0
        %v665 = vmax.f32 %v657, 0.0
        %v666 = vmax.f32 %v658, 0.0
        %v667 = vmax.f32 %v659, 0.0
        %v668 = vmax.f32 %v660, 0.0
        %v669 = vmax.f32 %v661, 0.0
        %v670 = vmax.f32 %v662, 0.0
        %v671 = vmax.f32 %v663, 0.0
        %s672 = scalar_lea.vmem [#allocation2], 24
        %673 = vst [vmem:[%s672 + $0x8] sm:$0xff] %v474
        %674 = vst [vmem:[%s672 + $0x20] sm:$0xff] %v475
        %675 = vst [vmem:[%s672 + $0x38] sm:$0xff] %v476
        %676 = vst [vmem:[%s672 + $0x50] sm:$0xff] %v477
        %677 = vst [vmem:[%s672 + $0x68] sm:$0xff] %v478
        %678 = vst [vmem:[%s672 + $0x80] sm:$0xff] %v479
        %679 = vst [vmem:[%s672 + $0x98] sm:$0xff] %v480
        %680 = vst [vmem:[%s672 + $0xb0] sm:$0xff] %v481
        %v681 = vld [vmem:[#allocation2 + $0x7] sm:$0xff]
        %v682 = vld [vmem:[#allocation2 + $0x1f] sm:$0xff]
        %v683 = vld [vmem:[#allocation2 + $0x37] sm:$0xff]
        %v684 = vld [vmem:[#allocation2 + $0x4f] sm:$0xff]
        %v685 = vld [vmem:[#allocation2 + $0x67] sm:$0xff]
        %v686 = vld [vmem:[#allocation2 + $0x7f] sm:$0xff]
        %v687 = vld [vmem:[#allocation2 + $0x97] sm:$0xff]
        %v688 = vld [vmem:[#allocation2 + $0xaf] sm:$0xff]
        %v689 = vadd.f32 %v681, 0.0
        %v690 = vadd.f32 %v682, 0.0
        %v691 = vadd.f32 %v683, 0.0
        %v692 = vadd.f32 %v684, 0.0
        %v693 = vadd.f32 %v685, 0.0
        %v694 = vadd.f32 %v686, 0.0
        %v695 = vadd.f32 %v687, 0.0
        %v696 = vadd.f32 %v688, 0.0
        %v697 = vld [vmem:[#allocation2 + $0x8] sm:$0xff]
        %v698 = vld [vmem:[#allocation2 + $0x20] sm:$0xff]
        %v699 = vld [vmem:[#allocation2 + $0x38] sm:$0xff]
        %v700 = vld [vmem:[#allocation2 + $0x50] sm:$0xff]
        %v701 = vld [vmem:[#allocation2 + $0x68] sm:$0xff]
        %v702 = vld [vmem:[#allocation2 + $0x80] sm:$0xff]
        %v703 = vld [vmem:[#allocation2 + $0x98] sm:$0xff]
        %v704 = vld [vmem:[#allocation2 + $0xb0] sm:$0xff]
        %v705 = vadd.f32 %v689, %v697
        %v706 = vadd.f32 %v690, %v698
        %v707 = vadd.f32 %v691, %v699
        %v708 = vadd.f32 %v692, %v700
        %v709 = vadd.f32 %v693, %v701
        %v710 = vadd.f32 %v694, %v702
        %v711 = vadd.f32 %v695, %v703
        %v712 = vadd.f32 %v696, %v704
        %v713 = vld [vmem:[#allocation2 + $0x9] sm:$0xff]
        %v714 = vld [vmem:[#allocation2 + $0x21] sm:$0xff]
        %v715 = vld [vmem:[#allocation2 + $0x39] sm:$0xff]
        %v716 = vld [vmem:[#allocation2 + $0x51] sm:$0xff]
        %v717 = vld [vmem:[#allocation2 + $0x69] sm:$0xff]
        %v718 = vld [vmem:[#allocation2 + $0x81] sm:$0xff]
        %v719 = vld [vmem:[#allocation2 + $0x99] sm:$0xff]
        %v720 = vld [vmem:[#allocation2 + $0xb1] sm:$0xff]
        %v721 = vadd.f32 %v705, %v713
        %v722 = vadd.f32 %v706, %v714
        %v723 = vadd.f32 %v707, %v715
        %v724 = vadd.f32 %v708, %v716
        %v725 = vadd.f32 %v709, %v717
        %v726 = vadd.f32 %v710, %v718
        %v727 = vadd.f32 %v711, %v719
        %v728 = vadd.f32 %v712, %v720
        %v729 = vld [vmem:[%s672 + $0x7] sm:$0xff]
        %v730 = vld [vmem:[%s672 + $0x1f] sm:$0xff]
        %v731 = vld [vmem:[%s672 + $0x37] sm:$0xff]
        %v732 = vld [vmem:[%s672 + $0x4f] sm:$0xff]
        %v733 = vld [vmem:[%s672 + $0x67] sm:$0xff]
        %v734 = vld [vmem:[%s672 + $0x7f] sm:$0xff]
        %v735 = vld [vmem:[%s672 + $0x97] sm:$0xff]
        %v736 = vld [vmem:[%s672 + $0xaf] sm:$0xff]
        %v737 = vadd.f32 %v721, %v729
        %v738 = vadd.f32 %v722, %v730
        %v739 = vadd.f32 %v723, %v731
        %v740 = vadd.f32 %v724, %v732
        %v741 = vadd.f32 %v725, %v733
        %v742 = vadd.f32 %v726, %v734
        %v743 = vadd.f32 %v727, %v735
        %v744 = vadd.f32 %v728, %v736
        %v745 = vld [vmem:[%s672 + $0x8] sm:$0xff]
        %v746 = vld [vmem:[%s672 + $0x20] sm:$0xff]
        %v747 = vld [vmem:[%s672 + $0x38] sm:$0xff]
        %v748 = vld [vmem:[%s672 + $0x50] sm:$0xff]
        %v749 = vld [vmem:[%s672 + $0x68] sm:$0xff]
        %v750 = vld [vmem:[%s672 + $0x80] sm:$0xff]
        %v751 = vld [vmem:[%s672 + $0x98] sm:$0xff]
        %v752 = vld [vmem:[%s672 + $0xb0] sm:$0xff]
        %v753 = vadd.f32 %v737, %v745
        %v754 = vadd.f32 %v738, %v746
        %v755 = vadd.f32 %v739, %v747
        %v756 = vadd.f32 %v740, %v748
        %v757 = vadd.f32 %v741, %v749
        %v758 = vadd.f32 %v742, %v750
        %v759 = vadd.f32 %v743, %v751
        %v760 = vadd.f32 %v744, %v752
        %v761 = vld [vmem:[%s672 + $0x9] sm:$0xff]
        %v762 = vld [vmem:[%s672 + $0x21] sm:$0xff]
        %v763 = vld [vmem:[%s672 + $0x39] sm:$0xff]
        %v764 = vld [vmem:[%s672 + $0x51] sm:$0xff]
        %v765 = vld [vmem:[%s672 + $0x69] sm:$0xff]
        %v766 = vld [vmem:[%s672 + $0x81] sm:$0xff]
        %v767 = vld [vmem:[%s672 + $0x99] sm:$0xff]
        %v768 = vld [vmem:[%s672 + $0xb1] sm:$0xff]
        %v769 = vadd.f32 %v753, %v761
        %v770 = vadd.f32 %v754, %v762
        %v771 = vadd.f32 %v755, %v763
        %v772 = vadd.f32 %v756, %v764
        %v773 = vadd.f32 %v757, %v765
        %v774 = vadd.f32 %v758, %v766
        %v775 = vadd.f32 %v759, %v767
        %v776 = vadd.f32 %v760, %v768
        %s777 = scalar_lea.vmem [#allocation2], 48
        %v778 = vld [vmem:[%s777 + $0x7] sm:$0xff]
        %v779 = vld [vmem:[%s777 + $0x1f] sm:$0xff]
        %v780 = vld [vmem:[%s777 + $0x37] sm:$0xff]
        %v781 = vld [vmem:[%s777 + $0x4f] sm:$0xff]
        %v782 = vld [vmem:[%s777 + $0x67] sm:$0xff]
        %v783 = vld [vmem:[%s777 + $0x7f] sm:$0xff]
        %v784 = vld [vmem:[%s777 + $0x97] sm:$0xff]
        %v785 = vld [vmem:[%s777 + $0xaf] sm:$0xff]
        %v786 = vadd.f32 %v769, %v778
        %v787 = vadd.f32 %v770, %v779
        %v788 = vadd.f32 %v771, %v780
        %v789 = vadd.f32 %v772, %v781
        %v790 = vadd.f32 %v773, %v782
        %v791 = vadd.f32 %v774, %v783
        %v792 = vadd.f32 %v775, %v784
        %v793 = vadd.f32 %v776, %v785
        %v794 = vld [vmem:[%s777 + $0x8] sm:$0xff]
        %v795 = vld [vmem:[%s777 + $0x20] sm:$0xff]
        %v796 = vld [vmem:[%s777 + $0x38] sm:$0xff]
        %v797 = vld [vmem:[%s777 + $0x50] sm:$0xff]
        %v798 = vld [vmem:[%s777 + $0x68] sm:$0xff]
        %v799 = vld [vmem:[%s777 + $0x80] sm:$0xff]
        %v800 = vld [vmem:[%s777 + $0x98] sm:$0xff]
        %v801 = vld [vmem:[%s777 + $0xb0] sm:$0xff]
        %v802 = vadd.f32 %v786, %v794
        %v803 = vadd.f32 %v787, %v795
        %v804 = vadd.f32 %v788, %v796
        %v805 = vadd.f32 %v789, %v797
        %v806 = vadd.f32 %v790, %v798
        %v807 = vadd.f32 %v791, %v799
        %v808 = vadd.f32 %v792, %v800
        %v809 = vadd.f32 %v793, %v801
        %v810 = vld [vmem:[%s777 + $0x9] sm:$0xff]
        %v811 = vld [vmem:[%s777 + $0x21] sm:$0xff]
        %v812 = vld [vmem:[%s777 + $0x39] sm:$0xff]
        %v813 = vld [vmem:[%s777 + $0x51] sm:$0xff]
        %v814 = vld [vmem:[%s777 + $0x69] sm:$0xff]
        %v815 = vld [vmem:[%s777 + $0x81] sm:$0xff]
        %v816 = vld [vmem:[%s777 + $0x99] sm:$0xff]
        %v817 = vld [vmem:[%s777 + $0xb1] sm:$0xff]
        %v818 = vadd.f32 %v802, %v810
        %v819 = vadd.f32 %v803, %v811
        %v820 = vadd.f32 %v804, %v812
        %v821 = vadd.f32 %v805, %v813
        %v822 = vadd.f32 %v806, %v814
        %v823 = vadd.f32 %v807, %v815
        %v824 = vadd.f32 %v808, %v816
        %v825 = vadd.f32 %v809, %v817
        %v826 = vpack.c.bf16 %v819, %v818
        %v827 = vpack.c.bf16 %v821, %v820
        %v828 = vpack.c.bf16 %v823, %v822
        %v829 = vpack.c.bf16 %v825, %v824
        %v830 = vld [vmem:[%s4] sm:$0xf]
        %v831 = vld [vmem:[%s4 + $0x4] sm:$0xf]
        %v832 = vld [vmem:[%s4 + $0x8] sm:$0xf]
        %v833 = vld [vmem:[%s4 + $0xc] sm:$0xf]
        %v834 = vld [vmem:[%s4 + $0x10] sm:$0xf]
        %v835 = vld [vmem:[%s4 + $0x14] sm:$0xf]
        %v836 = vld [vmem:[%s4 + $0x18] sm:$0xf]
        %v837 = vld [vmem:[%s4 + $0x1c] sm:$0xf]
        %v838 = vld [vmem:[%s4 + $0x20] sm:$0xf]
        %v839 = vld [vmem:[%s4 + $0x24] sm:$0xf]
        %v840 = vld [vmem:[%s4 + $0x28] sm:$0xf]
        %v841 = vld [vmem:[%s4 + $0x2c] sm:$0xf]
        %v842 = vld [vmem:[%s4 + $0x30] sm:$0xf]
        %v843 = vld [vmem:[%s4 + $0x34] sm:$0xf]
        %v844 = vld [vmem:[%s4 + $0x38] sm:$0xf]
        %v845 = vld [vmem:[%s4 + $0x3c] sm:$0xf]
        %v862 = vunpack.c.l.b16 %v830
        %v863 = vunpack.c.l.b16 %v831
        %v864 = vunpack.c.l.b16 %v832
        %v865 = vunpack.c.l.b16 %v833
        %v866 = vunpack.c.l.b16 %v834
        %v867 = vunpack.c.l.b16 %v835
        %v868 = vunpack.c.l.b16 %v836
        %v869 = vunpack.c.l.b16 %v837
        %v870 = vunpack.c.l.b16 %v838
        %v871 = vunpack.c.l.b16 %v839
        %v872 = vunpack.c.l.b16 %v840
        %v873 = vunpack.c.l.b16 %v841
        %v874 = vunpack.c.l.b16 %v842
        %v875 = vunpack.c.l.b16 %v843
        %v876 = vunpack.c.l.b16 %v844
        %v877 = vunpack.c.l.b16 %v845
        %v878 = vpack.c.b16 %v863, %v862
        %v879 = vpack.c.b16 %v865, %v864
        %v880 = vpack.c.b16 %v867, %v866
        %v881 = vpack.c.b16 %v869, %v868
        %v882 = vpack.c.b16 %v871, %v870
        %v883 = vpack.c.b16 %v873, %v872
        %v884 = vpack.c.b16 %v875, %v874
        %v885 = vpack.c.b16 %v877, %v876
        %894 = vmatpush.bf16.msra.mxu0 %v885
        %895 = vmatpush.bf16.msra.mxu0 %v884
        %896 = vmatpush.bf16.msra.mxu0 %v883
        %897 = vmatpush.bf16.msra.mxu0 %v882
        %898 = vmatpush.bf16.msra.mxu0 %v881
        %899 = vmatpush.bf16.msra.mxu0 %v880
        %900 = vmatpush.bf16.msra.mxu0 %v879
        %901 = vmatpush.bf16.msra.mxu0 %v878
        %902 = vmatmul.bf16.gmra.mxu0 %v826
        %v903 = vpop.f32.mrf.mxu0
        %v904 = vadd.f32 0.0, %v903
        %v905 = vpop.f32.mrf.mxu0
        %v906 = vadd.f32 0.0, %v905
        %907 = vmatmul.bf16.gmra.mxu0 %v827
        %v908 = vpop.f32.mrf.mxu0
        %v909 = vadd.f32 0.0, %v908
        %v910 = vpop.f32.mrf.mxu0
        %v911 = vadd.f32 0.0, %v910
        %912 = vmatmul.bf16.gmra.mxu0 %v828
        %v913 = vpop.f32.mrf.mxu0
        %v914 = vadd.f32 0.0, %v913
        %v915 = vpop.f32.mrf.mxu0
        %v916 = vadd.f32 0.0, %v915
        %917 = vmatmul.bf16.gmra.mxu0 %v829
        %v918 = vpop.f32.mrf.mxu0
        %v919 = vadd.f32 0.0, %v918
        %v920 = vpop.f32.mrf.mxu0
        %v921 = vadd.f32 0.0, %v920
        %922 = vdwg.mxu0
        %v923 = vadd.f32 %v592, %v904
        %v924 = vadd.f32 %v594, %v906
        %v925 = vadd.f32 %v597, %v909
        %v926 = vadd.f32 %v599, %v911
        %v927 = vadd.f32 %v602, %v914
        %v928 = vadd.f32 %v604, %v916
        %v929 = vadd.f32 %v607, %v919
        %v930 = vadd.f32 %v609, %v921
        %s931 = scalar_lea.vmem [#allocation3], 24
        %932 = vst.msk [vmem:[%s931 + $0x8] sm:$0xff] %vm443, %v664
        %933 = vst.msk [vmem:[%s931 + $0x20] sm:$0xff] %vm443, %v665
        %934 = vst.msk [vmem:[%s931 + $0x38] sm:$0xff] %vm443, %v666
        %935 = vst.msk [vmem:[%s931 + $0x50] sm:$0xff] %vm443, %v667
        %936 = vst.msk [vmem:[%s931 + $0x68] sm:$0xff] %vm443, %v668
        %937 = vst.msk [vmem:[%s931 + $0x80] sm:$0xff] %vm443, %v669
        %938 = vst.msk [vmem:[%s931 + $0x98] sm:$0xff] %vm443, %v670
        %939 = vst.msk [vmem:[%s931 + $0xb0] sm:$0xff] %vm443, %v671
        %v940 = vld [vmem:[#allocation3 + $0x7] sm:$0xff]
        %v941 = vld [vmem:[#allocation3 + $0x1f] sm:$0xff]
        %v942 = vld [vmem:[#allocation3 + $0x37] sm:$0xff]
        %v943 = vld [vmem:[#allocation3 + $0x4f] sm:$0xff]
        %v944 = vld [vmem:[#allocation3 + $0x67] sm:$0xff]
        %v945 = vld [vmem:[#allocation3 + $0x7f] sm:$0xff]
        %v946 = vld [vmem:[#allocation3 + $0x97] sm:$0xff]
        %v947 = vld [vmem:[#allocation3 + $0xaf] sm:$0xff]
        %948 = vst.msk [vmem:[#allocation4] sm:$0xff] %vm443, %v940
        %949 = vst.msk [vmem:[#allocation4 + $0x18] sm:$0xff] %vm443, %v941
        %950 = vst.msk [vmem:[#allocation4 + $0x30] sm:$0xff] %vm443, %v942
        %951 = vst.msk [vmem:[#allocation4 + $0x48] sm:$0xff] %vm443, %v943
        %952 = vst.msk [vmem:[#allocation4 + $0x60] sm:$0xff] %vm443, %v944
        %953 = vst.msk [vmem:[#allocation4 + $0x78] sm:$0xff] %vm443, %v945
        %954 = vst.msk [vmem:[#allocation4 + $0x90] sm:$0xff] %vm443, %v946
        %955 = vst.msk [vmem:[#allocation4 + $0xa8] sm:$0xff] %vm443, %v947
        %v956 = vld [vmem:[#allocation3 + $0x8] sm:$0xff]
        %v957 = vld [vmem:[#allocation3 + $0x20] sm:$0xff]
        %v958 = vld [vmem:[#allocation3 + $0x38] sm:$0xff]
        %v959 = vld [vmem:[#allocation3 + $0x50] sm:$0xff]
        %v960 = vld [vmem:[#allocation3 + $0x68] sm:$0xff]
        %v961 = vld [vmem:[#allocation3 + $0x80] sm:$0xff]
        %v962 = vld [vmem:[#allocation3 + $0x98] sm:$0xff]
        %v963 = vld [vmem:[#allocation3 + $0xb0] sm:$0xff]
        %972 = vrot.lane.b32.xlu0 %v956, 32
        %v973 = vpop.permute.xlu0 %972
        %974 = vrot.lane.b32.xlu0 %v957, 32
        %v975 = vpop.permute.xlu0 %974
        %976 = vrot.lane.b32.xlu0 %v958, 32
        %v977 = vpop.permute.xlu0 %976
        %978 = vrot.lane.b32.xlu0 %v959, 32
        %v979 = vpop.permute.xlu0 %978
        %980 = vrot.lane.b32.xlu0 %v960, 32
        %v981 = vpop.permute.xlu0 %980
        %982 = vrot.lane.b32.xlu0 %v961, 32
        %v983 = vpop.permute.xlu0 %982
        %984 = vrot.lane.b32.xlu0 %v962, 32
        %v985 = vpop.permute.xlu0 %984
        %986 = vrot.lane.b32.xlu0 %v963, 32
        %v987 = vpop.permute.xlu0 %986
        %vm996 = vcmask 523520
        %997 = vst.msk [vmem:[#allocation4] sm:$0xff] %vm996, %v973
        %998 = vst.msk [vmem:[#allocation4 + $0x18] sm:$0xff] %vm996, %v975
        %999 = vst.msk [vmem:[#allocation4 + $0x30] sm:$0xff] %vm996, %v977
        %1000 = vst.msk [vmem:[#allocation4 + $0x48] sm:$0xff] %vm996, %v979
        %1001 = vst.msk [vmem:[#allocation4 + $0x60] sm:$0xff] %vm996, %v981
        %1002 = vst.msk [vmem:[#allocation4 + $0x78] sm:$0xff] %vm996, %v983
        %1003 = vst.msk [vmem:[#allocation4 + $0x90] sm:$0xff] %vm996, %v985
        %1004 = vst.msk [vmem:[#allocation4 + $0xa8] sm:$0xff] %vm996, %v987
        %v1005 = vld [vmem:[#allocation3 + $0x9] sm:$0xff]
        %v1006 = vld [vmem:[#allocation3 + $0x21] sm:$0xff]
        %v1007 = vld [vmem:[#allocation3 + $0x39] sm:$0xff]
        %v1008 = vld [vmem:[#allocation3 + $0x51] sm:$0xff]
        %v1009 = vld [vmem:[#allocation3 + $0x69] sm:$0xff]
        %v1010 = vld [vmem:[#allocation3 + $0x81] sm:$0xff]
        %v1011 = vld [vmem:[#allocation3 + $0x99] sm:$0xff]
        %v1012 = vld [vmem:[#allocation3 + $0xb1] sm:$0xff]
        %1021 = vrot.lane.b32.xlu0 %v1005, 64
        %v1022 = vpop.permute.xlu0 %1021
        %1023 = vrot.lane.b32.xlu0 %v1006, 64
        %v1024 = vpop.permute.xlu0 %1023
        %1025 = vrot.lane.b32.xlu0 %v1007, 64
        %v1026 = vpop.permute.xlu0 %1025
        %1027 = vrot.lane.b32.xlu0 %v1008, 64
        %v1028 = vpop.permute.xlu0 %1027
        %1029 = vrot.lane.b32.xlu0 %v1009, 64
        %v1030 = vpop.permute.xlu0 %1029
        %1031 = vrot.lane.b32.xlu0 %v1010, 64
        %v1032 = vpop.permute.xlu0 %1031
        %1033 = vrot.lane.b32.xlu0 %v1011, 64
        %v1034 = vpop.permute.xlu0 %1033
        %1035 = vrot.lane.b32.xlu0 %v1012, 64
        %v1036 = vpop.permute.xlu0 %1035
        %vm1045 = vcmask 785920
        %1046 = vst.msk [vmem:[#allocation4] sm:$0xff] %vm1045, %v1022
        %1047 = vst.msk [vmem:[#allocation4 + $0x18] sm:$0xff] %vm1045, %v1024
        %1048 = vst.msk [vmem:[#allocation4 + $0x30] sm:$0xff] %vm1045, %v1026
        %1049 = vst.msk [vmem:[#allocation4 + $0x48] sm:$0xff] %vm1045, %v1028
        %1050 = vst.msk [vmem:[#allocation4 + $0x60] sm:$0xff] %vm1045, %v1030
        %1051 = vst.msk [vmem:[#allocation4 + $0x78] sm:$0xff] %vm1045, %v1032
        %1052 = vst.msk [vmem:[#allocation4 + $0x90] sm:$0xff] %vm1045, %v1034
        %1053 = vst.msk [vmem:[#allocation4 + $0xa8] sm:$0xff] %vm1045, %v1036
        %v1054 = vld [vmem:[%s931 + $0x7] sm:$0xff]
        %v1055 = vld [vmem:[%s931 + $0x1f] sm:$0xff]
        %v1056 = vld [vmem:[%s931 + $0x37] sm:$0xff]
        %v1057 = vld [vmem:[%s931 + $0x4f] sm:$0xff]
        %v1058 = vld [vmem:[%s931 + $0x67] sm:$0xff]
        %v1059 = vld [vmem:[%s931 + $0x7f] sm:$0xff]
        %v1060 = vld [vmem:[%s931 + $0x97] sm:$0xff]
        %v1061 = vld [vmem:[%s931 + $0xaf] sm:$0xff]
        %1070 = vrot.lane.b32.xlu0 %v1054, 96
        %v1071 = vpop.permute.xlu0 %1070
        %1072 = vrot.lane.b32.xlu0 %v1055, 96
        %v1073 = vpop.permute.xlu0 %1072
        %1074 = vrot.lane.b32.xlu0 %v1056, 96
        %v1075 = vpop.permute.xlu0 %1074
        %1076 = vrot.lane.b32.xlu0 %v1057, 96
        %v1077 = vpop.permute.xlu0 %1076
        %1078 = vrot.lane.b32.xlu0 %v1058, 96
        %v1079 = vpop.permute.xlu0 %1078
        %1080 = vrot.lane.b32.xlu0 %v1059, 96
        %v1081 = vpop.permute.xlu0 %1080
        %1082 = vrot.lane.b32.xlu0 %v1060, 96
        %v1083 = vpop.permute.xlu0 %1082
        %1084 = vrot.lane.b32.xlu0 %v1061, 96
        %v1085 = vpop.permute.xlu0 %1084
        %vm1094 = vcmask 1048320
        %1095 = vst.msk [vmem:[#allocation4] sm:$0xff] %vm1094, %v1071
        %1096 = vst.msk [vmem:[#allocation4 + $0x18] sm:$0xff] %vm1094, %v1073
        %1097 = vst.msk [vmem:[#allocation4 + $0x30] sm:$0xff] %vm1094, %v1075
        %1098 = vst.msk [vmem:[#allocation4 + $0x48] sm:$0xff] %vm1094, %v1077
        %1099 = vst.msk [vmem:[#allocation4 + $0x60] sm:$0xff] %vm1094, %v1079
        %1100 = vst.msk [vmem:[#allocation4 + $0x78] sm:$0xff] %vm1094, %v1081
        %1101 = vst.msk [vmem:[#allocation4 + $0x90] sm:$0xff] %vm1094, %v1083
        %1102 = vst.msk [vmem:[#allocation4 + $0xa8] sm:$0xff] %vm1094, %v1085
        %v1103 = vld [vmem:[%s931 + $0x8] sm:$0xff]
        %v1104 = vld [vmem:[%s931 + $0x20] sm:$0xff]
        %v1105 = vld [vmem:[%s931 + $0x38] sm:$0xff]
        %v1106 = vld [vmem:[%s931 + $0x50] sm:$0xff]
        %v1107 = vld [vmem:[%s931 + $0x68] sm:$0xff]
        %v1108 = vld [vmem:[%s931 + $0x80] sm:$0xff]
        %v1109 = vld [vmem:[%s931 + $0x98] sm:$0xff]
        %v1110 = vld [vmem:[%s931 + $0xb0] sm:$0xff]
        %1111 = vst.msk [vmem:[#allocation4 + $0x8] sm:$0xff] %vm443, %v1103
        %1112 = vst.msk [vmem:[#allocation4 + $0x20] sm:$0xff] %vm443, %v1104
        %1113 = vst.msk [vmem:[#allocation4 + $0x38] sm:$0xff] %vm443, %v1105
        %1114 = vst.msk [vmem:[#allocation4 + $0x50] sm:$0xff] %vm443, %v1106
        %1115 = vst.msk [vmem:[#allocation4 + $0x68] sm:$0xff] %vm443, %v1107
        %1116 = vst.msk [vmem:[#allocation4 + $0x80] sm:$0xff] %vm443, %v1108
        %1117 = vst.msk [vmem:[#allocation4 + $0x98] sm:$0xff] %vm443, %v1109
        %1118 = vst.msk [vmem:[#allocation4 + $0xb0] sm:$0xff] %vm443, %v1110
        %v1119 = vld [vmem:[%s931 + $0x9] sm:$0xff]
        %v1120 = vld [vmem:[%s931 + $0x21] sm:$0xff]
        %v1121 = vld [vmem:[%s931 + $0x39] sm:$0xff]
        %v1122 = vld [vmem:[%s931 + $0x51] sm:$0xff]
        %v1123 = vld [vmem:[%s931 + $0x69] sm:$0xff]
        %v1124 = vld [vmem:[%s931 + $0x81] sm:$0xff]
        %v1125 = vld [vmem:[%s931 + $0x99] sm:$0xff]
        %v1126 = vld [vmem:[%s931 + $0xb1] sm:$0xff]
        %1135 = vrot.lane.b32.xlu0 %v1119, 32
        %v1136 = vpop.permute.xlu0 %1135
        %1137 = vrot.lane.b32.xlu0 %v1120, 32
        %v1138 = vpop.permute.xlu0 %1137
        %1139 = vrot.lane.b32.xlu0 %v1121, 32
        %v1140 = vpop.permute.xlu0 %1139
        %1141 = vrot.lane.b32.xlu0 %v1122, 32
        %v1142 = vpop.permute.xlu0 %1141
        %1143 = vrot.lane.b32.xlu0 %v1123, 32
        %v1144 = vpop.permute.xlu0 %1143
        %1145 = vrot.lane.b32.xlu0 %v1124, 32
        %v1146 = vpop.permute.xlu0 %1145
        %1147 = vrot.lane.b32.xlu0 %v1125, 32
        %v1148 = vpop.permute.xlu0 %1147
        %1149 = vrot.lane.b32.xlu0 %v1126, 32
        %v1150 = vpop.permute.xlu0 %1149
        %1159 = vst.msk [vmem:[#allocation4 + $0x8] sm:$0xff] %vm996, %v1136
        %1160 = vst.msk [vmem:[#allocation4 + $0x20] sm:$0xff] %vm996, %v1138
        %1161 = vst.msk [vmem:[#allocation4 + $0x38] sm:$0xff] %vm996, %v1140
        %1162 = vst.msk [vmem:[#allocation4 + $0x50] sm:$0xff] %vm996, %v1142
        %1163 = vst.msk [vmem:[#allocation4 + $0x68] sm:$0xff] %vm996, %v1144
        %1164 = vst.msk [vmem:[#allocation4 + $0x80] sm:$0xff] %vm996, %v1146
        %1165 = vst.msk [vmem:[#allocation4 + $0x98] sm:$0xff] %vm996, %v1148
        %1166 = vst.msk [vmem:[#allocation4 + $0xb0] sm:$0xff] %vm996, %v1150
        %s1167 = scalar_lea.vmem [#allocation3], 48
        %v1168 = vld [vmem:[%s1167 + $0x7] sm:$0xff]
        %v1169 = vld [vmem:[%s1167 + $0x1f] sm:$0xff]
        %v1170 = vld [vmem:[%s1167 + $0x37] sm:$0xff]
        %v1171 = vld [vmem:[%s1167 + $0x4f] sm:$0xff]
        %v1172 = vld [vmem:[%s1167 + $0x67] sm:$0xff]
        %v1173 = vld [vmem:[%s1167 + $0x7f] sm:$0xff]
        %v1174 = vld [vmem:[%s1167 + $0x97] sm:$0xff]
        %v1175 = vld [vmem:[%s1167 + $0xaf] sm:$0xff]
        %1184 = vrot.lane.b32.xlu0 %v1168, 64
        %v1185 = vpop.permute.xlu0 %1184
        %1186 = vrot.lane.b32.xlu0 %v1169, 64
        %v1187 = vpop.permute.xlu0 %1186
        %1188 = vrot.lane.b32.xlu0 %v1170, 64
        %v1189 = vpop.permute.xlu0 %1188
        %1190 = vrot.lane.b32.xlu0 %v1171, 64
        %v1191 = vpop.permute.xlu0 %1190
        %1192 = vrot.lane.b32.xlu0 %v1172, 64
        %v1193 = vpop.permute.xlu0 %1192
        %1194 = vrot.lane.b32.xlu0 %v1173, 64
        %v1195 = vpop.permute.xlu0 %1194
        %1196 = vrot.lane.b32.xlu0 %v1174, 64
        %v1197 = vpop.permute.xlu0 %1196
        %1198 = vrot.lane.b32.xlu0 %v1175, 64
        %v1199 = vpop.permute.xlu0 %1198
        %1208 = vst.msk [vmem:[#allocation4 + $0x8] sm:$0xff] %vm1045, %v1185
        %1209 = vst.msk [vmem:[#allocation4 + $0x20] sm:$0xff] %vm1045, %v1187
        %1210 = vst.msk [vmem:[#allocation4 + $0x38] sm:$0xff] %vm1045, %v1189
        %1211 = vst.msk [vmem:[#allocation4 + $0x50] sm:$0xff] %vm1045, %v1191
        %1212 = vst.msk [vmem:[#allocation4 + $0x68] sm:$0xff] %vm1045, %v1193
        %1213 = vst.msk [vmem:[#allocation4 + $0x80] sm:$0xff] %vm1045, %v1195
        %1214 = vst.msk [vmem:[#allocation4 + $0x98] sm:$0xff] %vm1045, %v1197
        %1215 = vst.msk [vmem:[#allocation4 + $0xb0] sm:$0xff] %vm1045, %v1199
        %v1216 = vld [vmem:[%s1167 + $0x8] sm:$0xff]
        %v1217 = vld [vmem:[%s1167 + $0x20] sm:$0xff]
        %v1218 = vld [vmem:[%s1167 + $0x38] sm:$0xff]
        %v1219 = vld [vmem:[%s1167 + $0x50] sm:$0xff]
        %v1220 = vld [vmem:[%s1167 + $0x68] sm:$0xff]
        %v1221 = vld [vmem:[%s1167 + $0x80] sm:$0xff]
        %v1222 = vld [vmem:[%s1167 + $0x98] sm:$0xff]
        %v1223 = vld [vmem:[%s1167 + $0xb0] sm:$0xff]
        %1232 = vrot.lane.b32.xlu0 %v1216, 96
        %v1233 = vpop.permute.xlu0 %1232
        %1234 = vrot.lane.b32.xlu0 %v1217, 96
        %v1235 = vpop.permute.xlu0 %1234
        %1236 = vrot.lane.b32.xlu0 %v1218, 96
        %v1237 = vpop.permute.xlu0 %1236
        %1238 = vrot.lane.b32.xlu0 %v1219, 96
        %v1239 = vpop.permute.xlu0 %1238
        %1240 = vrot.lane.b32.xlu0 %v1220, 96
        %v1241 = vpop.permute.xlu0 %1240
        %1242 = vrot.lane.b32.xlu0 %v1221, 96
        %v1243 = vpop.permute.xlu0 %1242
        %1244 = vrot.lane.b32.xlu0 %v1222, 96
        %v1245 = vpop.permute.xlu0 %1244
        %1246 = vrot.lane.b32.xlu0 %v1223, 96
        %v1247 = vpop.permute.xlu0 %1246
        %1256 = vst.msk [vmem:[#allocation4 + $0x8] sm:$0xff] %vm1094, %v1233
        %1257 = vst.msk [vmem:[#allocation4 + $0x20] sm:$0xff] %vm1094, %v1235
        %1258 = vst.msk [vmem:[#allocation4 + $0x38] sm:$0xff] %vm1094, %v1237
        %1259 = vst.msk [vmem:[#allocation4 + $0x50] sm:$0xff] %vm1094, %v1239
        %1260 = vst.msk [vmem:[#allocation4 + $0x68] sm:$0xff] %vm1094, %v1241
        %1261 = vst.msk [vmem:[#allocation4 + $0x80] sm:$0xff] %vm1094, %v1243
        %1262 = vst.msk [vmem:[#allocation4 + $0x98] sm:$0xff] %vm1094, %v1245
        %1263 = vst.msk [vmem:[#allocation4 + $0xb0] sm:$0xff] %vm1094, %v1247
        %v1264 = vld [vmem:[%s1167 + $0x9] sm:$0xff]
        %v1265 = vld [vmem:[%s1167 + $0x21] sm:$0xff]
        %v1266 = vld [vmem:[%s1167 + $0x39] sm:$0xff]
        %v1267 = vld [vmem:[%s1167 + $0x51] sm:$0xff]
        %v1268 = vld [vmem:[%s1167 + $0x69] sm:$0xff]
        %v1269 = vld [vmem:[%s1167 + $0x81] sm:$0xff]
        %v1270 = vld [vmem:[%s1167 + $0x99] sm:$0xff]
        %v1271 = vld [vmem:[%s1167 + $0xb1] sm:$0xff]
        %1272 = vst.msk [vmem:[#allocation4 + $0x10] sm:$0xff] %vm443, %v1264
        %1273 = vst.msk [vmem:[#allocation4 + $0x28] sm:$0xff] %vm443, %v1265
        %1274 = vst.msk [vmem:[#allocation4 + $0x40] sm:$0xff] %vm443, %v1266
        %1275 = vst.msk [vmem:[#allocation4 + $0x58] sm:$0xff] %vm443, %v1267
        %1276 = vst.msk [vmem:[#allocation4 + $0x70] sm:$0xff] %vm443, %v1268
        %1277 = vst.msk [vmem:[#allocation4 + $0x88] sm:$0xff] %vm443, %v1269
        %1278 = vst.msk [vmem:[#allocation4 + $0xa0] sm:$0xff] %vm443, %v1270
        %1279 = vst.msk [vmem:[#allocation4 + $0xb8] sm:$0xff] %vm443, %v1271
        %v1280 = vld [vmem:[#allocation4] sm:$0xff]
        %v1281 = vld [vmem:[#allocation4 + $0x8] sm:$0xff]
        %v1282 = vld [vmem:[#allocation4 + $0x10] sm:$0xff]
        %v1283 = vld [vmem:[#allocation4 + $0x18] sm:$0xff]
        %v1284 = vld [vmem:[#allocation4 + $0x20] sm:$0xff]
        %v1285 = vld [vmem:[#allocation4 + $0x28] sm:$0xff]
        %v1286 = vld [vmem:[#allocation4 + $0x30] sm:$0xff]
        %v1287 = vld [vmem:[#allocation4 + $0x38] sm:$0xff]
        %v1288 = vld [vmem:[#allocation4 + $0x40] sm:$0xff]
        %v1289 = vld [vmem:[#allocation4 + $0x48] sm:$0xff]
        %v1290 = vld [vmem:[#allocation4 + $0x50] sm:$0xff]
        %v1291 = vld [vmem:[#allocation4 + $0x58] sm:$0xff]
        %v1292 = vld [vmem:[#allocation4 + $0x60] sm:$0xff]
        %v1293 = vld [vmem:[#allocation4 + $0x68] sm:$0xff]
        %v1294 = vld [vmem:[#allocation4 + $0x70] sm:$0xff]
        %v1295 = vld [vmem:[#allocation4 + $0x78] sm:$0xff]
        %v1296 = vld [vmem:[#allocation4 + $0x80] sm:$0xff]
        %v1297 = vld [vmem:[#allocation4 + $0x88] sm:$0xff]
        %v1298 = vld [vmem:[#allocation4 + $0x90] sm:$0xff]
        %v1299 = vld [vmem:[#allocation4 + $0x98] sm:$0xff]
        %v1300 = vld [vmem:[#allocation4 + $0xa0] sm:$0xff]
        %v1301 = vld [vmem:[#allocation4 + $0xa8] sm:$0xff]
        %v1302 = vld [vmem:[#allocation4 + $0xb0] sm:$0xff]
        %v1303 = vld [vmem:[#allocation4 + $0xb8] sm:$0xff]
        %v1304 = vpack.c.bf16 %v1283, %v1280
        %v1305 = vpack.c.bf16 %v1284, %v1281
        %v1306 = vpack.c.bf16 %v1285, %v1282
        %v1307 = vpack.c.bf16 %v1289, %v1286
        %v1308 = vpack.c.bf16 %v1290, %v1287
        %v1309 = vpack.c.bf16 %v1291, %v1288
        %v1310 = vpack.c.bf16 %v1295, %v1292
        %v1311 = vpack.c.bf16 %v1296, %v1293
        %v1312 = vpack.c.bf16 %v1297, %v1294
        %v1313 = vpack.c.bf16 %v1301, %v1298
        %v1314 = vpack.c.bf16 %v1302, %v1299
        %v1315 = vpack.c.bf16 %v1303, %v1300
        %v1316 = vld [vmem:[%s5] sm:$0xf]
        %v1317 = vld [vmem:[%s5 + $0x4] sm:$0xf]
        %v1318 = vld [vmem:[%s5 + $0x8] sm:$0xf]
        %v1319 = vld [vmem:[%s5 + $0xc] sm:$0xf]
        %v1320 = vld [vmem:[%s5 + $0x10] sm:$0xf]
        %v1321 = vld [vmem:[%s5 + $0x14] sm:$0xf]
        %v1322 = vld [vmem:[%s5 + $0x18] sm:$0xf]
        %v1323 = vld [vmem:[%s5 + $0x1c] sm:$0xf]
        %v1324 = vld [vmem:[%s5 + $0x20] sm:$0xf]
        %v1325 = vld [vmem:[%s5 + $0x24] sm:$0xf]
        %v1326 = vld [vmem:[%s5 + $0x28] sm:$0xf]
        %v1327 = vld [vmem:[%s5 + $0x2c] sm:$0xf]
        %v1328 = vld [vmem:[%s5 + $0x30] sm:$0xf]
        %v1329 = vld [vmem:[%s5 + $0x34] sm:$0xf]
        %v1330 = vld [vmem:[%s5 + $0x38] sm:$0xf]
        %v1331 = vld [vmem:[%s5 + $0x3c] sm:$0xf]
        %v1332 = vld [vmem:[%s5 + $0x40] sm:$0xf]
        %v1333 = vld [vmem:[%s5 + $0x44] sm:$0xf]
        %v1334 = vld [vmem:[%s5 + $0x48] sm:$0xf]
        %v1335 = vld [vmem:[%s5 + $0x4c] sm:$0xf]
        %v1336 = vld [vmem:[%s5 + $0x50] sm:$0xf]
        %v1337 = vld [vmem:[%s5 + $0x54] sm:$0xf]
        %v1338 = vld [vmem:[%s5 + $0x58] sm:$0xf]
        %v1339 = vld [vmem:[%s5 + $0x5c] sm:$0xf]
        %v1340 = vld [vmem:[%s5 + $0x60] sm:$0xf]
        %v1341 = vld [vmem:[%s5 + $0x64] sm:$0xf]
        %v1342 = vld [vmem:[%s5 + $0x68] sm:$0xf]
        %v1343 = vld [vmem:[%s5 + $0x6c] sm:$0xf]
        %v1344 = vld [vmem:[%s5 + $0x70] sm:$0xf]
        %v1345 = vld [vmem:[%s5 + $0x74] sm:$0xf]
        %v1346 = vld [vmem:[%s5 + $0x78] sm:$0xf]
        %v1347 = vld [vmem:[%s5 + $0x7c] sm:$0xf]
        %v1348 = vld [vmem:[%s5 + $0x80] sm:$0xf]
        %v1349 = vld [vmem:[%s5 + $0x84] sm:$0xf]
        %v1350 = vld [vmem:[%s5 + $0x88] sm:$0xf]
        %v1351 = vld [vmem:[%s5 + $0x8c] sm:$0xf]
        %v1388 = vunpack.c.l.b16 %v1316
        %v1389 = vunpack.c.l.b16 %v1317
        %v1390 = vunpack.c.l.b16 %v1318
        %v1391 = vunpack.c.l.b16 %v1319
        %v1392 = vunpack.c.l.b16 %v1320
        %v1393 = vunpack.c.l.b16 %v1321
        %v1394 = vunpack.c.l.b16 %v1322
        %v1395 = vunpack.c.l.b16 %v1323
        %v1396 = vunpack.c.l.b16 %v1324
        %v1397 = vunpack.c.l.b16 %v1325
        %v1398 = vunpack.c.l.b16 %v1326
        %v1399 = vunpack.c.l.b16 %v1327
        %v1400 = vunpack.c.l.b16 %v1328
        %v1401 = vunpack.c.l.b16 %v1329
        %v1402 = vunpack.c.l.b16 %v1330
        %v1403 = vunpack.c.l.b16 %v1331
        %v1404 = vunpack.c.l.b16 %v1332
        %v1405 = vunpack.c.l.b16 %v1333
        %v1406 = vunpack.c.l.b16 %v1334
        %v1407 = vunpack.c.l.b16 %v1335
        %v1408 = vunpack.c.l.b16 %v1336
        %v1409 = vunpack.c.l.b16 %v1337
        %v1410 = vunpack.c.l.b16 %v1338
        %v1411 = vunpack.c.l.b16 %v1339
        %v1412 = vunpack.c.l.b16 %v1340
        %v1413 = vunpack.c.l.b16 %v1341
        %v1414 = vunpack.c.l.b16 %v1342
        %v1415 = vunpack.c.l.b16 %v1343
        %v1416 = vunpack.c.l.b16 %v1344
        %v1417 = vunpack.c.l.b16 %v1345
        %v1418 = vunpack.c.l.b16 %v1346
        %v1419 = vunpack.c.l.b16 %v1347
        %v1420 = vunpack.c.l.b16 %v1348
        %v1421 = vunpack.c.l.b16 %v1349
        %v1422 = vunpack.c.l.b16 %v1350
        %v1423 = vunpack.c.l.b16 %v1351
        %v1424 = vpack.c.b16 %v1389, %v1388
        %v1425 = vpack.c.b16 %v1391, %v1390
        %v1426 = vpack.c.b16 %v1393, %v1392
        %v1427 = vpack.c.b16 %v1395, %v1394
        %v1428 = vpack.c.b16 %v1397, %v1396
        %v1429 = vpack.c.b16 %v1399, %v1398
        %v1430 = vpack.c.b16 %v1401, %v1400
        %v1431 = vpack.c.b16 %v1403, %v1402
        %v1432 = vpack.c.b16 %v1405, %v1404
        %v1433 = vpack.c.b16 %v1407, %v1406
        %v1434 = vpack.c.b16 %v1409, %v1408
        %v1435 = vpack.c.b16 %v1411, %v1410
        %v1436 = vpack.c.b16 %v1413, %v1412
        %v1437 = vpack.c.b16 %v1415, %v1414
        %v1438 = vpack.c.b16 %v1417, %v1416
        %v1439 = vpack.c.b16 %v1419, %v1418
        %v1440 = vpack.c.b16 %v1421, %v1420
        %v1441 = vpack.c.b16 %v1423, %v1422
        %v1461 = vsel %vm443, %v1306, 0
        %v1464 = vsel %vm443, %v1309, 0
        %v1467 = vsel %vm443, %v1312, 0
        %v1470 = vsel %vm443, %v1315, 0
        %1472 = vmatpush.bf16.msra.mxu0 %v1431
        %1473 = vmatpush.bf16.msra.mxu0 %v1430
        %1474 = vmatpush.bf16.msra.mxu0 %v1429
        %1475 = vmatpush.bf16.msra.mxu0 %v1428
        %1476 = vmatpush.bf16.msra.mxu0 %v1427
        %1477 = vmatpush.bf16.msra.mxu0 %v1426
        %1478 = vmatpush.bf16.msra.mxu0 %v1425
        %1479 = vmatpush.bf16.msra.mxu0 %v1424
        %1480 = vmatmul.bf16.gmra.mxu0 %v1304
        %v1481 = vpop.f32.mrf.mxu0
        %v1482 = vadd.f32 0.0, %v1481
        %v1483 = vpop.f32.mrf.mxu0
        %v1484 = vadd.f32 0.0, %v1483
        %1485 = vmatmul.bf16.gmra.mxu0 %v1307
        %v1486 = vpop.f32.mrf.mxu0
        %v1487 = vadd.f32 0.0, %v1486
        %v1488 = vpop.f32.mrf.mxu0
        %v1489 = vadd.f32 0.0, %v1488
        %1490 = vmatmul.bf16.gmra.mxu0 %v1310
        %v1491 = vpop.f32.mrf.mxu0
        %v1492 = vadd.f32 0.0, %v1491
        %v1493 = vpop.f32.mrf.mxu0
        %v1494 = vadd.f32 0.0, %v1493
        %1495 = vmatmul.bf16.gmra.mxu0 %v1313
        %v1496 = vpop.f32.mrf.mxu0
        %v1497 = vadd.f32 0.0, %v1496
        %v1498 = vpop.f32.mrf.mxu0
        %v1499 = vadd.f32 0.0, %v1498
        %1500 = vdwg.mxu0
        %1501 = vmatpush.bf16.msra.mxu0 %v1439
        %1502 = vmatpush.bf16.msra.mxu0 %v1438
        %1503 = vmatpush.bf16.msra.mxu0 %v1437
        %1504 = vmatpush.bf16.msra.mxu0 %v1436
        %1505 = vmatpush.bf16.msra.mxu0 %v1435
        %1506 = vmatpush.bf16.msra.mxu0 %v1434
        %1507 = vmatpush.bf16.msra.mxu0 %v1433
        %1508 = vmatpush.bf16.msra.mxu0 %v1432
        %1509 = vmatmul.bf16.gmra.mxu0 %v1305
        %v1510 = vpop.f32.mrf.mxu0
        %v1511 = vadd.f32 %v1482, %v1510
        %v1512 = vpop.f32.mrf.mxu0
        %v1513 = vadd.f32 %v1484, %v1512
        %1514 = vmatmul.bf16.gmra.mxu0 %v1308
        %v1515 = vpop.f32.mrf.mxu0
        %v1516 = vadd.f32 %v1487, %v1515
        %v1517 = vpop.f32.mrf.mxu0
        %v1518 = vadd.f32 %v1489, %v1517
        %1519 = vmatmul.bf16.gmra.mxu0 %v1311
        %v1520 = vpop.f32.mrf.mxu0
        %v1521 = vadd.f32 %v1492, %v1520
        %v1522 = vpop.f32.mrf.mxu0
        %v1523 = vadd.f32 %v1494, %v1522
        %1524 = vmatmul.bf16.gmra.mxu0 %v1314
        %v1525 = vpop.f32.mrf.mxu0
        %v1526 = vadd.f32 %v1497, %v1525
        %v1527 = vpop.f32.mrf.mxu0
        %v1528 = vadd.f32 %v1499, %v1527
        %1529 = vdwg.mxu0
        %1530 = vmatpush.bf16.msra.mxu0 0
        %1531 = vmatpush.bf16.msra.mxu0 0
        %1532 = vmatpush.bf16.msra.mxu0 0
        %1533 = vmatpush.bf16.msra.mxu0 0
        %1534 = vmatpush.bf16.msra.mxu0 0
        %1535 = vmatpush.bf16.msra.mxu0 0
        %1536 = vmatpush.bf16.msra.mxu0 %v1441
        %1537 = vmatpush.bf16.msra.mxu0 %v1440
        %1538 = vmatmul.bf16.gmra.mxu0 %v1461
        %v1539 = vpop.f32.mrf.mxu0
        %v1540 = vadd.f32 %v1511, %v1539
        %v1541 = vpop.f32.mrf.mxu0
        %v1542 = vadd.f32 %v1513, %v1541
        %1543 = vmatmul.bf16.gmra.mxu0 %v1464
        %v1544 = vpop.f32.mrf.mxu0
        %v1545 = vadd.f32 %v1516, %v1544
        %v1546 = vpop.f32.mrf.mxu0
        %v1547 = vadd.f32 %v1518, %v1546
        %1548 = vmatmul.bf16.gmra.mxu0 %v1467
        %v1549 = vpop.f32.mrf.mxu0
        %v1550 = vadd.f32 %v1521, %v1549
        %v1551 = vpop.f32.mrf.mxu0
        %v1552 = vadd.f32 %v1523, %v1551
        %1553 = vmatmul.bf16.gmra.mxu0 %v1470
        %v1554 = vpop.f32.mrf.mxu0
        %v1555 = vadd.f32 %v1526, %v1554
        %v1556 = vpop.f32.mrf.mxu0
        %v1557 = vadd.f32 %v1528, %v1556
        %1558 = vdwg.mxu0
        %v1559 = vadd.f32 %v923, %v1540
        %v1560 = vadd.f32 %v924, %v1542
        %v1561 = vadd.f32 %v925, %v1545
        %v1562 = vadd.f32 %v926, %v1547
        %v1563 = vadd.f32 %v927, %v1550
        %v1564 = vadd.f32 %v928, %v1552
        %v1565 = vadd.f32 %v929, %v1555
        %v1566 = vadd.f32 %v930, %v1557
        %1575 = vrot.lane.b32.xlu0 %v664, 96
        %v1576 = vpop.permute.xlu0 %1575
        %1577 = vrot.lane.b32.xlu0 %v665, 96
        %v1578 = vpop.permute.xlu0 %1577
        %1579 = vrot.lane.b32.xlu0 %v666, 96
        %v1580 = vpop.permute.xlu0 %1579
        %1581 = vrot.lane.b32.xlu0 %v667, 96
        %v1582 = vpop.permute.xlu0 %1581
        %1583 = vrot.lane.b32.xlu0 %v668, 96
        %v1584 = vpop.permute.xlu0 %1583
        %1585 = vrot.lane.b32.xlu0 %v669, 96
        %v1586 = vpop.permute.xlu0 %1585
        %1587 = vrot.lane.b32.xlu0 %v670, 96
        %v1588 = vpop.permute.xlu0 %1587
        %1589 = vrot.lane.b32.xlu0 %v671, 96
        %v1590 = vpop.permute.xlu0 %1589
        %1599 = vst.msk [vmem:[%s931 + $0x8] sm:$0xff] %vm443, %v1576
        %1600 = vst.msk [vmem:[%s931 + $0x20] sm:$0xff] %vm443, %v1578
        %1601 = vst.msk [vmem:[%s931 + $0x38] sm:$0xff] %vm443, %v1580
        %1602 = vst.msk [vmem:[%s931 + $0x50] sm:$0xff] %vm443, %v1582
        %1603 = vst.msk [vmem:[%s931 + $0x68] sm:$0xff] %vm443, %v1584
        %1604 = vst.msk [vmem:[%s931 + $0x80] sm:$0xff] %vm443, %v1586
        %1605 = vst.msk [vmem:[%s931 + $0x98] sm:$0xff] %vm443, %v1588
        %1606 = vst.msk [vmem:[%s931 + $0xb0] sm:$0xff] %vm443, %v1590
        %v1607 = vld [vmem:[#allocation3 + $0x7] sm:$0xff]
        %v1608 = vld [vmem:[#allocation3 + $0x1f] sm:$0xff]
        %v1609 = vld [vmem:[#allocation3 + $0x37] sm:$0xff]
        %v1610 = vld [vmem:[#allocation3 + $0x4f] sm:$0xff]
        %v1611 = vld [vmem:[#allocation3 + $0x67] sm:$0xff]
        %v1612 = vld [vmem:[#allocation3 + $0x7f] sm:$0xff]
        %v1613 = vld [vmem:[#allocation3 + $0x97] sm:$0xff]
        %v1614 = vld [vmem:[#allocation3 + $0xaf] sm:$0xff]
        %1615 = vst.msk [vmem:[#allocation4] sm:$0xff] %vm443, %v1607
        %1616 = vst.msk [vmem:[#allocation4 + $0x18] sm:$0xff] %vm443, %v1608
        %1617 = vst.msk [vmem:[#allocation4 + $0x30] sm:$0xff] %vm443, %v1609
        %1618 = vst.msk [vmem:[#allocation4 + $0x48] sm:$0xff] %vm443, %v1610
        %1619 = vst.msk [vmem:[#allocation4 + $0x60] sm:$0xff] %vm443, %v1611
        %1620 = vst.msk [vmem:[#allocation4 + $0x78] sm:$0xff] %vm443, %v1612
        %1621 = vst.msk [vmem:[#allocation4 + $0x90] sm:$0xff] %vm443, %v1613
        %1622 = vst.msk [vmem:[#allocation4 + $0xa8] sm:$0xff] %vm443, %v1614
        %v1623 = vld [vmem:[#allocation3 + $0x8] sm:$0xff]
        %v1624 = vld [vmem:[#allocation3 + $0x20] sm:$0xff]
        %v1625 = vld [vmem:[#allocation3 + $0x38] sm:$0xff]
        %v1626 = vld [vmem:[#allocation3 + $0x50] sm:$0xff]
        %v1627 = vld [vmem:[#allocation3 + $0x68] sm:$0xff]
        %v1628 = vld [vmem:[#allocation3 + $0x80] sm:$0xff]
        %v1629 = vld [vmem:[#allocation3 + $0x98] sm:$0xff]
        %v1630 = vld [vmem:[#allocation3 + $0xb0] sm:$0xff]
        %1639 = vrot.lane.b32.xlu0 %v1623, 32
        %v1640 = vpop.permute.xlu0 %1639
        %1641 = vrot.lane.b32.xlu0 %v1624, 32
        %v1642 = vpop.permute.xlu0 %1641
        %1643 = vrot.lane.b32.xlu0 %v1625, 32
        %v1644 = vpop.permute.xlu0 %1643
        %1645 = vrot.lane.b32.xlu0 %v1626, 32
        %v1646 = vpop.permute.xlu0 %1645
        %1647 = vrot.lane.b32.xlu0 %v1627, 32
        %v1648 = vpop.permute.xlu0 %1647
        %1649 = vrot.lane.b32.xlu0 %v1628, 32
        %v1650 = vpop.permute.xlu0 %1649
        %1651 = vrot.lane.b32.xlu0 %v1629, 32
        %v1652 = vpop.permute.xlu0 %1651
        %1653 = vrot.lane.b32.xlu0 %v1630, 32
        %v1654 = vpop.permute.xlu0 %1653
        %1663 = vst.msk [vmem:[#allocation4] sm:$0xff] %vm996, %v1640
        %1664 = vst.msk [vmem:[#allocation4 + $0x18] sm:$0xff] %vm996, %v1642
        %1665 = vst.msk [vmem:[#allocation4 + $0x30] sm:$0xff] %vm996, %v1644
        %1666 = vst.msk [vmem:[#allocation4 + $0x48] sm:$0xff] %vm996, %v1646
        %1667 = vst.msk [vmem:[#allocation4 + $0x60] sm:$0xff] %vm996, %v1648
        %1668 = vst.msk [vmem:[#allocation4 + $0x78] sm:$0xff] %vm996, %v1650
        %1669 = vst.msk [vmem:[#allocation4 + $0x90] sm:$0xff] %vm996, %v1652
        %1670 = vst.msk [vmem:[#allocation4 + $0xa8] sm:$0xff] %vm996, %v1654
        %v1671 = vld [vmem:[#allocation3 + $0x9] sm:$0xff]
        %v1672 = vld [vmem:[#allocation3 + $0x21] sm:$0xff]
        %v1673 = vld [vmem:[#allocation3 + $0x39] sm:$0xff]
        %v1674 = vld [vmem:[#allocation3 + $0x51] sm:$0xff]
        %v1675 = vld [vmem:[#allocation3 + $0x69] sm:$0xff]
        %v1676 = vld [vmem:[#allocation3 + $0x81] sm:$0xff]
        %v1677 = vld [vmem:[#allocation3 + $0x99] sm:$0xff]
        %v1678 = vld [vmem:[#allocation3 + $0xb1] sm:$0xff]
        %1687 = vrot.lane.b32.xlu0 %v1671, 64
        %v1688 = vpop.permute.xlu0 %1687
        %1689 = vrot.lane.b32.xlu0 %v1672, 64
        %v1690 = vpop.permute.xlu0 %1689
        %1691 = vrot.lane.b32.xlu0 %v1673, 64
        %v1692 = vpop.permute.xlu0 %1691
        %1693 = vrot.lane.b32.xlu0 %v1674, 64
        %v1694 = vpop.permute.xlu0 %1693
        %1695 = vrot.lane.b32.xlu0 %v1675, 64
        %v1696 = vpop.permute.xlu0 %1695
        %1697 = vrot.lane.b32.xlu0 %v1676, 64
        %v1698 = vpop.permute.xlu0 %1697
        %1699 = vrot.lane.b32.xlu0 %v1677, 64
        %v1700 = vpop.permute.xlu0 %1699
        %1701 = vrot.lane.b32.xlu0 %v1678, 64
        %v1702 = vpop.permute.xlu0 %1701
        %1711 = vst.msk [vmem:[#allocation4] sm:$0xff] %vm1045, %v1688
        %1712 = vst.msk [vmem:[#allocation4 + $0x18] sm:$0xff] %vm1045, %v1690
        %1713 = vst.msk [vmem:[#allocation4 + $0x30] sm:$0xff] %vm1045, %v1692
        %1714 = vst.msk [vmem:[#allocation4 + $0x48] sm:$0xff] %vm1045, %v1694
        %1715 = vst.msk [vmem:[#allocation4 + $0x60] sm:$0xff] %vm1045, %v1696
        %1716 = vst.msk [vmem:[#allocation4 + $0x78] sm:$0xff] %vm1045, %v1698
        %1717 = vst.msk [vmem:[#allocation4 + $0x90] sm:$0xff] %vm1045, %v1700
        %1718 = vst.msk [vmem:[#allocation4 + $0xa8] sm:$0xff] %vm1045, %v1702
        %v1719 = vld [vmem:[%s931 + $0x7] sm:$0xff]
        %v1720 = vld [vmem:[%s931 + $0x1f] sm:$0xff]
        %v1721 = vld [vmem:[%s931 + $0x37] sm:$0xff]
        %v1722 = vld [vmem:[%s931 + $0x4f] sm:$0xff]
        %v1723 = vld [vmem:[%s931 + $0x67] sm:$0xff]
        %v1724 = vld [vmem:[%s931 + $0x7f] sm:$0xff]
        %v1725 = vld [vmem:[%s931 + $0x97] sm:$0xff]
        %v1726 = vld [vmem:[%s931 + $0xaf] sm:$0xff]
        %1735 = vrot.lane.b32.xlu0 %v1719, 96
        %v1736 = vpop.permute.xlu0 %1735
        %1737 = vrot.lane.b32.xlu0 %v1720, 96
        %v1738 = vpop.permute.xlu0 %1737
        %1739 = vrot.lane.b32.xlu0 %v1721, 96
        %v1740 = vpop.permute.xlu0 %1739
        %1741 = vrot.lane.b32.xlu0 %v1722, 96
        %v1742 = vpop.permute.xlu0 %1741
        %1743 = vrot.lane.b32.xlu0 %v1723, 96
        %v1744 = vpop.permute.xlu0 %1743
        %1745 = vrot.lane.b32.xlu0 %v1724, 96
        %v1746 = vpop.permute.xlu0 %1745
        %1747 = vrot.lane.b32.xlu0 %v1725, 96
        %v1748 = vpop.permute.xlu0 %1747
        %1749 = vrot.lane.b32.xlu0 %v1726, 96
        %v1750 = vpop.permute.xlu0 %1749
        %1759 = vst.msk [vmem:[#allocation4] sm:$0xff] %vm1094, %v1736
        %1760 = vst.msk [vmem:[#allocation4 + $0x18] sm:$0xff] %vm1094, %v1738
        %1761 = vst.msk [vmem:[#allocation4 + $0x30] sm:$0xff] %vm1094, %v1740
        %1762 = vst.msk [vmem:[#allocation4 + $0x48] sm:$0xff] %vm1094, %v1742
        %1763 = vst.msk [vmem:[#allocation4 + $0x60] sm:$0xff] %vm1094, %v1744
        %1764 = vst.msk [vmem:[#allocation4 + $0x78] sm:$0xff] %vm1094, %v1746
        %1765 = vst.msk [vmem:[#allocation4 + $0x90] sm:$0xff] %vm1094, %v1748
        %1766 = vst.msk [vmem:[#allocation4 + $0xa8] sm:$0xff] %vm1094, %v1750
        %v1767 = vld [vmem:[%s931 + $0x8] sm:$0xff]
        %v1768 = vld [vmem:[%s931 + $0x20] sm:$0xff]
        %v1769 = vld [vmem:[%s931 + $0x38] sm:$0xff]
        %v1770 = vld [vmem:[%s931 + $0x50] sm:$0xff]
        %v1771 = vld [vmem:[%s931 + $0x68] sm:$0xff]
        %v1772 = vld [vmem:[%s931 + $0x80] sm:$0xff]
        %v1773 = vld [vmem:[%s931 + $0x98] sm:$0xff]
        %v1774 = vld [vmem:[%s931 + $0xb0] sm:$0xff]
        %1775 = vst.msk [vmem:[#allocation4 + $0x8] sm:$0xff] %vm443, %v1767
        %1776 = vst.msk [vmem:[#allocation4 + $0x20] sm:$0xff] %vm443, %v1768
        %1777 = vst.msk [vmem:[#allocation4 + $0x38] sm:$0xff] %vm443, %v1769
        %1778 = vst.msk [vmem:[#allocation4 + $0x50] sm:$0xff] %vm443, %v1770
        %1779 = vst.msk [vmem:[#allocation4 + $0x68] sm:$0xff] %vm443, %v1771
        %1780 = vst.msk [vmem:[#allocation4 + $0x80] sm:$0xff] %vm443, %v1772
        %1781 = vst.msk [vmem:[#allocation4 + $0x98] sm:$0xff] %vm443, %v1773
        %1782 = vst.msk [vmem:[#allocation4 + $0xb0] sm:$0xff] %vm443, %v1774
        %v1783 = vld [vmem:[%s931 + $0x9] sm:$0xff]
        %v1784 = vld [vmem:[%s931 + $0x21] sm:$0xff]
        %v1785 = vld [vmem:[%s931 + $0x39] sm:$0xff]
        %v1786 = vld [vmem:[%s931 + $0x51] sm:$0xff]
        %v1787 = vld [vmem:[%s931 + $0x69] sm:$0xff]
        %v1788 = vld [vmem:[%s931 + $0x81] sm:$0xff]
        %v1789 = vld [vmem:[%s931 + $0x99] sm:$0xff]
        %v1790 = vld [vmem:[%s931 + $0xb1] sm:$0xff]
        %1799 = vrot.lane.b32.xlu0 %v1783, 32
        %v1800 = vpop.permute.xlu0 %1799
        %1801 = vrot.lane.b32.xlu0 %v1784, 32
        %v1802 = vpop.permute.xlu0 %1801
        %1803 = vrot.lane.b32.xlu0 %v1785, 32
        %v1804 = vpop.permute.xlu0 %1803
        %1805 = vrot.lane.b32.xlu0 %v1786, 32
        %v1806 = vpop.permute.xlu0 %1805
        %1807 = vrot.lane.b32.xlu0 %v1787, 32
        %v1808 = vpop.permute.xlu0 %1807
        %1809 = vrot.lane.b32.xlu0 %v1788, 32
        %v1810 = vpop.permute.xlu0 %1809
        %1811 = vrot.lane.b32.xlu0 %v1789, 32
        %v1812 = vpop.permute.xlu0 %1811
        %1813 = vrot.lane.b32.xlu0 %v1790, 32
        %v1814 = vpop.permute.xlu0 %1813
        %1823 = vst.msk [vmem:[#allocation4 + $0x8] sm:$0xff] %vm996, %v1800
        %1824 = vst.msk [vmem:[#allocation4 + $0x20] sm:$0xff] %vm996, %v1802
        %1825 = vst.msk [vmem:[#allocation4 + $0x38] sm:$0xff] %vm996, %v1804
        %1826 = vst.msk [vmem:[#allocation4 + $0x50] sm:$0xff] %vm996, %v1806
        %1827 = vst.msk [vmem:[#allocation4 + $0x68] sm:$0xff] %vm996, %v1808
        %1828 = vst.msk [vmem:[#allocation4 + $0x80] sm:$0xff] %vm996, %v1810
        %1829 = vst.msk [vmem:[#allocation4 + $0x98] sm:$0xff] %vm996, %v1812
        %1830 = vst.msk [vmem:[#allocation4 + $0xb0] sm:$0xff] %vm996, %v1814
        %v1831 = vld [vmem:[%s1167 + $0x7] sm:$0xff]
        %v1832 = vld [vmem:[%s1167 + $0x1f] sm:$0xff]
        %v1833 = vld [vmem:[%s1167 + $0x37] sm:$0xff]
        %v1834 = vld [vmem:[%s1167 + $0x4f] sm:$0xff]
        %v1835 = vld [vmem:[%s1167 + $0x67] sm:$0xff]
        %v1836 = vld [vmem:[%s1167 + $0x7f] sm:$0xff]
        %v1837 = vld [vmem:[%s1167 + $0x97] sm:$0xff]
        %v1838 = vld [vmem:[%s1167 + $0xaf] sm:$0xff]
        %1847 = vrot.lane.b32.xlu0 %v1831, 64
        %v1848 = vpop.permute.xlu0 %1847
        %1849 = vrot.lane.b32.xlu0 %v1832, 64
        %v1850 = vpop.permute.xlu0 %1849
        %1851 = vrot.lane.b32.xlu0 %v1833, 64
        %v1852 = vpop.permute.xlu0 %1851
        %1853 = vrot.lane.b32.xlu0 %v1834, 64
        %v1854 = vpop.permute.xlu0 %1853
        %1855 = vrot.lane.b32.xlu0 %v1835, 64
        %v1856 = vpop.permute.xlu0 %1855
        %1857 = vrot.lane.b32.xlu0 %v1836, 64
        %v1858 = vpop.permute.xlu0 %1857
        %1859 = vrot.lane.b32.xlu0 %v1837, 64
        %v1860 = vpop.permute.xlu0 %1859
        %1861 = vrot.lane.b32.xlu0 %v1838, 64
        %v1862 = vpop.permute.xlu0 %1861
        %1871 = vst.msk [vmem:[#allocation4 + $0x8] sm:$0xff] %vm1045, %v1848
        %1872 = vst.msk [vmem:[#allocation4 + $0x20] sm:$0xff] %vm1045, %v1850
        %1873 = vst.msk [vmem:[#allocation4 + $0x38] sm:$0xff] %vm1045, %v1852
        %1874 = vst.msk [vmem:[#allocation4 + $0x50] sm:$0xff] %vm1045, %v1854
        %1875 = vst.msk [vmem:[#allocation4 + $0x68] sm:$0xff] %vm1045, %v1856
        %1876 = vst.msk [vmem:[#allocation4 + $0x80] sm:$0xff] %vm1045, %v1858
        %1877 = vst.msk [vmem:[#allocation4 + $0x98] sm:$0xff] %vm1045, %v1860
        %1878 = vst.msk [vmem:[#allocation4 + $0xb0] sm:$0xff] %vm1045, %v1862
        %v1879 = vld [vmem:[%s1167 + $0x8] sm:$0xff]
        %v1880 = vld [vmem:[%s1167 + $0x20] sm:$0xff]
        %v1881 = vld [vmem:[%s1167 + $0x38] sm:$0xff]
        %v1882 = vld [vmem:[%s1167 + $0x50] sm:$0xff]
        %v1883 = vld [vmem:[%s1167 + $0x68] sm:$0xff]
        %v1884 = vld [vmem:[%s1167 + $0x80] sm:$0xff]
        %v1885 = vld [vmem:[%s1167 + $0x98] sm:$0xff]
        %v1886 = vld [vmem:[%s1167 + $0xb0] sm:$0xff]
        %1895 = vrot.lane.b32.xlu0 %v1879, 96
        %v1896 = vpop.permute.xlu0 %1895
        %1897 = vrot.lane.b32.xlu0 %v1880, 96
        %v1898 = vpop.permute.xlu0 %1897
        %1899 = vrot.lane.b32.xlu0 %v1881, 96
        %v1900 = vpop.permute.xlu0 %1899
        %1901 = vrot.lane.b32.xlu0 %v1882, 96
        %v1902 = vpop.permute.xlu0 %1901
        %1903 = vrot.lane.b32.xlu0 %v1883, 96
        %v1904 = vpop.permute.xlu0 %1903
        %1905 = vrot.lane.b32.xlu0 %v1884, 96
        %v1906 = vpop.permute.xlu0 %1905
        %1907 = vrot.lane.b32.xlu0 %v1885, 96
        %v1908 = vpop.permute.xlu0 %1907
        %1909 = vrot.lane.b32.xlu0 %v1886, 96
        %v1910 = vpop.permute.xlu0 %1909
        %1919 = vst.msk [vmem:[#allocation4 + $0x8] sm:$0xff] %vm1094, %v1896
        %1920 = vst.msk [vmem:[#allocation4 + $0x20] sm:$0xff] %vm1094, %v1898
        %1921 = vst.msk [vmem:[#allocation4 + $0x38] sm:$0xff] %vm1094, %v1900
        %1922 = vst.msk [vmem:[#allocation4 + $0x50] sm:$0xff] %vm1094, %v1902
        %1923 = vst.msk [vmem:[#allocation4 + $0x68] sm:$0xff] %vm1094, %v1904
        %1924 = vst.msk [vmem:[#allocation4 + $0x80] sm:$0xff] %vm1094, %v1906
        %1925 = vst.msk [vmem:[#allocation4 + $0x98] sm:$0xff] %vm1094, %v1908
        %1926 = vst.msk [vmem:[#allocation4 + $0xb0] sm:$0xff] %vm1094, %v1910
        %v1927 = vld [vmem:[%s1167 + $0x9] sm:$0xff]
        %v1928 = vld [vmem:[%s1167 + $0x21] sm:$0xff]
        %v1929 = vld [vmem:[%s1167 + $0x39] sm:$0xff]
        %v1930 = vld [vmem:[%s1167 + $0x51] sm:$0xff]
        %v1931 = vld [vmem:[%s1167 + $0x69] sm:$0xff]
        %v1932 = vld [vmem:[%s1167 + $0x81] sm:$0xff]
        %v1933 = vld [vmem:[%s1167 + $0x99] sm:$0xff]
        %v1934 = vld [vmem:[%s1167 + $0xb1] sm:$0xff]
        %1935 = vst.msk [vmem:[#allocation4 + $0x10] sm:$0xff] %vm443, %v1927
        %1936 = vst.msk [vmem:[#allocation4 + $0x28] sm:$0xff] %vm443, %v1928
        %1937 = vst.msk [vmem:[#allocation4 + $0x40] sm:$0xff] %vm443, %v1929
        %1938 = vst.msk [vmem:[#allocation4 + $0x58] sm:$0xff] %vm443, %v1930
        %1939 = vst.msk [vmem:[#allocation4 + $0x70] sm:$0xff] %vm443, %v1931
        %1940 = vst.msk [vmem:[#allocation4 + $0x88] sm:$0xff] %vm443, %v1932
        %1941 = vst.msk [vmem:[#allocation4 + $0xa0] sm:$0xff] %vm443, %v1933
        %1942 = vst.msk [vmem:[#allocation4 + $0xb8] sm:$0xff] %vm443, %v1934
        %v1943 = vld [vmem:[#allocation4] sm:$0xff]
        %v1944 = vld [vmem:[#allocation4 + $0x8] sm:$0xff]
        %v1945 = vld [vmem:[#allocation4 + $0x10] sm:$0xff]
        %v1946 = vld [vmem:[#allocation4 + $0x18] sm:$0xff]
        %v1947 = vld [vmem:[#allocation4 + $0x20] sm:$0xff]
        %v1948 = vld [vmem:[#allocation4 + $0x28] sm:$0xff]
        %v1949 = vld [vmem:[#allocation4 + $0x30] sm:$0xff]
        %v1950 = vld [vmem:[#allocation4 + $0x38] sm:$0xff]
        %v1951 = vld [vmem:[#allocation4 + $0x40] sm:$0xff]
        %v1952 = vld [vmem:[#allocation4 + $0x48] sm:$0xff]
        %v1953 = vld [vmem:[#allocation4 + $0x50] sm:$0xff]
        %v1954 = vld [vmem:[#allocation4 + $0x58] sm:$0xff]
        %v1955 = vld [vmem:[#allocation4 + $0x60] sm:$0xff]
        %v1956 = vld [vmem:[#allocation4 + $0x68] sm:$0xff]
        %v1957 = vld [vmem:[#allocation4 + $0x70] sm:$0xff]
        %v1958 = vld [vmem:[#allocation4 + $0x78] sm:$0xff]
        %v1959 = vld [vmem:[#allocation4 + $0x80] sm:$0xff]
        %v1960 = vld [vmem:[#allocation4 + $0x88] sm:$0xff]
        %v1961 = vld [vmem:[#allocation4 + $0x90] sm:$0xff]
        %v1962 = vld [vmem:[#allocation4 + $0x98] sm:$0xff]
        %v1963 = vld [vmem:[#allocation4 + $0xa0] sm:$0xff]
        %v1964 = vld [vmem:[#allocation4 + $0xa8] sm:$0xff]
        %v1965 = vld [vmem:[#allocation4 + $0xb0] sm:$0xff]
        %v1966 = vld [vmem:[#allocation4 + $0xb8] sm:$0xff]
        %v1967 = vpack.c.bf16 %v1946, %v1943
        %v1968 = vpack.c.bf16 %v1947, %v1944
        %v1969 = vpack.c.bf16 %v1948, %v1945
        %v1970 = vpack.c.bf16 %v1952, %v1949
        %v1971 = vpack.c.bf16 %v1953, %v1950
        %v1972 = vpack.c.bf16 %v1954, %v1951
        %v1973 = vpack.c.bf16 %v1958, %v1955
        %v1974 = vpack.c.bf16 %v1959, %v1956
        %v1975 = vpack.c.bf16 %v1960, %v1957
        %v1976 = vpack.c.bf16 %v1964, %v1961
        %v1977 = vpack.c.bf16 %v1965, %v1962
        %v1978 = vpack.c.bf16 %v1966, %v1963
        %v1979 = vld [vmem:[%s6] sm:$0xf]
        %v1980 = vld [vmem:[%s6 + $0x4] sm:$0xf]
        %v1981 = vld [vmem:[%s6 + $0x8] sm:$0xf]
        %v1982 = vld [vmem:[%s6 + $0xc] sm:$0xf]
        %v1983 = vld [vmem:[%s6 + $0x10] sm:$0xf]
        %v1984 = vld [vmem:[%s6 + $0x14] sm:$0xf]
        %v1985 = vld [vmem:[%s6 + $0x18] sm:$0xf]
        %v1986 = vld [vmem:[%s6 + $0x1c] sm:$0xf]
        %v1987 = vld [vmem:[%s6 + $0x20] sm:$0xf]
        %v1988 = vld [vmem:[%s6 + $0x24] sm:$0xf]
        %v1989 = vld [vmem:[%s6 + $0x28] sm:$0xf]
        %v1990 = vld [vmem:[%s6 + $0x2c] sm:$0xf]
        %v1991 = vld [vmem:[%s6 + $0x30] sm:$0xf]
        %v1992 = vld [vmem:[%s6 + $0x34] sm:$0xf]
        %v1993 = vld [vmem:[%s6 + $0x38] sm:$0xf]
        %v1994 = vld [vmem:[%s6 + $0x3c] sm:$0xf]
        %v1995 = vld [vmem:[%s6 + $0x40] sm:$0xf]
        %v1996 = vld [vmem:[%s6 + $0x44] sm:$0xf]
        %v1997 = vld [vmem:[%s6 + $0x48] sm:$0xf]
        %v1998 = vld [vmem:[%s6 + $0x4c] sm:$0xf]
        %v1999 = vld [vmem:[%s6 + $0x50] sm:$0xf]
        %v2000 = vld [vmem:[%s6 + $0x54] sm:$0xf]
        %v2001 = vld [vmem:[%s6 + $0x58] sm:$0xf]
        %v2002 = vld [vmem:[%s6 + $0x5c] sm:$0xf]
        %v2003 = vld [vmem:[%s6 + $0x60] sm:$0xf]
        %v2004 = vld [vmem:[%s6 + $0x64] sm:$0xf]
        %v2005 = vld [vmem:[%s6 + $0x68] sm:$0xf]
        %v2006 = vld [vmem:[%s6 + $0x6c] sm:$0xf]
        %v2007 = vld [vmem:[%s6 + $0x70] sm:$0xf]
        %v2008 = vld [vmem:[%s6 + $0x74] sm:$0xf]
        %v2009 = vld [vmem:[%s6 + $0x78] sm:$0xf]
        %v2010 = vld [vmem:[%s6 + $0x7c] sm:$0xf]
        %v2011 = vld [vmem:[%s6 + $0x80] sm:$0xf]
        %v2012 = vld [vmem:[%s6 + $0x84] sm:$0xf]
        %v2013 = vld [vmem:[%s6 + $0x88] sm:$0xf]
        %v2014 = vld [vmem:[%s6 + $0x8c] sm:$0xf]
        %v2051 = vunpack.c.l.b16 %v1979
        %v2052 = vunpack.c.l.b16 %v1980
        %v2053 = vunpack.c.l.b16 %v1981
        %v2054 = vunpack.c.l.b16 %v1982
        %v2055 = vunpack.c.l.b16 %v1983
        %v2056 = vunpack.c.l.b16 %v1984
        %v2057 = vunpack.c.l.b16 %v1985
        %v2058 = vunpack.c.l.b16 %v1986
        %v2059 = vunpack.c.l.b16 %v1987
        %v2060 = vunpack.c.l.b16 %v1988
        %v2061 = vunpack.c.l.b16 %v1989
        %v2062 = vunpack.c.l.b16 %v1990
        %v2063 = vunpack.c.l.b16 %v1991
        %v2064 = vunpack.c.l.b16 %v1992
        %v2065 = vunpack.c.l.b16 %v1993
        %v2066 = vunpack.c.l.b16 %v1994
        %v2067 = vunpack.c.l.b16 %v1995
        %v2068 = vunpack.c.l.b16 %v1996
        %v2069 = vunpack.c.l.b16 %v1997
        %v2070 = vunpack.c.l.b16 %v1998
        %v2071 = vunpack.c.l.b16 %v1999
        %v2072 = vunpack.c.l.b16 %v2000
        %v2073 = vunpack.c.l.b16 %v2001
        %v2074 = vunpack.c.l.b16 %v2002
        %v2075 = vunpack.c.l.b16 %v2003
        %v2076 = vunpack.c.l.b16 %v2004
        %v2077 = vunpack.c.l.b16 %v2005
        %v2078 = vunpack.c.l.b16 %v2006
        %v2079 = vunpack.c.l.b16 %v2007
        %v2080 = vunpack.c.l.b16 %v2008
        %v2081 = vunpack.c.l.b16 %v2009
        %v2082 = vunpack.c.l.b16 %v2010
        %v2083 = vunpack.c.l.b16 %v2011
        %v2084 = vunpack.c.l.b16 %v2012
        %v2085 = vunpack.c.l.b16 %v2013
        %v2086 = vunpack.c.l.b16 %v2014
        %v2087 = vpack.c.b16 %v2052, %v2051
        %v2088 = vpack.c.b16 %v2054, %v2053
        %v2089 = vpack.c.b16 %v2056, %v2055
        %v2090 = vpack.c.b16 %v2058, %v2057
        %v2091 = vpack.c.b16 %v2060, %v2059
        %v2092 = vpack.c.b16 %v2062, %v2061
        %v2093 = vpack.c.b16 %v2064, %v2063
        %v2094 = vpack.c.b16 %v2066, %v2065
        %v2095 = vpack.c.b16 %v2068, %v2067
        %v2096 = vpack.c.b16 %v2070, %v2069
        %v2097 = vpack.c.b16 %v2072, %v2071
        %v2098 = vpack.c.b16 %v2074, %v2073
        %v2099 = vpack.c.b16 %v2076, %v2075
        %v2100 = vpack.c.b16 %v2078, %v2077
        %v2101 = vpack.c.b16 %v2080, %v2079
        %v2102 = vpack.c.b16 %v2082, %v2081
        %v2103 = vpack.c.b16 %v2084, %v2083
        %v2104 = vpack.c.b16 %v2086, %v2085
        %v2124 = vsel %vm443, %v1969, 0
        %v2127 = vsel %vm443, %v1972, 0
        %v2130 = vsel %vm443, %v1975, 0
        %v2133 = vsel %vm443, %v1978, 0
        %2135 = vmatpush.bf16.msra.mxu0 %v2094
        %2136 = vmatpush.bf16.msra.mxu0 %v2093
        %2137 = vmatpush.bf16.msra.mxu0 %v2092
        %2138 = vmatpush.bf16.msra.mxu0 %v2091
        %2139 = vmatpush.bf16.msra.mxu0 %v2090
        %2140 = vmatpush.bf16.msra.mxu0 %v2089
        %2141 = vmatpush.bf16.msra.mxu0 %v2088
        %2142 = vmatpush.bf16.msra.mxu0 %v2087
        %2143 = vmatmul.bf16.gmra.mxu0 %v1967
        %v2144 = vpop.f32.mrf.mxu0
        %v2145 = vadd.f32 0.0, %v2144
        %v2146 = vpop.f32.mrf.mxu0
        %v2147 = vadd.f32 0.0, %v2146
        %2148 = vmatmul.bf16.gmra.mxu0 %v1970
        %v2149 = vpop.f32.mrf.mxu0
        %v2150 = vadd.f32 0.0, %v2149
        %v2151 = vpop.f32.mrf.mxu0
        %v2152 = vadd.f32 0.0, %v2151
        %2153 = vmatmul.bf16.gmra.mxu0 %v1973
        %v2154 = vpop.f32.mrf.mxu0
        %v2155 = vadd.f32 0.0, %v2154
        %v2156 = vpop.f32.mrf.mxu0
        %v2157 = vadd.f32 0.0, %v2156
        %2158 = vmatmul.bf16.gmra.mxu0 %v1976
        %v2159 = vpop.f32.mrf.mxu0
        %v2160 = vadd.f32 0.0, %v2159
        %v2161 = vpop.f32.mrf.mxu0
        %v2162 = vadd.f32 0.0, %v2161
        %2163 = vdwg.mxu0
        %2164 = vmatpush.bf16.msra.mxu0 %v2102
        %2165 = vmatpush.bf16.msra.mxu0 %v2101
        %2166 = vmatpush.bf16.msra.mxu0 %v2100
        %2167 = vmatpush.bf16.msra.mxu0 %v2099
        %2168 = vmatpush.bf16.msra.mxu0 %v2098
        %2169 = vmatpush.bf16.msra.mxu0 %v2097
        %2170 = vmatpush.bf16.msra.mxu0 %v2096
        %2171 = vmatpush.bf16.msra.mxu0 %v2095
        %2172 = vmatmul.bf16.gmra.mxu0 %v1968
        %v2173 = vpop.f32.mrf.mxu0
        %v2174 = vadd.f32 %v2145, %v2173
        %v2175 = vpop.f32.mrf.mxu0
        %v2176 = vadd.f32 %v2147, %v2175
        %2177 = vmatmul.bf16.gmra.mxu0 %v1971
        %v2178 = vpop.f32.mrf.mxu0
        %v2179 = vadd.f32 %v2150, %v2178
        %v2180 = vpop.f32.mrf.mxu0
        %v2181 = vadd.f32 %v2152, %v2180
        %2182 = vmatmul.bf16.gmra.mxu0 %v1974
        %v2183 = vpop.f32.mrf.mxu0
        %v2184 = vadd.f32 %v2155, %v2183
        %v2185 = vpop.f32.mrf.mxu0
        %v2186 = vadd.f32 %v2157, %v2185
        %2187 = vmatmul.bf16.gmra.mxu0 %v1977
        %v2188 = vpop.f32.mrf.mxu0
        %v2189 = vadd.f32 %v2160, %v2188
        %v2190 = vpop.f32.mrf.mxu0
        %v2191 = vadd.f32 %v2162, %v2190
        %2192 = vdwg.mxu0
        %2193 = vmatpush.bf16.msra.mxu0 0
        %2194 = vmatpush.bf16.msra.mxu0 0
        %2195 = vmatpush.bf16.msra.mxu0 0
        %2196 = vmatpush.bf16.msra.mxu0 0
        %2197 = vmatpush.bf16.msra.mxu0 0
        %2198 = vmatpush.bf16.msra.mxu0 0
        %2199 = vmatpush.bf16.msra.mxu0 %v2104
        %2200 = vmatpush.bf16.msra.mxu0 %v2103
        %2201 = vmatmul.bf16.gmra.mxu0 %v2124
        %v2202 = vpop.f32.mrf.mxu0
        %v2203 = vadd.f32 %v2174, %v2202
        %v2204 = vpop.f32.mrf.mxu0
        %v2205 = vadd.f32 %v2176, %v2204
        %2206 = vmatmul.bf16.gmra.mxu0 %v2127
        %v2207 = vpop.f32.mrf.mxu0
        %v2208 = vadd.f32 %v2179, %v2207
        %v2209 = vpop.f32.mrf.mxu0
        %v2210 = vadd.f32 %v2181, %v2209
        %2211 = vmatmul.bf16.gmra.mxu0 %v2130
        %v2212 = vpop.f32.mrf.mxu0
        %v2213 = vadd.f32 %v2184, %v2212
        %v2214 = vpop.f32.mrf.mxu0
        %v2215 = vadd.f32 %v2186, %v2214
        %2216 = vmatmul.bf16.gmra.mxu0 %v2133
        %v2217 = vpop.f32.mrf.mxu0
        %v2218 = vadd.f32 %v2189, %v2217
        %v2219 = vpop.f32.mrf.mxu0
        %v2220 = vadd.f32 %v2191, %v2219
        %2221 = vdwg.mxu0
        %v2222 = vld [vmem:[%s7] sm:$0x1]
        %v2224 = vperm.slane %v2222, 0
        %v2226 = vmul.f32 %v2203, %v2224
        %v2227 = vmul.f32 %v2205, %v2224
        %v2228 = vmul.f32 %v2208, %v2224
        %v2229 = vmul.f32 %v2210, %v2224
        %v2230 = vmul.f32 %v2213, %v2224
        %v2231 = vmul.f32 %v2215, %v2224
        %v2232 = vmul.f32 %v2218, %v2224
        %v2233 = vmul.f32 %v2220, %v2224
        %v2234 = vld [vmem:[%s8] sm:$0x1]
        %v2236 = vperm.slane %v2234, 0
        %v2238 = vadd.f32 %v2226, %v2236
        %v2239 = vadd.f32 %v2227, %v2236
        %v2240 = vadd.f32 %v2228, %v2236
        %v2241 = vadd.f32 %v2229, %v2236
        %v2242 = vadd.f32 %v2230, %v2236
        %v2243 = vadd.f32 %v2231, %v2236
        %v2244 = vadd.f32 %v2232, %v2236
        %v2245 = vadd.f32 %v2233, %v2236
        %v2246 = vmax.f32 %v2238, 0.0
        %v2247 = vmax.f32 %v2239, 0.0
        %v2248 = vmax.f32 %v2240, 0.0
        %v2249 = vmax.f32 %v2241, 0.0
        %v2250 = vmax.f32 %v2242, 0.0
        %v2251 = vmax.f32 %v2243, 0.0
        %v2252 = vmax.f32 %v2244, 0.0
        %v2253 = vmax.f32 %v2245, 0.0
        %2254 = vst.msk [vmem:[%s931 + $0x8] sm:$0xff] %vm443, %v2246
        %2255 = vst.msk [vmem:[%s931 + $0x20] sm:$0xff] %vm443, %v2247
        %2256 = vst.msk [vmem:[%s931 + $0x38] sm:$0xff] %vm443, %v2248
        %2257 = vst.msk [vmem:[%s931 + $0x50] sm:$0xff] %vm443, %v2249
        %2258 = vst.msk [vmem:[%s931 + $0x68] sm:$0xff] %vm443, %v2250
        %2259 = vst.msk [vmem:[%s931 + $0x80] sm:$0xff] %vm443, %v2251
        %2260 = vst.msk [vmem:[%s931 + $0x98] sm:$0xff] %vm443, %v2252
        %2261 = vst.msk [vmem:[%s931 + $0xb0] sm:$0xff] %vm443, %v2253
        %v2262 = vld [vmem:[#allocation3 + $0x7] sm:$0xff]
        %v2263 = vld [vmem:[#allocation3 + $0x1f] sm:$0xff]
        %v2264 = vld [vmem:[#allocation3 + $0x37] sm:$0xff]
        %v2265 = vld [vmem:[#allocation3 + $0x4f] sm:$0xff]
        %v2266 = vld [vmem:[#allocation3 + $0x67] sm:$0xff]
        %v2267 = vld [vmem:[#allocation3 + $0x7f] sm:$0xff]
        %v2268 = vld [vmem:[#allocation3 + $0x97] sm:$0xff]
        %v2269 = vld [vmem:[#allocation3 + $0xaf] sm:$0xff]
        %2270 = vst.msk [vmem:[#allocation4] sm:$0xff] %vm443, %v2262
        %2271 = vst.msk [vmem:[#allocation4 + $0x18] sm:$0xff] %vm443, %v2263
        %2272 = vst.msk [vmem:[#allocation4 + $0x30] sm:$0xff] %vm443, %v2264
        %2273 = vst.msk [vmem:[#allocation4 + $0x48] sm:$0xff] %vm443, %v2265
        %2274 = vst.msk [vmem:[#allocation4 + $0x60] sm:$0xff] %vm443, %v2266
        %2275 = vst.msk [vmem:[#allocation4 + $0x78] sm:$0xff] %vm443, %v2267
        %2276 = vst.msk [vmem:[#allocation4 + $0x90] sm:$0xff] %vm443, %v2268
        %2277 = vst.msk [vmem:[#allocation4 + $0xa8] sm:$0xff] %vm443, %v2269
        %v2278 = vld [vmem:[#allocation3 + $0x8] sm:$0xff]
        %v2279 = vld [vmem:[#allocation3 + $0x20] sm:$0xff]
        %v2280 = vld [vmem:[#allocation3 + $0x38] sm:$0xff]
        %v2281 = vld [vmem:[#allocation3 + $0x50] sm:$0xff]
        %v2282 = vld [vmem:[#allocation3 + $0x68] sm:$0xff]
        %v2283 = vld [vmem:[#allocation3 + $0x80] sm:$0xff]
        %v2284 = vld [vmem:[#allocation3 + $0x98] sm:$0xff]
        %v2285 = vld [vmem:[#allocation3 + $0xb0] sm:$0xff]
        %2294 = vrot.lane.b32.xlu0 %v2278, 32
        %v2295 = vpop.permute.xlu0 %2294
        %2296 = vrot.lane.b32.xlu0 %v2279, 32
        %v2297 = vpop.permute.xlu0 %2296
        %2298 = vrot.lane.b32.xlu0 %v2280, 32
        %v2299 = vpop.permute.xlu0 %2298
        %2300 = vrot.lane.b32.xlu0 %v2281, 32
        %v2301 = vpop.permute.xlu0 %2300
        %2302 = vrot.lane.b32.xlu0 %v2282, 32
        %v2303 = vpop.permute.xlu0 %2302
        %2304 = vrot.lane.b32.xlu0 %v2283, 32
        %v2305 = vpop.permute.xlu0 %2304
        %2306 = vrot.lane.b32.xlu0 %v2284, 32
        %v2307 = vpop.permute.xlu0 %2306
        %2308 = vrot.lane.b32.xlu0 %v2285, 32
        %v2309 = vpop.permute.xlu0 %2308
        %2318 = vst.msk [vmem:[#allocation4] sm:$0xff] %vm996, %v2295
        %2319 = vst.msk [vmem:[#allocation4 + $0x18] sm:$0xff] %vm996, %v2297
        %2320 = vst.msk [vmem:[#allocation4 + $0x30] sm:$0xff] %vm996, %v2299
        %2321 = vst.msk [vmem:[#allocation4 + $0x48] sm:$0xff] %vm996, %v2301
        %2322 = vst.msk [vmem:[#allocation4 + $0x60] sm:$0xff] %vm996, %v2303
        %2323 = vst.msk [vmem:[#allocation4 + $0x78] sm:$0xff] %vm996, %v2305
        %2324 = vst.msk [vmem:[#allocation4 + $0x90] sm:$0xff] %vm996, %v2307
        %2325 = vst.msk [vmem:[#allocation4 + $0xa8] sm:$0xff] %vm996, %v2309
        %v2326 = vld [vmem:[#allocation3 + $0x9] sm:$0xff]
        %v2327 = vld [vmem:[#allocation3 + $0x21] sm:$0xff]
        %v2328 = vld [vmem:[#allocation3 + $0x39] sm:$0xff]
        %v2329 = vld [vmem:[#allocation3 + $0x51] sm:$0xff]
        %v2330 = vld [vmem:[#allocation3 + $0x69] sm:$0xff]
        %v2331 = vld [vmem:[#allocation3 + $0x81] sm:$0xff]
        %v2332 = vld [vmem:[#allocation3 + $0x99] sm:$0xff]
        %v2333 = vld [vmem:[#allocation3 + $0xb1] sm:$0xff]
        %2342 = vrot.lane.b32.xlu0 %v2326, 64
        %v2343 = vpop.permute.xlu0 %2342
        %2344 = vrot.lane.b32.xlu0 %v2327, 64
        %v2345 = vpop.permute.xlu0 %2344
        %2346 = vrot.lane.b32.xlu0 %v2328, 64
        %v2347 = vpop.permute.xlu0 %2346
        %2348 = vrot.lane.b32.xlu0 %v2329, 64
        %v2349 = vpop.permute.xlu0 %2348
        %2350 = vrot.lane.b32.xlu0 %v2330, 64
        %v2351 = vpop.permute.xlu0 %2350
        %2352 = vrot.lane.b32.xlu0 %v2331, 64
        %v2353 = vpop.permute.xlu0 %2352
        %2354 = vrot.lane.b32.xlu0 %v2332, 64
        %v2355 = vpop.permute.xlu0 %2354
        %2356 = vrot.lane.b32.xlu0 %v2333, 64
        %v2357 = vpop.permute.xlu0 %2356
        %2366 = vst.msk [vmem:[#allocation4] sm:$0xff] %vm1045, %v2343
        %2367 = vst.msk [vmem:[#allocation4 + $0x18] sm:$0xff] %vm1045, %v2345
        %2368 = vst.msk [vmem:[#allocation4 + $0x30] sm:$0xff] %vm1045, %v2347
        %2369 = vst.msk [vmem:[#allocation4 + $0x48] sm:$0xff] %vm1045, %v2349
        %2370 = vst.msk [vmem:[#allocation4 + $0x60] sm:$0xff] %vm1045, %v2351
        %2371 = vst.msk [vmem:[#allocation4 + $0x78] sm:$0xff] %vm1045, %v2353
        %2372 = vst.msk [vmem:[#allocation4 + $0x90] sm:$0xff] %vm1045, %v2355
        %2373 = vst.msk [vmem:[#allocation4 + $0xa8] sm:$0xff] %vm1045, %v2357
        %v2374 = vld [vmem:[%s931 + $0x7] sm:$0xff]
        %v2375 = vld [vmem:[%s931 + $0x1f] sm:$0xff]
        %v2376 = vld [vmem:[%s931 + $0x37] sm:$0xff]
        %v2377 = vld [vmem:[%s931 + $0x4f] sm:$0xff]
        %v2378 = vld [vmem:[%s931 + $0x67] sm:$0xff]
        %v2379 = vld [vmem:[%s931 + $0x7f] sm:$0xff]
        %v2380 = vld [vmem:[%s931 + $0x97] sm:$0xff]
        %v2381 = vld [vmem:[%s931 + $0xaf] sm:$0xff]
        %2390 = vrot.lane.b32.xlu0 %v2374, 96
        %v2391 = vpop.permute.xlu0 %2390
        %2392 = vrot.lane.b32.xlu0 %v2375, 96
        %v2393 = vpop.permute.xlu0 %2392
        %2394 = vrot.lane.b32.xlu0 %v2376, 96
        %v2395 = vpop.permute.xlu0 %2394
        %2396 = vrot.lane.b32.xlu0 %v2377, 96
        %v2397 = vpop.permute.xlu0 %2396
        %2398 = vrot.lane.b32.xlu0 %v2378, 96
        %v2399 = vpop.permute.xlu0 %2398
        %2400 = vrot.lane.b32.xlu0 %v2379, 96
        %v2401 = vpop.permute.xlu0 %2400
        %2402 = vrot.lane.b32.xlu0 %v2380, 96
        %v2403 = vpop.permute.xlu0 %2402
        %2404 = vrot.lane.b32.xlu0 %v2381, 96
        %v2405 = vpop.permute.xlu0 %2404
        %2414 = vst.msk [vmem:[#allocation4] sm:$0xff] %vm1094, %v2391
        %2415 = vst.msk [vmem:[#allocation4 + $0x18] sm:$0xff] %vm1094, %v2393
        %2416 = vst.msk [vmem:[#allocation4 + $0x30] sm:$0xff] %vm1094, %v2395
        %2417 = vst.msk [vmem:[#allocation4 + $0x48] sm:$0xff] %vm1094, %v2397
        %2418 = vst.msk [vmem:[#allocation4 + $0x60] sm:$0xff] %vm1094, %v2399
        %2419 = vst.msk [vmem:[#allocation4 + $0x78] sm:$0xff] %vm1094, %v2401
        %2420 = vst.msk [vmem:[#allocation4 + $0x90] sm:$0xff] %vm1094, %v2403
        %2421 = vst.msk [vmem:[#allocation4 + $0xa8] sm:$0xff] %vm1094, %v2405
        %v2422 = vld [vmem:[%s931 + $0x8] sm:$0xff]
        %v2423 = vld [vmem:[%s931 + $0x20] sm:$0xff]
        %v2424 = vld [vmem:[%s931 + $0x38] sm:$0xff]
        %v2425 = vld [vmem:[%s931 + $0x50] sm:$0xff]
        %v2426 = vld [vmem:[%s931 + $0x68] sm:$0xff]
        %v2427 = vld [vmem:[%s931 + $0x80] sm:$0xff]
        %v2428 = vld [vmem:[%s931 + $0x98] sm:$0xff]
        %v2429 = vld [vmem:[%s931 + $0xb0] sm:$0xff]
        %2430 = vst.msk [vmem:[#allocation4 + $0x8] sm:$0xff] %vm443, %v2422
        %2431 = vst.msk [vmem:[#allocation4 + $0x20] sm:$0xff] %vm443, %v2423
        %2432 = vst.msk [vmem:[#allocation4 + $0x38] sm:$0xff] %vm443, %v2424
        %2433 = vst.msk [vmem:[#allocation4 + $0x50] sm:$0xff] %vm443, %v2425
        %2434 = vst.msk [vmem:[#allocation4 + $0x68] sm:$0xff] %vm443, %v2426
        %2435 = vst.msk [vmem:[#allocation4 + $0x80] sm:$0xff] %vm443, %v2427
        %2436 = vst.msk [vmem:[#allocation4 + $0x98] sm:$0xff] %vm443, %v2428
        %2437 = vst.msk [vmem:[#allocation4 + $0xb0] sm:$0xff] %vm443, %v2429
        %v2438 = vld [vmem:[%s931 + $0x9] sm:$0xff]
        %v2439 = vld [vmem:[%s931 + $0x21] sm:$0xff]
        %v2440 = vld [vmem:[%s931 + $0x39] sm:$0xff]
        %v2441 = vld [vmem:[%s931 + $0x51] sm:$0xff]
        %v2442 = vld [vmem:[%s931 + $0x69] sm:$0xff]
        %v2443 = vld [vmem:[%s931 + $0x81] sm:$0xff]
        %v2444 = vld [vmem:[%s931 + $0x99] sm:$0xff]
        %v2445 = vld [vmem:[%s931 + $0xb1] sm:$0xff]
        %2454 = vrot.lane.b32.xlu0 %v2438, 32
        %v2455 = vpop.permute.xlu0 %2454
        %2456 = vrot.lane.b32.xlu0 %v2439, 32
        %v2457 = vpop.permute.xlu0 %2456
        %2458 = vrot.lane.b32.xlu0 %v2440, 32
        %v2459 = vpop.permute.xlu0 %2458
        %2460 = vrot.lane.b32.xlu0 %v2441, 32
        %v2461 = vpop.permute.xlu0 %2460
        %2462 = vrot.lane.b32.xlu0 %v2442, 32
        %v2463 = vpop.permute.xlu0 %2462
        %2464 = vrot.lane.b32.xlu0 %v2443, 32
        %v2465 = vpop.permute.xlu0 %2464
        %2466 = vrot.lane.b32.xlu0 %v2444, 32
        %v2467 = vpop.permute.xlu0 %2466
        %2468 = vrot.lane.b32.xlu0 %v2445, 32
        %v2469 = vpop.permute.xlu0 %2468
        %2478 = vst.msk [vmem:[#allocation4 + $0x8] sm:$0xff] %vm996, %v2455
        %2479 = vst.msk [vmem:[#allocation4 + $0x20] sm:$0xff] %vm996, %v2457
        %2480 = vst.msk [vmem:[#allocation4 + $0x38] sm:$0xff] %vm996, %v2459
        %2481 = vst.msk [vmem:[#allocation4 + $0x50] sm:$0xff] %vm996, %v2461
        %2482 = vst.msk [vmem:[#allocation4 + $0x68] sm:$0xff] %vm996, %v2463
        %2483 = vst.msk [vmem:[#allocation4 + $0x80] sm:$0xff] %vm996, %v2465
        %2484 = vst.msk [vmem:[#allocation4 + $0x98] sm:$0xff] %vm996, %v2467
        %2485 = vst.msk [vmem:[#allocation4 + $0xb0] sm:$0xff] %vm996, %v2469
        %v2486 = vld [vmem:[%s1167 + $0x7] sm:$0xff]
        %v2487 = vld [vmem:[%s1167 + $0x1f] sm:$0xff]
        %v2488 = vld [vmem:[%s1167 + $0x37] sm:$0xff]
        %v2489 = vld [vmem:[%s1167 + $0x4f] sm:$0xff]
        %v2490 = vld [vmem:[%s1167 + $0x67] sm:$0xff]
        %v2491 = vld [vmem:[%s1167 + $0x7f] sm:$0xff]
        %v2492 = vld [vmem:[%s1167 + $0x97] sm:$0xff]
        %v2493 = vld [vmem:[%s1167 + $0xaf] sm:$0xff]
        %2502 = vrot.lane.b32.xlu0 %v2486, 64
        %v2503 = vpop.permute.xlu0 %2502
        %2504 = vrot.lane.b32.xlu0 %v2487, 64
        %v2505 = vpop.permute.xlu0 %2504
        %2506 = vrot.lane.b32.xlu0 %v2488, 64
        %v2507 = vpop.permute.xlu0 %2506
        %2508 = vrot.lane.b32.xlu0 %v2489, 64
        %v2509 = vpop.permute.xlu0 %2508
        %2510 = vrot.lane.b32.xlu0 %v2490, 64
        %v2511 = vpop.permute.xlu0 %2510
        %2512 = vrot.lane.b32.xlu0 %v2491, 64
        %v2513 = vpop.permute.xlu0 %2512
        %2514 = vrot.lane.b32.xlu0 %v2492, 64
        %v2515 = vpop.permute.xlu0 %2514
        %2516 = vrot.lane.b32.xlu0 %v2493, 64
        %v2517 = vpop.permute.xlu0 %2516
        %2526 = vst.msk [vmem:[#allocation4 + $0x8] sm:$0xff] %vm1045, %v2503
        %2527 = vst.msk [vmem:[#allocation4 + $0x20] sm:$0xff] %vm1045, %v2505
        %2528 = vst.msk [vmem:[#allocation4 + $0x38] sm:$0xff] %vm1045, %v2507
        %2529 = vst.msk [vmem:[#allocation4 + $0x50] sm:$0xff] %vm1045, %v2509
        %2530 = vst.msk [vmem:[#allocation4 + $0x68] sm:$0xff] %vm1045, %v2511
        %2531 = vst.msk [vmem:[#allocation4 + $0x80] sm:$0xff] %vm1045, %v2513
        %2532 = vst.msk [vmem:[#allocation4 + $0x98] sm:$0xff] %vm1045, %v2515
        %2533 = vst.msk [vmem:[#allocation4 + $0xb0] sm:$0xff] %vm1045, %v2517
        %v2534 = vld [vmem:[%s1167 + $0x8] sm:$0xff]
        %v2535 = vld [vmem:[%s1167 + $0x20] sm:$0xff]
        %v2536 = vld [vmem:[%s1167 + $0x38] sm:$0xff]
        %v2537 = vld [vmem:[%s1167 + $0x50] sm:$0xff]
        %v2538 = vld [vmem:[%s1167 + $0x68] sm:$0xff]
        %v2539 = vld [vmem:[%s1167 + $0x80] sm:$0xff]
        %v2540 = vld [vmem:[%s1167 + $0x98] sm:$0xff]
        %v2541 = vld [vmem:[%s1167 + $0xb0] sm:$0xff]
        %2550 = vrot.lane.b32.xlu0 %v2534, 96
        %v2551 = vpop.permute.xlu0 %2550
        %2552 = vrot.lane.b32.xlu0 %v2535, 96
        %v2553 = vpop.permute.xlu0 %2552
        %2554 = vrot.lane.b32.xlu0 %v2536, 96
        %v2555 = vpop.permute.xlu0 %2554
        %2556 = vrot.lane.b32.xlu0 %v2537, 96
        %v2557 = vpop.permute.xlu0 %2556
        %2558 = vrot.lane.b32.xlu0 %v2538, 96
        %v2559 = vpop.permute.xlu0 %2558
        %2560 = vrot.lane.b32.xlu0 %v2539, 96
        %v2561 = vpop.permute.xlu0 %2560
        %2562 = vrot.lane.b32.xlu0 %v2540, 96
        %v2563 = vpop.permute.xlu0 %2562
        %2564 = vrot.lane.b32.xlu0 %v2541, 96
        %v2565 = vpop.permute.xlu0 %2564
        %2574 = vst.msk [vmem:[#allocation4 + $0x8] sm:$0xff] %vm1094, %v2551
        %2575 = vst.msk [vmem:[#allocation4 + $0x20] sm:$0xff] %vm1094, %v2553
        %2576 = vst.msk [vmem:[#allocation4 + $0x38] sm:$0xff] %vm1094, %v2555
        %2577 = vst.msk [vmem:[#allocation4 + $0x50] sm:$0xff] %vm1094, %v2557
        %2578 = vst.msk [vmem:[#allocation4 + $0x68] sm:$0xff] %vm1094, %v2559
        %2579 = vst.msk [vmem:[#allocation4 + $0x80] sm:$0xff] %vm1094, %v2561
        %2580 = vst.msk [vmem:[#allocation4 + $0x98] sm:$0xff] %vm1094, %v2563
        %2581 = vst.msk [vmem:[#allocation4 + $0xb0] sm:$0xff] %vm1094, %v2565
        %v2582 = vld [vmem:[%s1167 + $0x9] sm:$0xff]
        %v2583 = vld [vmem:[%s1167 + $0x21] sm:$0xff]
        %v2584 = vld [vmem:[%s1167 + $0x39] sm:$0xff]
        %v2585 = vld [vmem:[%s1167 + $0x51] sm:$0xff]
        %v2586 = vld [vmem:[%s1167 + $0x69] sm:$0xff]
        %v2587 = vld [vmem:[%s1167 + $0x81] sm:$0xff]
        %v2588 = vld [vmem:[%s1167 + $0x99] sm:$0xff]
        %v2589 = vld [vmem:[%s1167 + $0xb1] sm:$0xff]
        %2590 = vst.msk [vmem:[#allocation4 + $0x10] sm:$0xff] %vm443, %v2582
        %2591 = vst.msk [vmem:[#allocation4 + $0x28] sm:$0xff] %vm443, %v2583
        %2592 = vst.msk [vmem:[#allocation4 + $0x40] sm:$0xff] %vm443, %v2584
        %2593 = vst.msk [vmem:[#allocation4 + $0x58] sm:$0xff] %vm443, %v2585
        %2594 = vst.msk [vmem:[#allocation4 + $0x70] sm:$0xff] %vm443, %v2586
        %2595 = vst.msk [vmem:[#allocation4 + $0x88] sm:$0xff] %vm443, %v2587
        %2596 = vst.msk [vmem:[#allocation4 + $0xa0] sm:$0xff] %vm443, %v2588
        %2597 = vst.msk [vmem:[#allocation4 + $0xb8] sm:$0xff] %vm443, %v2589
        %v2598 = vld [vmem:[#allocation4] sm:$0xff]
        %v2599 = vld [vmem:[#allocation4 + $0x8] sm:$0xff]
        %v2600 = vld [vmem:[#allocation4 + $0x10] sm:$0xff]
        %v2601 = vld [vmem:[#allocation4 + $0x18] sm:$0xff]
        %v2602 = vld [vmem:[#allocation4 + $0x20] sm:$0xff]
        %v2603 = vld [vmem:[#allocation4 + $0x28] sm:$0xff]
        %v2604 = vld [vmem:[#allocation4 + $0x30] sm:$0xff]
        %v2605 = vld [vmem:[#allocation4 + $0x38] sm:$0xff]
        %v2606 = vld [vmem:[#allocation4 + $0x40] sm:$0xff]
        %v2607 = vld [vmem:[#allocation4 + $0x48] sm:$0xff]
        %v2608 = vld [vmem:[#allocation4 + $0x50] sm:$0xff]
        %v2609 = vld [vmem:[#allocation4 + $0x58] sm:$0xff]
        %v2610 = vld [vmem:[#allocation4 + $0x60] sm:$0xff]
        %v2611 = vld [vmem:[#allocation4 + $0x68] sm:$0xff]
        %v2612 = vld [vmem:[#allocation4 + $0x70] sm:$0xff]
        %v2613 = vld [vmem:[#allocation4 + $0x78] sm:$0xff]
        %v2614 = vld [vmem:[#allocation4 + $0x80] sm:$0xff]
        %v2615 = vld [vmem:[#allocation4 + $0x88] sm:$0xff]
        %v2616 = vld [vmem:[#allocation4 + $0x90] sm:$0xff]
        %v2617 = vld [vmem:[#allocation4 + $0x98] sm:$0xff]
        %v2618 = vld [vmem:[#allocation4 + $0xa0] sm:$0xff]
        %v2619 = vld [vmem:[#allocation4 + $0xa8] sm:$0xff]
        %v2620 = vld [vmem:[#allocation4 + $0xb0] sm:$0xff]
        %v2621 = vld [vmem:[#allocation4 + $0xb8] sm:$0xff]
        %v2622 = vpack.c.bf16 %v2601, %v2598
        %v2623 = vpack.c.bf16 %v2602, %v2599
        %v2624 = vpack.c.bf16 %v2603, %v2600
        %v2625 = vpack.c.bf16 %v2607, %v2604
        %v2626 = vpack.c.bf16 %v2608, %v2605
        %v2627 = vpack.c.bf16 %v2609, %v2606
        %v2628 = vpack.c.bf16 %v2613, %v2610
        %v2629 = vpack.c.bf16 %v2614, %v2611
        %v2630 = vpack.c.bf16 %v2615, %v2612
        %v2631 = vpack.c.bf16 %v2619, %v2616
        %v2632 = vpack.c.bf16 %v2620, %v2617
        %v2633 = vpack.c.bf16 %v2621, %v2618
        %v2634 = vld [vmem:[%s9] sm:$0xf]
        %v2635 = vld [vmem:[%s9 + $0x4] sm:$0xf]
        %v2636 = vld [vmem:[%s9 + $0x8] sm:$0xf]
        %v2637 = vld [vmem:[%s9 + $0xc] sm:$0xf]
        %v2638 = vld [vmem:[%s9 + $0x10] sm:$0xf]
        %v2639 = vld [vmem:[%s9 + $0x14] sm:$0xf]
        %v2640 = vld [vmem:[%s9 + $0x18] sm:$0xf]
        %v2641 = vld [vmem:[%s9 + $0x1c] sm:$0xf]
        %v2642 = vld [vmem:[%s9 + $0x20] sm:$0xf]
        %v2643 = vld [vmem:[%s9 + $0x24] sm:$0xf]
        %v2644 = vld [vmem:[%s9 + $0x28] sm:$0xf]
        %v2645 = vld [vmem:[%s9 + $0x2c] sm:$0xf]
        %v2646 = vld [vmem:[%s9 + $0x30] sm:$0xf]
        %v2647 = vld [vmem:[%s9 + $0x34] sm:$0xf]
        %v2648 = vld [vmem:[%s9 + $0x38] sm:$0xf]
        %v2649 = vld [vmem:[%s9 + $0x3c] sm:$0xf]
        %v2650 = vld [vmem:[%s9 + $0x40] sm:$0xf]
        %v2651 = vld [vmem:[%s9 + $0x44] sm:$0xf]
        %v2652 = vld [vmem:[%s9 + $0x48] sm:$0xf]
        %v2653 = vld [vmem:[%s9 + $0x4c] sm:$0xf]
        %v2654 = vld [vmem:[%s9 + $0x50] sm:$0xf]
        %v2655 = vld [vmem:[%s9 + $0x54] sm:$0xf]
        %v2656 = vld [vmem:[%s9 + $0x58] sm:$0xf]
        %v2657 = vld [vmem:[%s9 + $0x5c] sm:$0xf]
        %v2658 = vld [vmem:[%s9 + $0x60] sm:$0xf]
        %v2659 = vld [vmem:[%s9 + $0x64] sm:$0xf]
        %v2660 = vld [vmem:[%s9 + $0x68] sm:$0xf]
        %v2661 = vld [vmem:[%s9 + $0x6c] sm:$0xf]
        %v2662 = vld [vmem:[%s9 + $0x70] sm:$0xf]
        %v2663 = vld [vmem:[%s9 + $0x74] sm:$0xf]
        %v2664 = vld [vmem:[%s9 + $0x78] sm:$0xf]
        %v2665 = vld [vmem:[%s9 + $0x7c] sm:$0xf]
        %v2666 = vld [vmem:[%s9 + $0x80] sm:$0xf]
        %v2667 = vld [vmem:[%s9 + $0x84] sm:$0xf]
        %v2668 = vld [vmem:[%s9 + $0x88] sm:$0xf]
        %v2669 = vld [vmem:[%s9 + $0x8c] sm:$0xf]
        %v2706 = vunpack.c.l.b16 %v2634
        %v2707 = vunpack.c.l.b16 %v2635
        %v2708 = vunpack.c.l.b16 %v2636
        %v2709 = vunpack.c.l.b16 %v2637
        %v2710 = vunpack.c.l.b16 %v2638
        %v2711 = vunpack.c.l.b16 %v2639
        %v2712 = vunpack.c.l.b16 %v2640
        %v2713 = vunpack.c.l.b16 %v2641
        %v2714 = vunpack.c.l.b16 %v2642
        %v2715 = vunpack.c.l.b16 %v2643
        %v2716 = vunpack.c.l.b16 %v2644
        %v2717 = vunpack.c.l.b16 %v2645
        %v2718 = vunpack.c.l.b16 %v2646
        %v2719 = vunpack.c.l.b16 %v2647
        %v2720 = vunpack.c.l.b16 %v2648
        %v2721 = vunpack.c.l.b16 %v2649
        %v2722 = vunpack.c.l.b16 %v2650
        %v2723 = vunpack.c.l.b16 %v2651
        %v2724 = vunpack.c.l.b16 %v2652
        %v2725 = vunpack.c.l.b16 %v2653
        %v2726 = vunpack.c.l.b16 %v2654
        %v2727 = vunpack.c.l.b16 %v2655
        %v2728 = vunpack.c.l.b16 %v2656
        %v2729 = vunpack.c.l.b16 %v2657
        %v2730 = vunpack.c.l.b16 %v2658
        %v2731 = vunpack.c.l.b16 %v2659
        %v2732 = vunpack.c.l.b16 %v2660
        %v2733 = vunpack.c.l.b16 %v2661
        %v2734 = vunpack.c.l.b16 %v2662
        %v2735 = vunpack.c.l.b16 %v2663
        %v2736 = vunpack.c.l.b16 %v2664
        %v2737 = vunpack.c.l.b16 %v2665
        %v2738 = vunpack.c.l.b16 %v2666
        %v2739 = vunpack.c.l.b16 %v2667
        %v2740 = vunpack.c.l.b16 %v2668
        %v2741 = vunpack.c.l.b16 %v2669
        %v2742 = vpack.c.b16 %v2707, %v2706
        %v2743 = vpack.c.b16 %v2709, %v2708
        %v2744 = vpack.c.b16 %v2711, %v2710
        %v2745 = vpack.c.b16 %v2713, %v2712
        %v2746 = vpack.c.b16 %v2715, %v2714
        %v2747 = vpack.c.b16 %v2717, %v2716
        %v2748 = vpack.c.b16 %v2719, %v2718
        %v2749 = vpack.c.b16 %v2721, %v2720
        %v2750 = vpack.c.b16 %v2723, %v2722
        %v2751 = vpack.c.b16 %v2725, %v2724
        %v2752 = vpack.c.b16 %v2727, %v2726
        %v2753 = vpack.c.b16 %v2729, %v2728
        %v2754 = vpack.c.b16 %v2731, %v2730
        %v2755 = vpack.c.b16 %v2733, %v2732
        %v2756 = vpack.c.b16 %v2735, %v2734
        %v2757 = vpack.c.b16 %v2737, %v2736
        %v2758 = vpack.c.b16 %v2739, %v2738
        %v2759 = vpack.c.b16 %v2741, %v2740
        %v2779 = vsel %vm443, %v2624, 0
        %v2782 = vsel %vm443, %v2627, 0
        %v2785 = vsel %vm443, %v2630, 0
        %v2788 = vsel %vm443, %v2633, 0
        %2790 = vmatpush.bf16.msra.mxu0 %v2749
        %2791 = vmatpush.bf16.msra.mxu0 %v2748
        %2792 = vmatpush.bf16.msra.mxu0 %v2747
        %2793 = vmatpush.bf16.msra.mxu0 %v2746
        %2794 = vmatpush.bf16.msra.mxu0 %v2745
        %2795 = vmatpush.bf16.msra.mxu0 %v2744
        %2796 = vmatpush.bf16.msra.mxu0 %v2743
        %2797 = vmatpush.bf16.msra.mxu0 %v2742
        %2798 = vmatmul.bf16.gmra.mxu0 %v2622
        %v2799 = vpop.f32.mrf.mxu0
        %v2800 = vadd.f32 0.0, %v2799
        %v2801 = vpop.f32.mrf.mxu0
        %v2802 = vadd.f32 0.0, %v2801
        %2803 = vmatmul.bf16.gmra.mxu0 %v2625
        %v2804 = vpop.f32.mrf.mxu0
        %v2805 = vadd.f32 0.0, %v2804
        %v2806 = vpop.f32.mrf.mxu0
        %v2807 = vadd.f32 0.0, %v2806
        %2808 = vmatmul.bf16.gmra.mxu0 %v2628
        %v2809 = vpop.f32.mrf.mxu0
        %v2810 = vadd.f32 0.0, %v2809
        %v2811 = vpop.f32.mrf.mxu0
        %v2812 = vadd.f32 0.0, %v2811
        %2813 = vmatmul.bf16.gmra.mxu0 %v2631
        %v2814 = vpop.f32.mrf.mxu0
        %v2815 = vadd.f32 0.0, %v2814
        %v2816 = vpop.f32.mrf.mxu0
        %v2817 = vadd.f32 0.0, %v2816
        %2818 = vdwg.mxu0
        %2819 = vmatpush.bf16.msra.mxu0 %v2757
        %2820 = vmatpush.bf16.msra.mxu0 %v2756
        %2821 = vmatpush.bf16.msra.mxu0 %v2755
        %2822 = vmatpush.bf16.msra.mxu0 %v2754
        %2823 = vmatpush.bf16.msra.mxu0 %v2753
        %2824 = vmatpush.bf16.msra.mxu0 %v2752
        %2825 = vmatpush.bf16.msra.mxu0 %v2751
        %2826 = vmatpush.bf16.msra.mxu0 %v2750
        %2827 = vmatmul.bf16.gmra.mxu0 %v2623
        %v2828 = vpop.f32.mrf.mxu0
        %v2829 = vadd.f32 %v2800, %v2828
        %v2830 = vpop.f32.mrf.mxu0
        %v2831 = vadd.f32 %v2802, %v2830
        %2832 = vmatmul.bf16.gmra.mxu0 %v2626
        %v2833 = vpop.f32.mrf.mxu0
        %v2834 = vadd.f32 %v2805, %v2833
        %v2835 = vpop.f32.mrf.mxu0
        %v2836 = vadd.f32 %v2807, %v2835
        %2837 = vmatmul.bf16.gmra.mxu0 %v2629
        %v2838 = vpop.f32.mrf.mxu0
        %v2839 = vadd.f32 %v2810, %v2838
        %v2840 = vpop.f32.mrf.mxu0
        %v2841 = vadd.f32 %v2812, %v2840
        %2842 = vmatmul.bf16.gmra.mxu0 %v2632
        %v2843 = vpop.f32.mrf.mxu0
        %v2844 = vadd.f32 %v2815, %v2843
        %v2845 = vpop.f32.mrf.mxu0
        %v2846 = vadd.f32 %v2817, %v2845
        %2847 = vdwg.mxu0
        %2848 = vmatpush.bf16.msra.mxu0 0
        %2849 = vmatpush.bf16.msra.mxu0 0
        %2850 = vmatpush.bf16.msra.mxu0 0
        %2851 = vmatpush.bf16.msra.mxu0 0
        %2852 = vmatpush.bf16.msra.mxu0 0
        %2853 = vmatpush.bf16.msra.mxu0 0
        %2854 = vmatpush.bf16.msra.mxu0 %v2759
        %2855 = vmatpush.bf16.msra.mxu0 %v2758
        %2856 = vmatmul.bf16.gmra.mxu0 %v2779
        %v2857 = vpop.f32.mrf.mxu0
        %v2858 = vadd.f32 %v2829, %v2857
        %v2859 = vpop.f32.mrf.mxu0
        %v2860 = vadd.f32 %v2831, %v2859
        %2861 = vmatmul.bf16.gmra.mxu0 %v2782
        %v2862 = vpop.f32.mrf.mxu0
        %v2863 = vadd.f32 %v2834, %v2862
        %v2864 = vpop.f32.mrf.mxu0
        %v2865 = vadd.f32 %v2836, %v2864
        %2866 = vmatmul.bf16.gmra.mxu0 %v2785
        %v2867 = vpop.f32.mrf.mxu0
        %v2868 = vadd.f32 %v2839, %v2867
        %v2869 = vpop.f32.mrf.mxu0
        %v2870 = vadd.f32 %v2841, %v2869
        %2871 = vmatmul.bf16.gmra.mxu0 %v2788
        %v2872 = vpop.f32.mrf.mxu0
        %v2873 = vadd.f32 %v2844, %v2872
        %v2874 = vpop.f32.mrf.mxu0
        %v2875 = vadd.f32 %v2846, %v2874
        %2876 = vdwg.mxu0
        %v2877 = vadd.f32 %v1559, %v2858
        %v2878 = vadd.f32 %v1560, %v2860
        %v2879 = vadd.f32 %v1561, %v2863
        %v2880 = vadd.f32 %v1562, %v2865
        %v2881 = vadd.f32 %v1563, %v2868
        %v2882 = vadd.f32 %v1564, %v2870
        %v2883 = vadd.f32 %v1565, %v2873
        %v2884 = vadd.f32 %v1566, %v2875
        %v2885 = vld [vmem:[%s10] sm:$0x1]
        %v2887 = vperm.slane %v2885, 0
        %v2889 = vmul.f32 %v2877, %v2887
        %v2890 = vmul.f32 %v2878, %v2887
        %v2891 = vmul.f32 %v2879, %v2887
        %v2892 = vmul.f32 %v2880, %v2887
        %v2893 = vmul.f32 %v2881, %v2887
        %v2894 = vmul.f32 %v2882, %v2887
        %v2895 = vmul.f32 %v2883, %v2887
        %v2896 = vmul.f32 %v2884, %v2887
        %v2897 = vld [vmem:[%s11] sm:$0x1]
        %v2899 = vperm.slane %v2897, 0
        %v2901 = vadd.f32 %v2889, %v2899
        %v2902 = vadd.f32 %v2890, %v2899
        %v2903 = vadd.f32 %v2891, %v2899
        %v2904 = vadd.f32 %v2892, %v2899
        %v2905 = vadd.f32 %v2893, %v2899
        %v2906 = vadd.f32 %v2894, %v2899
        %v2907 = vadd.f32 %v2895, %v2899
        %v2908 = vadd.f32 %v2896, %v2899
        %v2909 = vmax.f32 %v2901, 0.0
        %v2910 = vmax.f32 %v2902, 0.0
        %v2911 = vmax.f32 %v2903, 0.0
        %v2912 = vmax.f32 %v2904, 0.0
        %v2913 = vmax.f32 %v2905, 0.0
        %v2914 = vmax.f32 %v2906, 0.0
        %v2915 = vmax.f32 %v2907, 0.0
        %v2916 = vmax.f32 %v2908, 0.0
        %2917 = vst [vmem:[%s406] sm:$0xff] %v2909
        %2918 = vst [vmem:[%s406 + $0x8] sm:$0xff] %v2910
        %2919 = vst [vmem:[%s406 + $0x10] sm:$0xff] %v2911
        %2920 = vst [vmem:[%s406 + $0x18] sm:$0xff] %v2912
        %2921 = vst [vmem:[%s406 + $0x20] sm:$0xff] %v2913
        %2922 = vst [vmem:[%s406 + $0x28] sm:$0xff] %v2914
        %2923 = vst [vmem:[%s406 + $0x30] sm:$0xff] %v2915
        %2924 = vst [vmem:[%s406 + $0x38] sm:$0xff] %v2916
        %s2925 = sand.u32 %s291, 1
        %s2926 = scalar_lea.sflag [#allocation6], %s2925
        %s2927 = sand.u32 %s291, 1
        %s2928 = smul.addr %s2927, 64
        %s2929 = scalar_lea.vmem [#allocation5], %s2928
        // Predicated region
        $region69: #{inception_forward.1} parent=67 // pred_check
          %p2930 = pneg %p301
        $region70: #{inception_forward.1} parent=67 // pred_check_branch
          %2932 = sbr.rel (%p2930) target = $region72
        $region71: #{inception_forward.1} parent=67 // pred_region
          %2934 = vsyncadd %s2926, 0
          %s2935 = smul.addr %s26, 8
          %s2936 = smul.addr %s2935, 8
          %s2937 = scalar_lea.hbm %s12, %s2936
          %s2938 = sshll.u32 %s2929, 4
          %s2939 = int_to_ptr.vmem [resolvable:$true] %s2938
          %s2940 = sshll.u32 %s2937, 4
          %s2941 = int_to_ptr.hbm [resolvable:$true] %s2940
          %2946 = dma.vmem_to_hbm [thread:$0]  %s2939, 1024, %s2941, %s2926, 128, 128, 8
        $region72: #{inception_forward.1} parent=67 // pred_fallthru
          _
      $region68: #{inception_forward.1} parent=5 // pred_fallthru
        _
      %p2947 = scmp.le.s32.totalorder 2, %s21
      // Predicated region
      $region73: #{inception_forward.1} parent=5 // pred_check
        %p2948 = pneg %p2947
      $region74: #{inception_forward.1} parent=5 // pred_check_branch
        %2950 = sbr.rel (%p2948) target = $region76
      $region75: #{inception_forward.1} parent=5 // pred_region
        %s2951 = ssub.s32 %s21, 2
        // Predicated region
        $region77: #{inception_forward.1} parent=75 // pred_check
          %p2952 = pneg %p307
        $region78: #{inception_forward.1} parent=75 // pred_check_branch
          %2954 = sbr.rel (%p2952) target = $region80
        $region79: #{inception_forward.1} parent=75 // pred_region
          %s2955 = sand.u32 %s292, 1
          %s2956 = scalar_lea.sflag [#allocation6], %s2955
          %s2957 = sand.u32 %s292, 1
          %s2958 = smul.addr %s2957, 64
          %s2959 = scalar_lea.vmem [#allocation5], %s2958
          %2961 = dma.done %s2956, 1024
        $region80: #{inception_forward.1} parent=75 // pred_fallthru
          _
      $region76: #{inception_forward.1} parent=5 // pred_fallthru
        _
    $region6: #{inception_forward.1} parent=1 // loop_footer
      %s25 = sadd.s32 1, %s21
    $region7: #{inception_forward.1} parent=1 // loop_footer_branch
      %20 = sbr.rel target = $region3
    $region8: #{inception_forward.1} parent=1 // loop_exit
      _
    %2962 = vsyncpa [#allocation6], 1
    %s2963 = scalar_lea.sflag [#allocation6], 1
    %2964 = vsyncpa %s2963, 1

</llo_original>
